<compile_context>
chip_gen: v5e
topology: v5e:2x2
jax: 0.10.0
libtpu: 0.0.40
codegen_flags: <defaults>
</compile_context>

<pallas_src>
import jax
import jax.numpy as jnp
from jax.experimental import pallas as pl
from jax.experimental.pallas import tpu as pltpu


def _round_up(n, m):
    return ((n + m - 1) // m) * m


def mlp_encoder_kernel(x_ref, w1_ref, b1_ref, w2_ref, b2_ref, o_ref):
    # Linear 1 (MXU, f32 accumulation) + bias + ReLU (VPU, f32).
    h = jnp.dot(x_ref[...], w1_ref[...], preferred_element_type=jnp.float32)
    h = jnp.maximum(h + b1_ref[...], 0.0)          # (tm, z) + (1, z) broadcast
    # Linear 2 (MXU, f32 accumulation) + bias.
    y = jnp.dot(h.astype(w2_ref.dtype), w2_ref[...],
                preferred_element_type=jnp.float32)
    o_ref[...] = (y + b2_ref[...]).astype(o_ref.dtype)


def text_mlp_encoder(x, w1, b1, w2, b2, *, tm=256, compute_dtype=jnp.bfloat16):
    """x: (B, x_dim); w1: (x_dim, z_dim); b1: (z_dim,); w2: (z_dim, z_dim);
       b2: (z_dim,)  ->  (B, z_dim) in x.dtype."""
    B, x_dim = x.shape
    z_dim = w1.shape[1]
    out_dtype = x.dtype

    # Matmul operands in compute_dtype (bf16 by default); biases stay f32.
    xc = x.astype(compute_dtype)
    w1c = w1.astype(compute_dtype)
    w2c = w2.astype(compute_dtype)
    b1f = jnp.asarray(b1, jnp.float32).reshape(1, z_dim)
    b2f = jnp.asarray(b2, jnp.float32).reshape(1, z_dim)

    # ---- choose the row tile ---------------------------------------------
    tm_eff = max(8, min(tm, _round_up(B, 8)))
    n_steps = pl.cdiv(B, tm_eff)
    if n_steps < 2 and B > 8:
        n_steps = 2                      # let both v7x TensorCores participate
    tm_eff = _round_up(pl.cdiv(B, n_steps), 8)
    Bp = tm_eff * n_steps
    if Bp != B:
        xc = jnp.pad(xc, ((0, Bp - B), (0, 0)))

    # ---- VMEM budget & cost hint -------------------------------------------
    cbytes = jnp.dtype(compute_dtype).itemsize
    need = (2 * tm_eff * x_dim * cbytes              # x stream (double-buffered)
            + 2 * tm_eff * z_dim * 4                 # out stream (f32)
            + 2 * (x_dim + z_dim) * z_dim * cbytes   # W1+W2 (worst case 2x)
            + 4 * z_dim * 4)                         # biases
    vmem_limit = int(min(48 * 2**20, max(32 * 2**20, (need * 3) // 2)))

    cost = pl.CostEstimate(
        flops=2 * Bp * (x_dim + z_dim) * z_dim,
        transcendentals=0,
        bytes_accessed=(Bp * x_dim * cbytes
                        + (x_dim + z_dim) * z_dim * cbytes
                        + 2 * z_dim * 4
                        + Bp * z_dim * jnp.dtype(out_dtype).itemsize),
    )

    def build(single_buffer_weights):
        resident = {}
        if single_buffer_weights:
            # Constant index_map -> one buffer is enough; avoids 2x weight VMEM.
            resident = dict(pipeline_mode=pl.Buffered(1))
        return pl.pallas_call(
            mlp_encoder_kernel,
            out_shape=jax.ShapeDtypeStruct((Bp, z_dim), out_dtype),
            grid_spec=pltpu.PrefetchScalarGridSpec(
                num_scalar_prefetch=0,
                grid=(Bp // tm_eff,),
                in_specs=[
                    pl.BlockSpec((tm_eff, x_dim), lambda i: (i, 0)),              # x tile
                    pl.BlockSpec((x_dim, z_dim), lambda i: (0, 0), **resident),   # W1
                    pl.BlockSpec((1, z_dim), lambda i: (0, 0), **resident),       # b1
                    pl.BlockSpec((z_dim, z_dim), lambda i: (0, 0), **resident),   # W2
                    pl.BlockSpec((1, z_dim), lambda i: (0, 0), **resident),       # b2
                ],
                out_specs=pl.BlockSpec((tm_eff, z_dim), lambda i: (i, 0)),
            ),
            compiler_params=pltpu.CompilerParams(
                dimension_semantics=("parallel",),
                vmem_limit_bytes=vmem_limit),
            cost_estimate=cost,
        )

    args = (xc, w1c, b1f, w2c, b2f)
    try:
        out = build(single_buffer_weights=True)(*args)
    except Exception:
        # pipeline_mode / Buffered(1) not supported by this jax build; default
        # double-buffering is still correct (just uses more VMEM).
        out = build(single_buffer_weights=False)(*args)

    return out[:B] if Bp != B else out


def reference_mlp(x, w1, b1, w2, b2):
    h = jnp.maximum(x @ w1 + b1.reshape(1, -1), 0.0)
    return h @ w2 + b2.reshape(1, -1)


if __name__ == "__main__":
    # Small shapes consistent with the module defaults (x_dim == z_dim == 512).
    B, X_DIM, Z_DIM = 16, 512, 512

    key = jax.random.PRNGKey(0)
    kx, kw1, kb1, kw2, kb2 = jax.random.split(key, 5)

    x = jax.random.normal(kx, (B, X_DIM), dtype=jnp.float32)
    # nn.Linear-style init: uniform(-1/sqrt(fan_in), 1/sqrt(fan_in)).
    lim1 = 1.0 / float(X_DIM) ** 0.5
    lim2 = 1.0 / float(Z_DIM) ** 0.5
    w1 = jax.random.uniform(kw1, (X_DIM, Z_DIM), jnp.float32, -lim1, lim1)
    b1 = jax.random.uniform(kb1, (Z_DIM,), jnp.float32, -lim1, lim1)
    w2 = jax.random.uniform(kw2, (Z_DIM, Z_DIM), jnp.float32, -lim2, lim2)
    b2 = jax.random.uniform(kb2, (Z_DIM,), jnp.float32, -lim2, lim2)

    out = text_mlp_encoder(x, w1, b1, w2, b2)
    out = jax.block_until_ready(out)

    ref = reference_mlp(x, w1, b1, w2, b2)
    assert out.shape == (B, Z_DIM)
    # bf16 matmul inputs with f32 accumulation -> ~1e-3 abs error vs f32 ref.
    assert jnp.allclose(out, ref, atol=2e-2, rtol=2e-2), (
        "max abs err = %f" % float(jnp.max(jnp.abs(out - ref))))

    print("KERNEL_OK")
</pallas_src>

<mosaic_0001>
module attributes {stable_mosaic.version = 11 : i64} {
  func.func @mlp_encoder_kernel(%arg0: i32, %arg1: memref<8x512xbf16, #tpu.memory_space<vmem>>, %arg2: memref<512x512xbf16, #tpu.memory_space<vmem>>, %arg3: memref<1x512xf32, #tpu.memory_space<vmem>>, %arg4: memref<512x512xbf16, #tpu.memory_space<vmem>>, %arg5: memref<1x512xf32, #tpu.memory_space<vmem>>, %arg6: memref<8x512xf32, #tpu.memory_space<vmem>>) attributes {dimension_semantics = [#tpu.dimension_semantics<parallel>], iteration_bounds = array<i64: 2>, scalar_prefetch = 0 : i64, scratch_operands = 0 : i64, tpu.core_type = #tpu.core_type<tc>, window_params = [{transform_indices = @transform_0, window_bounds = array<i64: 8, 512>}, {pipeline_mode = #tpu.pipeline_mode<synchronous>, transform_indices = @transform_1, window_bounds = array<i64: 512, 512>}, {pipeline_mode = #tpu.pipeline_mode<synchronous>, transform_indices = @transform_2, window_bounds = array<i64: 1, 512>}, {pipeline_mode = #tpu.pipeline_mode<synchronous>, transform_indices = @transform_3, window_bounds = array<i64: 512, 512>}, {pipeline_mode = #tpu.pipeline_mode<synchronous>, transform_indices = @transform_4, window_bounds = array<i64: 1, 512>}, {transform_indices = @transform_5, window_bounds = array<i64: 8, 512>}]} {
    %c0 = arith.constant 0 : index
    %c0_0 = arith.constant 0 : index
    %0 = vector.load %arg1[%c0, %c0_0] : memref<8x512xbf16, #tpu.memory_space<vmem>>, vector<8x512xbf16>
    %c0_1 = arith.constant 0 : index
    %c0_2 = arith.constant 0 : index
    %1 = vector.load %arg2[%c0_1, %c0_2] : memref<512x512xbf16, #tpu.memory_space<vmem>>, vector<512x512xbf16>
    %cst = arith.constant dense<0.000000e+00> : vector<8x512xf32>
    %2 = tpu.matmul %0, %1, %cst {dimension_numbers = #tpu.dot_dimension_numbers<[1], [0], [0], [1], [0, 0, 1, 1], [], []>} : vector<8x512xbf16>, vector<512x512xbf16>, vector<8x512xf32> -> vector<8x512xf32>
    %c0_3 = arith.constant 0 : index
    %c0_4 = arith.constant 0 : index
    %3 = vector.load %arg3[%c0_3, %c0_4] : memref<1x512xf32, #tpu.memory_space<vmem>>, vector<1x512xf32>
    %4 = vector.broadcast %3 : vector<1x512xf32> to vector<8x512xf32>
    %5 = arith.addf %2, %4 : vector<8x512xf32>
    %cst_5 = arith.constant 0.000000e+00 : f32
    %6 = vector.broadcast %cst_5 : f32 to vector<8x512xf32>
    %7 = arith.maximumf %5, %6 : vector<8x512xf32>
    %8 = arith.truncf %7 : vector<8x512xf32> to vector<8x512xbf16>
    %c0_6 = arith.constant 0 : index
    %c0_7 = arith.constant 0 : index
    %9 = vector.load %arg4[%c0_6, %c0_7] : memref<512x512xbf16, #tpu.memory_space<vmem>>, vector<512x512xbf16>
    %cst_8 = arith.constant dense<0.000000e+00> : vector<8x512xf32>
    %10 = tpu.matmul %8, %9, %cst_8 {dimension_numbers = #tpu.dot_dimension_numbers<[1], [0], [0], [1], [0, 0, 1, 1], [], []>} : vector<8x512xbf16>, vector<512x512xbf16>, vector<8x512xf32> -> vector<8x512xf32>
    %c0_9 = arith.constant 0 : index
    %c0_10 = arith.constant 0 : index
    %11 = vector.load %arg5[%c0_9, %c0_10] : memref<1x512xf32, #tpu.memory_space<vmem>>, vector<1x512xf32>
    %12 = vector.broadcast %11 : vector<1x512xf32> to vector<8x512xf32>
    %13 = arith.addf %10, %12 : vector<8x512xf32>
    %c0_11 = arith.constant 0 : index
    %c0_12 = arith.constant 0 : index
    %14 = vector.load %arg6[%c0_11, %c0_12] : memref<8x512xf32, #tpu.memory_space<vmem>>, vector<8x512xf32>
    tpu.vector_store %arg6[%c0_11, %c0_12], %13 {strides = array<i32>} : memref<8x512xf32, #tpu.memory_space<vmem>>, vector<8x512xf32>,
    return
  }
  func.func @transform_0(%arg0: i32) -> (i32, i32) {
    %c0_i32 = arith.constant 0 : i32
    %c0_i32_0 = arith.constant 0 : i32
    return %arg0, %c0_i32 : i32, i32
  }
  func.func @transform_1(%arg0: i32) -> (i32, i32) {
    %c0_i32 = arith.constant 0 : i32
    %c0_i32_0 = arith.constant 0 : i32
    %c0_i32_1 = arith.constant 0 : i32
    return %c0_i32, %c0_i32_0 : i32, i32
  }
  func.func @transform_2(%arg0: i32) -> (i32, i32) {
    %c0_i32 = arith.constant 0 : i32
    %c0_i32_0 = arith.constant 0 : i32
    %c0_i32_1 = arith.constant 0 : i32
    return %c0_i32, %c0_i32_0 : i32, i32
  }
  func.func @transform_3(%arg0: i32) -> (i32, i32) {
    %c0_i32 = arith.constant 0 : i32
    %c0_i32_0 = arith.constant 0 : i32
    %c0_i32_1 = arith.constant 0 : i32
    return %c0_i32, %c0_i32_0 : i32, i32
  }
  func.func @transform_4(%arg0: i32) -> (i32, i32) {
    %c0_i32 = arith.constant 0 : i32
    %c0_i32_0 = arith.constant 0 : i32
    %c0_i32_1 = arith.constant 0 : i32
    return %c0_i32, %c0_i32_0 : i32, i32
  }
  func.func @transform_5(%arg0: i32) -> (i32, i32) {
    %c0_i32 = arith.constant 0 : i32
    %c0_i32_0 = arith.constant 0 : i32
    return %arg0, %c0_i32 : i32, i32
  }
}

module attributes {stable_mosaic.version = 11 : i64} {
  func.func @mlp_encoder_kernel(%arg0: i32, %arg1: memref<8x512xbf16, #tpu.memory_space<vmem>>, %arg2: memref<512x512xbf16, #tpu.memory_space<vmem>>, %arg3: memref<1x512xf32, #tpu.memory_space<vmem>>, %arg4: memref<512x512xbf16, #tpu.memory_space<vmem>>, %arg5: memref<1x512xf32, #tpu.memory_space<vmem>>, %arg6: memref<8x512xf32, #tpu.memory_space<vmem>>) attributes {dimension_semantics = [#tpu.dimension_semantics<parallel>], iteration_bounds = array<i64: 2>, scalar_prefetch = 0 : i64, scratch_operands = 0 : i64, tpu.core_type = #tpu.core_type<tc>, window_params = [{transform_indices = @transform_0, window_bounds = array<i64: 8, 512>}, {pipeline_mode = #tpu.pipeline_mode<synchronous>, transform_indices = @transform_1, window_bounds = array<i64: 512, 512>}, {pipeline_mode = #tpu.pipeline_mode<synchronous>, transform_indices = @transform_2, window_bounds = array<i64: 1, 512>}, {pipeline_mode = #tpu.pipeline_mode<synchronous>, transform_indices = @transform_3, window_bounds = array<i64: 512, 512>}, {pipeline_mode = #tpu.pipeline_mode<synchronous>, transform_indices = @transform_4, window_bounds = array<i64: 1, 512>}, {transform_indices = @transform_5, window_bounds = array<i64: 8, 512>}]} {
    %c0 = arith.constant 0 : index
    %c0_0 = arith.constant 0 : index
    %0 = vector.load %arg1[%c0, %c0_0] : memref<8x512xbf16, #tpu.memory_space<vmem>>, vector<8x512xbf16>
    %c0_1 = arith.constant 0 : index
    %c0_2 = arith.constant 0 : index
    %1 = vector.load %arg2[%c0_1, %c0_2] : memref<512x512xbf16, #tpu.memory_space<vmem>>, vector<512x512xbf16>
    %cst = arith.constant dense<0.000000e+00> : vector<8x512xf32>
    %2 = tpu.matmul %0, %1, %cst {dimension_numbers = #tpu.dot_dimension_numbers<[1], [0], [0], [1], [0, 0, 1, 1], [], []>} : vector<8x512xbf16>, vector<512x512xbf16>, vector<8x512xf32> -> vector<8x512xf32>
    %c0_3 = arith.constant 0 : index
    %c0_4 = arith.constant 0 : index
    %3 = vector.load %arg3[%c0_3, %c0_4] : memref<1x512xf32, #tpu.memory_space<vmem>>, vector<1x512xf32>
    %4 = vector.broadcast %3 : vector<1x512xf32> to vector<8x512xf32>
    %5 = arith.addf %2, %4 : vector<8x512xf32>
    %cst_5 = arith.constant 0.000000e+00 : f32
    %6 = vector.broadcast %cst_5 : f32 to vector<8x512xf32>
    %7 = arith.maximumf %5, %6 : vector<8x512xf32>
    %8 = arith.truncf %7 : vector<8x512xf32> to vector<8x512xbf16>
    %c0_6 = arith.constant 0 : index
    %c0_7 = arith.constant 0 : index
    %9 = vector.load %arg4[%c0_6, %c0_7] : memref<512x512xbf16, #tpu.memory_space<vmem>>, vector<512x512xbf16>
    %cst_8 = arith.constant dense<0.000000e+00> : vector<8x512xf32>
    %10 = tpu.matmul %8, %9, %cst_8 {dimension_numbers = #tpu.dot_dimension_numbers<[1], [0], [0], [1], [0, 0, 1, 1], [], []>} : vector<8x512xbf16>, vector<512x512xbf16>, vector<8x512xf32> -> vector<8x512xf32>
    %c0_9 = arith.constant 0 : index
    %c0_10 = arith.constant 0 : index
    %11 = vector.load %arg5[%c0_9, %c0_10] : memref<1x512xf32, #tpu.memory_space<vmem>>, vector<1x512xf32>
    %12 = vector.broadcast %11 : vector<1x512xf32> to vector<8x512xf32>
    %13 = arith.addf %10, %12 : vector<8x512xf32>
    %c0_11 = arith.constant 0 : index
    %c0_12 = arith.constant 0 : index
    %14 = vector.load %arg6[%c0_11, %c0_12] : memref<8x512xf32, #tpu.memory_space<vmem>>, vector<8x512xf32>
    tpu.vector_store %arg6[%c0_11, %c0_12], %13 {strides = array<i32>} : memref<8x512xf32, #tpu.memory_space<vmem>>, vector<8x512xf32>,
    return
  }
  func.func @transform_0(%arg0: i32) -> (i32, i32) {
    %c0_i32 = arith.constant 0 : i32
    %c0_i32_0 = arith.constant 0 : i32
    return %arg0, %c0_i32 : i32, i32
  }
  func.func @transform_1(%arg0: i32) -> (i32, i32) {
    %c0_i32 = arith.constant 0 : i32
    %c0_i32_0 = arith.constant 0 : i32
    %c0_i32_1 = arith.constant 0 : i32
    return %c0_i32, %c0_i32_0 : i32, i32
  }
  func.func @transform_2(%arg0: i32) -> (i32, i32) {
    %c0_i32 = arith.constant 0 : i32
    %c0_i32_0 = arith.constant 0 : i32
    %c0_i32_1 = arith.constant 0 : i32
    return %c0_i32, %c0_i32_0 : i32, i32
  }
  func.func @transform_3(%arg0: i32) -> (i32, i32) {
    %c0_i32 = arith.constant 0 : i32
    %c0_i32_0 = arith.constant 0 : i32
    %c0_i32_1 = arith.constant 0 : i32
    return %c0_i32, %c0_i32_0 : i32, i32
  }
  func.func @transform_4(%arg0: i32) -> (i32, i32) {
    %c0_i32 = arith.constant 0 : i32
    %c0_i32_0 = arith.constant 0 : i32
    %c0_i32_1 = arith.constant 0 : i32
    return %c0_i32, %c0_i32_0 : i32, i32
  }
  func.func @transform_5(%arg0: i32) -> (i32, i32) {
    %c0_i32 = arith.constant 0 : i32
    %c0_i32_0 = arith.constant 0 : i32
    return %arg0, %c0_i32 : i32, i32
  }
}

</mosaic_0001>

<llo_original>
// kernel: tpu_custom_call.1
$region0: #{tpu_custom_call.1}
  #allocation0 [shape = 'u32[]', space=smem, size = 0x4, offset = 0x4, fixed_abs, tag = 'smem constant byte address 0x4 - core index']
  #allocation1 [shape = 'u32[72,128]{1,0:T(1,128)}', space=vmem, size = 0x9000, scoped, tag = 'internal scratch']
  %s0 = inlined_call_operand.hbm [shape: bf16[16,512], index: 0, kind: input, shape index: {}]
  %s1 = inlined_call_operand.hbm [shape: bf16[512,512], index: 1, kind: input, shape index: {}]
  %s2 = inlined_call_operand.hbm [shape: f32[1,512], index: 2, kind: input, shape index: {}]
  %s3 = inlined_call_operand.hbm [shape: bf16[512,512], index: 3, kind: input, shape index: {}]
  %s4 = inlined_call_operand.hbm [shape: f32[1,512], index: 4, kind: input, shape index: {}]
  %s5 = inlined_call_operand.hbm [shape: f32[16,512], index: 5, kind: output, shape index: {}]
  %s6 = sld [smem:[#allocation0]]
  $region73: #{tpu_custom_call.1} parent=0
    _
  %s8 = ssub.s32 1, %s6
  %s9 = scalar_select 0, %s8, %s6
  $region1: #{tpu_custom_call.1} parent=0
    #allocation2 [shape = 'u8[16384]{0}', space=vmem, size = 0x4000, scoped, tag = 'input window, operand 0']
    #allocation3 [shape = 's32[2]{0}', space=sflag, size = 0x8, scoped, tag = 'scoped memory for tpu_custom_call.1']
    #allocation4 [shape = 's32[2]{0}', space=sflag, size = 0x8, scoped, tag = 'scoped memory for tpu_custom_call.1']
    #allocation5 [shape = 'u8[524288]{0}', space=vmem, size = 0x80000, scoped, tag = 'input window, operand 1, single buffered']
    #allocation6 [shape = 's32[1]{0}', space=sflag, size = 0x4, scoped, tag = 'scoped memory for tpu_custom_call.1']
    #allocation7 [shape = 'u8[2048]{0}', space=vmem, size = 0x800, scoped, tag = 'input window, operand 2, single buffered']
    #allocation8 [shape = 'u8[524288]{0}', space=vmem, size = 0x80000, scoped, tag = 'input window, operand 3, single buffered']
    #allocation9 [shape = 's32[1]{0}', space=sflag, size = 0x4, scoped, tag = 'scoped memory for tpu_custom_call.1']
    #allocation10 [shape = 'u8[2048]{0}', space=vmem, size = 0x800, scoped, tag = 'input window, operand 4, single buffered']
    #allocation11 [shape = 'u8[32768]{0}', space=vmem, size = 0x8000, scoped, tag = 'output window, operand 0']
    %10 = vsyncpa [#allocation3], 0
    %s11 = scalar_lea.sflag [#allocation3], 1
    %12 = vsyncpa %s11, 0
    %13 = vsyncpa [#allocation6], 0
    %14 = vsyncpa [#allocation9], 0
    %15 = vsyncpa [#allocation4], 0
    %s16 = scalar_lea.sflag [#allocation4], 1
    %17 = vsyncpa %s16, 0
    loop: start=0, step=1, limit=4
    $region2: #{tpu_custom_call.1} parent=1 // loop_pre_header
      _
    $region3: #{tpu_custom_call.1} parent=1 // loop_header
      %s19 = sphi 0, %s23
      %p20 = scmp.ge.s32.totalorder %s19, 4
      %s29 = sphi 0, %s31
      %s32 = sphi 0, %s29
      %s33 = sphi 0, %s32
      %s49 = sphi 0, %s33
      %s53 = sphi 0, %s53
      %s55 = sphi 0, %s53
      %s56 = sphi 0, %s55
      %s70 = sphi 0, %s56
      %s74 = sphi 0, %s74
      %s76 = sphi 0, %s74
      %s77 = sphi 0, %s76
      %s91 = sphi 0, %s77
      %s95 = sphi 0, %s95
      %s97 = sphi 0, %s95
      %s98 = sphi 0, %s97
      %s112 = sphi 0, %s98
      %s116 = sphi 0, %s116
      %s118 = sphi 0, %s116
      %s119 = sphi 0, %s118
      %s133 = sphi 0, %s119
      %s139 = sphi 0, %s141
      %s142 = sphi 0, %s139
      %s143 = sphi 0, %s142
      %s159 = sphi 0, %s143
    $region4: #{tpu_custom_call.1} parent=1 // loop_header_branch
      %22 = sbr.rel (%p20) target = $region8
    $region5: #{tpu_custom_call.1} parent=1 // loop_body
      %s24 = ssub.s32 %s19, 1
      %s25 = ssub.s32 %s19, 2
      %s26 = sadd.s32 %s19, 1
      %s27 = ssub.s32 %s19, %s26
      %p28 = scmp.eq.s32.totalorder %s27, 0
      %s30 = sadd.s32 %s29, 1
      %s31 = scalar_select %p28, %s29, %s30
      %p34 = pneg %p28
      %p35 = scmp.eq.s32.totalorder %s19, 1
      %p36 = por %p34, %p35
      %p37 = scmp.ne.s32.totalorder %s29, %s32
      %p38 = scmp.eq.s32.totalorder %s19, 0
      %p39 = por %p37, %p38
      %p40 = scmp.ne.s32.totalorder %s29, %s32
      %p41 = scmp.eq.s32.totalorder %s24, 1
      %p42 = por %p40, %p41
      %p43 = scmp.ne.s32.totalorder %s32, %s33
      %p44 = scmp.eq.s32.totalorder %s24, 0
      %p45 = por %p43, %p44
      %p46 = scmp.ne.s32.totalorder %s32, %s33
      %p47 = scmp.eq.s32.totalorder %s25, 1
      %p48 = por %p46, %p47
      %p50 = scmp.ne.s32.totalorder %s33, %s49
      %p51 = scmp.eq.s32.totalorder %s25, 0
      %p52 = por %p50, %p51
      %s54 = sadd.s32 %s53, 1
      %p57 = scmp.eq.s32.totalorder %s19, 1
      %p58 = scmp.ne.s32.totalorder %s53, %s55
      %p59 = scmp.eq.s32.totalorder %s19, 0
      %p60 = por %p58, %p59
      %p61 = scmp.ne.s32.totalorder %s53, %s55
      %p62 = scmp.eq.s32.totalorder %s24, 1
      %p63 = por %p61, %p62
      %p64 = scmp.ne.s32.totalorder %s55, %s56
      %p65 = scmp.eq.s32.totalorder %s24, 0
      %p66 = por %p64, %p65
      %p67 = scmp.ne.s32.totalorder %s55, %s56
      %p68 = scmp.eq.s32.totalorder %s25, 1
      %p69 = por %p67, %p68
      %p71 = scmp.ne.s32.totalorder %s56, %s70
      %p72 = scmp.eq.s32.totalorder %s25, 0
      %p73 = por %p71, %p72
      %s75 = sadd.s32 %s74, 1
      %p78 = scmp.eq.s32.totalorder %s19, 1
      %p79 = scmp.ne.s32.totalorder %s74, %s76
      %p80 = scmp.eq.s32.totalorder %s19, 0
      %p81 = por %p79, %p80
      %p82 = scmp.ne.s32.totalorder %s74, %s76
      %p83 = scmp.eq.s32.totalorder %s24, 1
      %p84 = por %p82, %p83
      %p85 = scmp.ne.s32.totalorder %s76, %s77
      %p86 = scmp.eq.s32.totalorder %s24, 0
      %p87 = por %p85, %p86
      %p88 = scmp.ne.s32.totalorder %s76, %s77
      %p89 = scmp.eq.s32.totalorder %s25, 1
      %p90 = por %p88, %p89
      %p92 = scmp.ne.s32.totalorder %s77, %s91
      %p93 = scmp.eq.s32.totalorder %s25, 0
      %p94 = por %p92, %p93
      %s96 = sadd.s32 %s95, 1
      %p99 = scmp.eq.s32.totalorder %s19, 1
      %p100 = scmp.ne.s32.totalorder %s95, %s97
      %p101 = scmp.eq.s32.totalorder %s19, 0
      %p102 = por %p100, %p101
      %p103 = scmp.ne.s32.totalorder %s95, %s97
      %p104 = scmp.eq.s32.totalorder %s24, 1
      %p105 = por %p103, %p104
      %p106 = scmp.ne.s32.totalorder %s97, %s98
      %p107 = scmp.eq.s32.totalorder %s24, 0
      %p108 = por %p106, %p107
      %p109 = scmp.ne.s32.totalorder %s97, %s98
      %p110 = scmp.eq.s32.totalorder %s25, 1
      %p111 = por %p109, %p110
      %p113 = scmp.ne.s32.totalorder %s98, %s112
      %p114 = scmp.eq.s32.totalorder %s25, 0
      %p115 = por %p113, %p114
      %s117 = sadd.s32 %s116, 1
      %p120 = scmp.eq.s32.totalorder %s19, 1
      %p121 = scmp.ne.s32.totalorder %s116, %s118
      %p122 = scmp.eq.s32.totalorder %s19, 0
      %p123 = por %p121, %p122
      %p124 = scmp.ne.s32.totalorder %s116, %s118
      %p125 = scmp.eq.s32.totalorder %s24, 1
      %p126 = por %p124, %p125
      %p127 = scmp.ne.s32.totalorder %s118, %s119
      %p128 = scmp.eq.s32.totalorder %s24, 0
      %p129 = por %p127, %p128
      %p130 = scmp.ne.s32.totalorder %s118, %s119
      %p131 = scmp.eq.s32.totalorder %s25, 1
      %p132 = por %p130, %p131
      %p134 = scmp.ne.s32.totalorder %s119, %s133
      %p135 = scmp.eq.s32.totalorder %s25, 0
      %p136 = por %p134, %p135
      %s137 = ssub.s32 %s19, %s26
      %p138 = scmp.eq.s32.totalorder %s137, 0
      %s140 = sadd.s32 %s139, 1
      %s141 = scalar_select %p138, %s139, %s140
      %p144 = pneg %p138
      %p145 = scmp.eq.s32.totalorder %s19, 1
      %p146 = por %p144, %p145
      %p147 = scmp.ne.s32.totalorder %s139, %s142
      %p148 = scmp.eq.s32.totalorder %s19, 0
      %p149 = por %p147, %p148
      %p150 = scmp.ne.s32.totalorder %s139, %s142
      %p151 = scmp.eq.s32.totalorder %s24, 1
      %p152 = por %p150, %p151
      %p153 = scmp.ne.s32.totalorder %s142, %s143
      %p154 = scmp.eq.s32.totalorder %s24, 0
      %p155 = por %p153, %p154
      %p156 = scmp.ne.s32.totalorder %s142, %s143
      %p157 = scmp.eq.s32.totalorder %s25, 1
      %p158 = por %p156, %p157
      %p160 = scmp.ne.s32.totalorder %s143, %s159
      %p161 = scmp.eq.s32.totalorder %s25, 0
      %p162 = por %p160, %p161
      %p163 = scmp.le.s32.totalorder 1, %s19
      %p164 = scmp.lt.s32.totalorder %s19, 3
      %p165 = pnand %p163, %p164
      %p166 = pneg %p165
      // Predicated region
      $region9: #{tpu_custom_call.1} parent=5 // pred_check
        _
      $region10: #{tpu_custom_call.1} parent=5 // pred_check_branch
        %168 = sbr.rel (%p165) target = $region12
      $region11: #{tpu_custom_call.1} parent=5 // pred_region
        %s169 = ssub.s32 %s19, 1
        // Predicated region
        $region13: #{tpu_custom_call.1} parent=11 // pred_check
          %p170 = pneg %p66
        $region14: #{tpu_custom_call.1} parent=11 // pred_check_branch
          %172 = sbr.rel (%p170) target = $region16
        $region15: #{tpu_custom_call.1} parent=11 // pred_region
          %174 = vsyncadd [#allocation6], 0
          %s175 = sshll.u32 %s1, 4
          %s176 = int_to_ptr.hbm [resolvable:$true] %s175
          %s177 = sshll.u32 [#allocation5], 4
          %s178 = int_to_ptr.vmem [resolvable:$true] %s177
          %183 = dma.hbm_to_vmem [thread:$0]  %s176, 16384, %s178, [#allocation6], 256, 256, 16
        $region16: #{tpu_custom_call.1} parent=11 // pred_fallthru
          _
        // Predicated region
        $region17: #{tpu_custom_call.1} parent=11 // pred_check
          %p184 = pneg %p87
        $region18: #{tpu_custom_call.1} parent=11 // pred_check_branch
          %186 = sbr.rel (%p184) target = $region20
        $region19: #{tpu_custom_call.1} parent=11 // pred_region
          %188 = vsyncadd [#allocation6], 0
          %s190 = sshll.u32 %s2, 4
          %s191 = int_to_ptr.hbm [resolvable:$true] %s190
          %s192 = sshll.u32 [#allocation7], 4
          %s193 = int_to_ptr.vmem [resolvable:$true] %s192
          %195 = dma.hbm_to_vmem [thread:$0]  %s191, 64, %s193, [#allocation6]
        $region20: #{tpu_custom_call.1} parent=11 // pred_fallthru
          _
        // Predicated region
        $region21: #{tpu_custom_call.1} parent=11 // pred_check
          %p196 = pneg %p108
        $region22: #{tpu_custom_call.1} parent=11 // pred_check_branch
          %198 = sbr.rel (%p196) target = $region24
        $region23: #{tpu_custom_call.1} parent=11 // pred_region
          %200 = vsyncadd [#allocation9], 0
          %s201 = sshll.u32 %s3, 4
          %s202 = int_to_ptr.hbm [resolvable:$true] %s201
          %s203 = sshll.u32 [#allocation8], 4
          %s204 = int_to_ptr.vmem [resolvable:$true] %s203
          %209 = dma.hbm_to_vmem [thread:$0]  %s202, 16384, %s204, [#allocation9], 256, 256, 16
        $region24: #{tpu_custom_call.1} parent=11 // pred_fallthru
          _
        // Predicated region
        $region25: #{tpu_custom_call.1} parent=11 // pred_check
          %p210 = pneg %p129
        $region26: #{tpu_custom_call.1} parent=11 // pred_check_branch
          %212 = sbr.rel (%p210) target = $region28
        $region27: #{tpu_custom_call.1} parent=11 // pred_region
          %214 = vsyncadd [#allocation9], 0
          %s216 = sshll.u32 %s4, 4
          %s217 = int_to_ptr.hbm [resolvable:$true] %s216
          %s218 = sshll.u32 [#allocation10], 4
          %s219 = int_to_ptr.vmem [resolvable:$true] %s218
          %221 = dma.hbm_to_vmem [thread:$0]  %s217, 64, %s219, [#allocation9]
        $region28: #{tpu_custom_call.1} parent=11 // pred_fallthru
          _
      $region12: #{tpu_custom_call.1} parent=5 // pred_fallthru
        _
      %p222 = scmp.lt.s32.totalorder %s19, 2
      // Predicated region
      $region29: #{tpu_custom_call.1} parent=5 // pred_check
        %p223 = pneg %p222
      $region30: #{tpu_custom_call.1} parent=5 // pred_check_branch
        %225 = sbr.rel (%p223) target = $region32
      $region31: #{tpu_custom_call.1} parent=5 // pred_region
        // Predicated region
        $region33: #{tpu_custom_call.1} parent=31 // pred_check
          %p226 = pneg %p39
        $region34: #{tpu_custom_call.1} parent=31 // pred_check_branch
          %228 = sbr.rel (%p226) target = $region36
        $region35: #{tpu_custom_call.1} parent=31 // pred_region
          %s229 = sand.u32 %s29, 1
          %s230 = scalar_lea.sflag [#allocation3], %s229
          %s231 = sand.u32 %s29, 1
          %s232 = smul.addr %s231, 16
          %s233 = scalar_lea.vmem [#allocation2], %s232
          %235 = vsyncadd %s230, 0
          %s236 = smul.addr %s19, 4
          %s237 = smul.addr %s236, 4
          %s238 = scalar_lea.hbm %s0, %s237
          %s240 = sshll.u32 %s238, 4
          %s241 = int_to_ptr.hbm [resolvable:$true] %s240
          %s242 = sshll.u32 %s233, 4
          %s243 = int_to_ptr.vmem [resolvable:$true] %s242
          %245 = dma.hbm_to_vmem [thread:$0]  %s241, 256, %s243, %s230
        $region36: #{tpu_custom_call.1} parent=31 // pred_fallthru
          _
      $region32: #{tpu_custom_call.1} parent=5 // pred_fallthru
        _
      %p246 = scmp.le.s32.totalorder 1, %s19
      %p247 = scmp.lt.s32.totalorder %s19, 3
      %p248 = pnand %p246, %p247
      %p249 = pneg %p248
      // Predicated region
      $region37: #{tpu_custom_call.1} parent=5 // pred_check
        _
      $region38: #{tpu_custom_call.1} parent=5 // pred_check_branch
        %251 = sbr.rel (%p248) target = $region40
      $region39: #{tpu_custom_call.1} parent=5 // pred_region
        %s252 = ssub.s32 %s19, 1
        %s253 = sand.u32 %s32, 1
        %s254 = scalar_lea.sflag [#allocation3], %s253
        %s255 = sand.u32 %s32, 1
        %s256 = smul.addr %s255, 16
        %s257 = scalar_lea.vmem [#allocation2], %s256
        // Predicated region
        $region41: #{tpu_custom_call.1} parent=39 // pred_check
          %p258 = pneg %p45
        $region42: #{tpu_custom_call.1} parent=39 // pred_check_branch
          %260 = sbr.rel (%p258) target = $region44
        $region43: #{tpu_custom_call.1} parent=39 // pred_region
          %262 = dma.done %s254, 256
        $region44: #{tpu_custom_call.1} parent=39 // pred_fallthru
          _
        // Predicated region
        $region45: #{tpu_custom_call.1} parent=39 // pred_check
          %p263 = pneg %p66
        $region46: #{tpu_custom_call.1} parent=39 // pred_check_branch
          %265 = sbr.rel (%p263) target = $region48
        $region47: #{tpu_custom_call.1} parent=39 // pred_region
          %267 = dma.done [#allocation6], 16384
        $region48: #{tpu_custom_call.1} parent=39 // pred_fallthru
          _
        // Predicated region
        $region49: #{tpu_custom_call.1} parent=39 // pred_check
          %p268 = pneg %p87
        $region50: #{tpu_custom_call.1} parent=39 // pred_check_branch
          %270 = sbr.rel (%p268) target = $region52
        $region51: #{tpu_custom_call.1} parent=39 // pred_region
          %272 = dma.done [#allocation6], 64
        $region52: #{tpu_custom_call.1} parent=39 // pred_fallthru
          _
        // Predicated region
        $region53: #{tpu_custom_call.1} parent=39 // pred_check
          %p273 = pneg %p108
        $region54: #{tpu_custom_call.1} parent=39 // pred_check_branch
          %275 = sbr.rel (%p273) target = $region56
        $region55: #{tpu_custom_call.1} parent=39 // pred_region
          %277 = dma.done [#allocation9], 16384
        $region56: #{tpu_custom_call.1} parent=39 // pred_fallthru
          _
        // Predicated region
        $region57: #{tpu_custom_call.1} parent=39 // pred_check
          %p278 = pneg %p129
        $region58: #{tpu_custom_call.1} parent=39 // pred_check_branch
          %280 = sbr.rel (%p278) target = $region60
        $region59: #{tpu_custom_call.1} parent=39 // pred_region
          %282 = dma.done [#allocation9], 64
        $region60: #{tpu_custom_call.1} parent=39 // pred_fallthru
          _
        %s283 = sand.u32 %s32, 1
        %s284 = scalar_lea.sflag [#allocation3], %s283
        %s285 = sand.u32 %s32, 1
        %s286 = smul.addr %s285, 16
        %s287 = scalar_lea.vmem [#allocation2], %s286
        %p288 = pneg %p45
        %p289 = pneg %p42
        %p290 = pneg %p66
        %p291 = pneg %p63
        %p292 = pneg %p87
        %p293 = pneg %p84
        %p294 = pneg %p108
        %p295 = pneg %p105
        %p296 = pneg %p129
        %p297 = pneg %p126
        %p298 = pneg %p155
        %p299 = pneg %p152
        %s300 = sand.u32 %s142, 1
        %s301 = scalar_lea.sflag [#allocation4], %s300
        %s302 = sand.u32 %s142, 1
        %s303 = smul.addr %s302, 32
        %s304 = scalar_lea.vmem [#allocation11], %s303
        %v305 = vld [vmem:[%s257] sm:$0xff]
        %v306 = vld [vmem:[%s257 + $0x8] sm:$0xff]
        %v307 = vld [vmem:[#allocation5] sm:$0xff]
        %v308 = vld [vmem:[#allocation5 + $0x8] sm:$0xff]
        %v309 = vld [vmem:[#allocation5 + $0x10] sm:$0xff]
        %v310 = vld [vmem:[#allocation5 + $0x18] sm:$0xff]
        %v311 = vld [vmem:[#allocation5 + $0x20] sm:$0xff]
        %v312 = vld [vmem:[#allocation5 + $0x28] sm:$0xff]
        %v313 = vld [vmem:[#allocation5 + $0x30] sm:$0xff]
        %v314 = vld [vmem:[#allocation5 + $0x38] sm:$0xff]
        %v315 = vld [vmem:[#allocation5 + $0x40] sm:$0xff]
        %v316 = vld [vmem:[#allocation5 + $0x48] sm:$0xff]
        %v317 = vld [vmem:[#allocation5 + $0x50] sm:$0xff]
        %v318 = vld [vmem:[#allocation5 + $0x58] sm:$0xff]
        %v319 = vld [vmem:[#allocation5 + $0x60] sm:$0xff]
        %v320 = vld [vmem:[#allocation5 + $0x68] sm:$0xff]
        %v321 = vld [vmem:[#allocation5 + $0x70] sm:$0xff]
        %v322 = vld [vmem:[#allocation5 + $0x78] sm:$0xff]
        %v323 = vld [vmem:[#allocation5 + $0x80] sm:$0xff]
        %v324 = vld [vmem:[#allocation5 + $0x88] sm:$0xff]
        %v325 = vld [vmem:[#allocation5 + $0x90] sm:$0xff]
        %v326 = vld [vmem:[#allocation5 + $0x98] sm:$0xff]
        %v327 = vld [vmem:[#allocation5 + $0xa0] sm:$0xff]
        %v328 = vld [vmem:[#allocation5 + $0xa8] sm:$0xff]
        %v329 = vld [vmem:[#allocation5 + $0xb0] sm:$0xff]
        %v330 = vld [vmem:[#allocation5 + $0xb8] sm:$0xff]
        %v331 = vld [vmem:[#allocation5 + $0xc0] sm:$0xff]
        %v332 = vld [vmem:[#allocation5 + $0xc8] sm:$0xff]
        %v333 = vld [vmem:[#allocation5 + $0xd0] sm:$0xff]
        %v334 = vld [vmem:[#allocation5 + $0xd8] sm:$0xff]
        %v335 = vld [vmem:[#allocation5 + $0xe0] sm:$0xff]
        %v336 = vld [vmem:[#allocation5 + $0xe8] sm:$0xff]
        %v337 = vld [vmem:[#allocation5 + $0xf0] sm:$0xff]
        %v338 = vld [vmem:[#allocation5 + $0xf8] sm:$0xff]
        %v339 = vld [vmem:[#allocation5 + $0x100] sm:$0xff]
        %v340 = vld [vmem:[#allocation5 + $0x108] sm:$0xff]
        %v341 = vld [vmem:[#allocation5 + $0x110] sm:$0xff]
        %v342 = vld [vmem:[#allocation5 + $0x118] sm:$0xff]
        %v343 = vld [vmem:[#allocation5 + $0x120] sm:$0xff]
        %v344 = vld [vmem:[#allocation5 + $0x128] sm:$0xff]
        %v345 = vld [vmem:[#allocation5 + $0x130] sm:$0xff]
        %v346 = vld [vmem:[#allocation5 + $0x138] sm:$0xff]
        %v347 = vld [vmem:[#allocation5 + $0x140] sm:$0xff]
        %v348 = vld [vmem:[#allocation5 + $0x148] sm:$0xff]
        %v349 = vld [vmem:[#allocation5 + $0x150] sm:$0xff]
        %v350 = vld [vmem:[#allocation5 + $0x158] sm:$0xff]
        %v351 = vld [vmem:[#allocation5 + $0x160] sm:$0xff]
        %v352 = vld [vmem:[#allocation5 + $0x168] sm:$0xff]
        %v353 = vld [vmem:[#allocation5 + $0x170] sm:$0xff]
        %v354 = vld [vmem:[#allocation5 + $0x178] sm:$0xff]
        %v355 = vld [vmem:[#allocation5 + $0x180] sm:$0xff]
        %v356 = vld [vmem:[#allocation5 + $0x188] sm:$0xff]
        %v357 = vld [vmem:[#allocation5 + $0x190] sm:$0xff]
        %v358 = vld [vmem:[#allocation5 + $0x198] sm:$0xff]
        %v359 = vld [vmem:[#allocation5 + $0x1a0] sm:$0xff]
        %v360 = vld [vmem:[#allocation5 + $0x1a8] sm:$0xff]
        %v361 = vld [vmem:[#allocation5 + $0x1b0] sm:$0xff]
        %v362 = vld [vmem:[#allocation5 + $0x1b8] sm:$0xff]
        %v363 = vld [vmem:[#allocation5 + $0x1c0] sm:$0xff]
        %v364 = vld [vmem:[#allocation5 + $0x1c8] sm:$0xff]
        %v365 = vld [vmem:[#allocation5 + $0x1d0] sm:$0xff]
        %v366 = vld [vmem:[#allocation5 + $0x1d8] sm:$0xff]
        %v367 = vld [vmem:[#allocation5 + $0x1e0] sm:$0xff]
        %v368 = vld [vmem:[#allocation5 + $0x1e8] sm:$0xff]
        %v369 = vld [vmem:[#allocation5 + $0x1f0] sm:$0xff]
        %v370 = vld [vmem:[#allocation5 + $0x1f8] sm:$0xff]
        %v371 = vld [vmem:[#allocation5 + $0x200] sm:$0xff]
        %v372 = vld [vmem:[#allocation5 + $0x208] sm:$0xff]
        %v373 = vld [vmem:[#allocation5 + $0x210] sm:$0xff]
        %v374 = vld [vmem:[#allocation5 + $0x218] sm:$0xff]
        %v375 = vld [vmem:[#allocation5 + $0x220] sm:$0xff]
        %v376 = vld [vmem:[#allocation5 + $0x228] sm:$0xff]
        %v377 = vld [vmem:[#allocation5 + $0x230] sm:$0xff]
        %v378 = vld [vmem:[#allocation5 + $0x238] sm:$0xff]
        %v379 = vld [vmem:[#allocation5 + $0x240] sm:$0xff]
        %v380 = vld [vmem:[#allocation5 + $0x248] sm:$0xff]
        %v381 = vld [vmem:[#allocation5 + $0x250] sm:$0xff]
        %v382 = vld [vmem:[#allocation5 + $0x258] sm:$0xff]
        %v383 = vld [vmem:[#allocation5 + $0x260] sm:$0xff]
        %v384 = vld [vmem:[#allocation5 + $0x268] sm:$0xff]
        %v385 = vld [vmem:[#allocation5 + $0x270] sm:$0xff]
        %v386 = vld [vmem:[#allocation5 + $0x278] sm:$0xff]
        %v387 = vld [vmem:[#allocation5 + $0x280] sm:$0xff]
        %v388 = vld [vmem:[#allocation5 + $0x288] sm:$0xff]
        %v389 = vld [vmem:[#allocation5 + $0x290] sm:$0xff]
        %v390 = vld [vmem:[#allocation5 + $0x298] sm:$0xff]
        %v391 = vld [vmem:[#allocation5 + $0x2a0] sm:$0xff]
        %v392 = vld [vmem:[#allocation5 + $0x2a8] sm:$0xff]
        %v393 = vld [vmem:[#allocation5 + $0x2b0] sm:$0xff]
        %v394 = vld [vmem:[#allocation5 + $0x2b8] sm:$0xff]
        %v395 = vld [vmem:[#allocation5 + $0x2c0] sm:$0xff]
        %v396 = vld [vmem:[#allocation5 + $0x2c8] sm:$0xff]
        %v397 = vld [vmem:[#allocation5 + $0x2d0] sm:$0xff]
        %v398 = vld [vmem:[#allocation5 + $0x2d8] sm:$0xff]
        %v399 = vld [vmem:[#allocation5 + $0x2e0] sm:$0xff]
        %v400 = vld [vmem:[#allocation5 + $0x2e8] sm:$0xff]
        %v401 = vld [vmem:[#allocation5 + $0x2f0] sm:$0xff]
        %v402 = vld [vmem:[#allocation5 + $0x2f8] sm:$0xff]
        %v403 = vld [vmem:[#allocation5 + $0x300] sm:$0xff]
        %v404 = vld [vmem:[#allocation5 + $0x308] sm:$0xff]
        %v405 = vld [vmem:[#allocation5 + $0x310] sm:$0xff]
        %v406 = vld [vmem:[#allocation5 + $0x318] sm:$0xff]
        %v407 = vld [vmem:[#allocation5 + $0x320] sm:$0xff]
        %v408 = vld [vmem:[#allocation5 + $0x328] sm:$0xff]
        %v409 = vld [vmem:[#allocation5 + $0x330] sm:$0xff]
        %v410 = vld [vmem:[#allocation5 + $0x338] sm:$0xff]
        %v411 = vld [vmem:[#allocation5 + $0x340] sm:$0xff]
        %v412 = vld [vmem:[#allocation5 + $0x348] sm:$0xff]
        %v413 = vld [vmem:[#allocation5 + $0x350] sm:$0xff]
        %v414 = vld [vmem:[#allocation5 + $0x358] sm:$0xff]
        %v415 = vld [vmem:[#allocation5 + $0x360] sm:$0xff]
        %v416 = vld [vmem:[#allocation5 + $0x368] sm:$0xff]
        %v417 = vld [vmem:[#allocation5 + $0x370] sm:$0xff]
        %v418 = vld [vmem:[#allocation5 + $0x378] sm:$0xff]
        %v419 = vld [vmem:[#allocation5 + $0x380] sm:$0xff]
        %v420 = vld [vmem:[#allocation5 + $0x388] sm:$0xff]
        %v421 = vld [vmem:[#allocation5 + $0x390] sm:$0xff]
        %v422 = vld [vmem:[#allocation5 + $0x398] sm:$0xff]
        %v423 = vld [vmem:[#allocation5 + $0x3a0] sm:$0xff]
        %v424 = vld [vmem:[#allocation5 + $0x3a8] sm:$0xff]
        %v425 = vld [vmem:[#allocation5 + $0x3b0] sm:$0xff]
        %v426 = vld [vmem:[#allocation5 + $0x3b8] sm:$0xff]
        %v427 = vld [vmem:[#allocation5 + $0x3c0] sm:$0xff]
        %v428 = vld [vmem:[#allocation5 + $0x3c8] sm:$0xff]
        %v429 = vld [vmem:[#allocation5 + $0x3d0] sm:$0xff]
        %v430 = vld [vmem:[#allocation5 + $0x3d8] sm:$0xff]
        %v431 = vld [vmem:[#allocation5 + $0x3e0] sm:$0xff]
        %v432 = vld [vmem:[#allocation5 + $0x3e8] sm:$0xff]
        %v433 = vld [vmem:[#allocation5 + $0x3f0] sm:$0xff]
        %v434 = vld [vmem:[#allocation5 + $0x3f8] sm:$0xff]
        %v435 = vld [vmem:[#allocation7] sm:$0xf]
        %v437 = vperm.slane %v435, 0
        %v438 = vperm.slane %v435, 1
        %v439 = vperm.slane %v435, 2
        %v440 = vperm.slane %v435, 3
        %v447 = vunpack.c.l.b16 %v305
        %v448 = vunpack.c.h.b16 %v305
        %v449 = vunpack.c.l.b16 %v306
        %v450 = vunpack.c.h.b16 %v306
        %v451 = vpack.c.b16 %v447, %v447
        %v452 = vpack.c.b16 %v448, %v448
        %v453 = vpack.c.b16 %v449, %v449
        %v454 = vpack.c.b16 %v450, %v450
        %v587 = vunpack.c.l.b16 %v307
        %v588 = vunpack.c.h.b16 %v307
        %v589 = vunpack.c.l.b16 %v308
        %v590 = vunpack.c.h.b16 %v308
        %v591 = vunpack.c.l.b16 %v309
        %v592 = vunpack.c.h.b16 %v309
        %v593 = vunpack.c.l.b16 %v310
        %v594 = vunpack.c.h.b16 %v310
        %v595 = vunpack.c.l.b16 %v311
        %v596 = vunpack.c.h.b16 %v311
        %v597 = vunpack.c.l.b16 %v312
        %v598 = vunpack.c.h.b16 %v312
        %v599 = vunpack.c.l.b16 %v313
        %v600 = vunpack.c.h.b16 %v313
        %v601 = vunpack.c.l.b16 %v314
        %v602 = vunpack.c.h.b16 %v314
        %v603 = vunpack.c.l.b16 %v315
        %v604 = vunpack.c.h.b16 %v315
        %v605 = vunpack.c.l.b16 %v316
        %v606 = vunpack.c.h.b16 %v316
        %v607 = vunpack.c.l.b16 %v317
        %v608 = vunpack.c.h.b16 %v317
        %v609 = vunpack.c.l.b16 %v318
        %v610 = vunpack.c.h.b16 %v318
        %v611 = vunpack.c.l.b16 %v319
        %v612 = vunpack.c.h.b16 %v319
        %v613 = vunpack.c.l.b16 %v320
        %v614 = vunpack.c.h.b16 %v320
        %v615 = vunpack.c.l.b16 %v321
        %v616 = vunpack.c.h.b16 %v321
        %v617 = vunpack.c.l.b16 %v322
        %v618 = vunpack.c.h.b16 %v322
        %v619 = vunpack.c.l.b16 %v323
        %v620 = vunpack.c.h.b16 %v323
        %v621 = vunpack.c.l.b16 %v324
        %v622 = vunpack.c.h.b16 %v324
        %v623 = vunpack.c.l.b16 %v325
        %v624 = vunpack.c.h.b16 %v325
        %v625 = vunpack.c.l.b16 %v326
        %v626 = vunpack.c.h.b16 %v326
        %v627 = vunpack.c.l.b16 %v327
        %v628 = vunpack.c.h.b16 %v327
        %v629 = vunpack.c.l.b16 %v328
        %v630 = vunpack.c.h.b16 %v328
        %v631 = vunpack.c.l.b16 %v329
        %v632 = vunpack.c.h.b16 %v329
        %v633 = vunpack.c.l.b16 %v330
        %v634 = vunpack.c.h.b16 %v330
        %v635 = vunpack.c.l.b16 %v331
        %v636 = vunpack.c.h.b16 %v331
        %v637 = vunpack.c.l.b16 %v332
        %v638 = vunpack.c.h.b16 %v332
        %v639 = vunpack.c.l.b16 %v333
        %v640 = vunpack.c.h.b16 %v333
        %v641 = vunpack.c.l.b16 %v334
        %v642 = vunpack.c.h.b16 %v334
        %v643 = vunpack.c.l.b16 %v335
        %v644 = vunpack.c.h.b16 %v335
        %v645 = vunpack.c.l.b16 %v336
        %v646 = vunpack.c.h.b16 %v336
        %v647 = vunpack.c.l.b16 %v337
        %v648 = vunpack.c.h.b16 %v337
        %v649 = vunpack.c.l.b16 %v338
        %v650 = vunpack.c.h.b16 %v338
        %v651 = vunpack.c.l.b16 %v339
        %v652 = vunpack.c.h.b16 %v339
        %v653 = vunpack.c.l.b16 %v340
        %v654 = vunpack.c.h.b16 %v340
        %v655 = vunpack.c.l.b16 %v341
        %v656 = vunpack.c.h.b16 %v341
        %v657 = vunpack.c.l.b16 %v342
        %v658 = vunpack.c.h.b16 %v342
        %v659 = vunpack.c.l.b16 %v343
        %v660 = vunpack.c.h.b16 %v343
        %v661 = vunpack.c.l.b16 %v344
        %v662 = vunpack.c.h.b16 %v344
        %v663 = vunpack.c.l.b16 %v345
        %v664 = vunpack.c.h.b16 %v345
        %v665 = vunpack.c.l.b16 %v346
        %v666 = vunpack.c.h.b16 %v346
        %v667 = vunpack.c.l.b16 %v347
        %v668 = vunpack.c.h.b16 %v347
        %v669 = vunpack.c.l.b16 %v348
        %v670 = vunpack.c.h.b16 %v348
        %v671 = vunpack.c.l.b16 %v349
        %v672 = vunpack.c.h.b16 %v349
        %v673 = vunpack.c.l.b16 %v350
        %v674 = vunpack.c.h.b16 %v350
        %v675 = vunpack.c.l.b16 %v351
        %v676 = vunpack.c.h.b16 %v351
        %v677 = vunpack.c.l.b16 %v352
        %v678 = vunpack.c.h.b16 %v352
        %v679 = vunpack.c.l.b16 %v353
        %v680 = vunpack.c.h.b16 %v353
        %v681 = vunpack.c.l.b16 %v354
        %v682 = vunpack.c.h.b16 %v354
        %v683 = vunpack.c.l.b16 %v355
        %v684 = vunpack.c.h.b16 %v355
        %v685 = vunpack.c.l.b16 %v356
        %v686 = vunpack.c.h.b16 %v356
        %v687 = vunpack.c.l.b16 %v357
        %v688 = vunpack.c.h.b16 %v357
        %v689 = vunpack.c.l.b16 %v358
        %v690 = vunpack.c.h.b16 %v358
        %v691 = vunpack.c.l.b16 %v359
        %v692 = vunpack.c.h.b16 %v359
        %v693 = vunpack.c.l.b16 %v360
        %v694 = vunpack.c.h.b16 %v360
        %v695 = vunpack.c.l.b16 %v361
        %v696 = vunpack.c.h.b16 %v361
        %v697 = vunpack.c.l.b16 %v362
        %v698 = vunpack.c.h.b16 %v362
        %v699 = vunpack.c.l.b16 %v363
        %v700 = vunpack.c.h.b16 %v363
        %v701 = vunpack.c.l.b16 %v364
        %v702 = vunpack.c.h.b16 %v364
        %v703 = vunpack.c.l.b16 %v365
        %v704 = vunpack.c.h.b16 %v365
        %v705 = vunpack.c.l.b16 %v366
        %v706 = vunpack.c.h.b16 %v366
        %v707 = vunpack.c.l.b16 %v367
        %v708 = vunpack.c.h.b16 %v367
        %v709 = vunpack.c.l.b16 %v368
        %v710 = vunpack.c.h.b16 %v368
        %v711 = vunpack.c.l.b16 %v369
        %v712 = vunpack.c.h.b16 %v369
        %v713 = vunpack.c.l.b16 %v370
        %v714 = vunpack.c.h.b16 %v370
        %v715 = vunpack.c.l.b16 %v371
        %v716 = vunpack.c.h.b16 %v371
        %v717 = vunpack.c.l.b16 %v372
        %v718 = vunpack.c.h.b16 %v372
        %v719 = vunpack.c.l.b16 %v373
        %v720 = vunpack.c.h.b16 %v373
        %v721 = vunpack.c.l.b16 %v374
        %v722 = vunpack.c.h.b16 %v374
        %v723 = vunpack.c.l.b16 %v375
        %v724 = vunpack.c.h.b16 %v375
        %v725 = vunpack.c.l.b16 %v376
        %v726 = vunpack.c.h.b16 %v376
        %v727 = vunpack.c.l.b16 %v377
        %v728 = vunpack.c.h.b16 %v377
        %v729 = vunpack.c.l.b16 %v378
        %v730 = vunpack.c.h.b16 %v378
        %v731 = vunpack.c.l.b16 %v379
        %v732 = vunpack.c.h.b16 %v379
        %v733 = vunpack.c.l.b16 %v380
        %v734 = vunpack.c.h.b16 %v380
        %v735 = vunpack.c.l.b16 %v381
        %v736 = vunpack.c.h.b16 %v381
        %v737 = vunpack.c.l.b16 %v382
        %v738 = vunpack.c.h.b16 %v382
        %v739 = vunpack.c.l.b16 %v383
        %v740 = vunpack.c.h.b16 %v383
        %v741 = vunpack.c.l.b16 %v384
        %v742 = vunpack.c.h.b16 %v384
        %v743 = vunpack.c.l.b16 %v385
        %v744 = vunpack.c.h.b16 %v385
        %v745 = vunpack.c.l.b16 %v386
        %v746 = vunpack.c.h.b16 %v386
        %v747 = vunpack.c.l.b16 %v387
        %v748 = vunpack.c.h.b16 %v387
        %v749 = vunpack.c.l.b16 %v388
        %v750 = vunpack.c.h.b16 %v388
        %v751 = vunpack.c.l.b16 %v389
        %v752 = vunpack.c.h.b16 %v389
        %v753 = vunpack.c.l.b16 %v390
        %v754 = vunpack.c.h.b16 %v390
        %v755 = vunpack.c.l.b16 %v391
        %v756 = vunpack.c.h.b16 %v391
        %v757 = vunpack.c.l.b16 %v392
        %v758 = vunpack.c.h.b16 %v392
        %v759 = vunpack.c.l.b16 %v393
        %v760 = vunpack.c.h.b16 %v393
        %v761 = vunpack.c.l.b16 %v394
        %v762 = vunpack.c.h.b16 %v394
        %v763 = vunpack.c.l.b16 %v395
        %v764 = vunpack.c.h.b16 %v395
        %v765 = vunpack.c.l.b16 %v396
        %v766 = vunpack.c.h.b16 %v396
        %v767 = vunpack.c.l.b16 %v397
        %v768 = vunpack.c.h.b16 %v397
        %v769 = vunpack.c.l.b16 %v398
        %v770 = vunpack.c.h.b16 %v398
        %v771 = vunpack.c.l.b16 %v399
        %v772 = vunpack.c.h.b16 %v399
        %v773 = vunpack.c.l.b16 %v400
        %v774 = vunpack.c.h.b16 %v400
        %v775 = vunpack.c.l.b16 %v401
        %v776 = vunpack.c.h.b16 %v401
        %v777 = vunpack.c.l.b16 %v402
        %v778 = vunpack.c.h.b16 %v402
        %v779 = vunpack.c.l.b16 %v403
        %v780 = vunpack.c.h.b16 %v403
        %v781 = vunpack.c.l.b16 %v404
        %v782 = vunpack.c.h.b16 %v404
        %v783 = vunpack.c.l.b16 %v405
        %v784 = vunpack.c.h.b16 %v405
        %v785 = vunpack.c.l.b16 %v406
        %v786 = vunpack.c.h.b16 %v406
        %v787 = vunpack.c.l.b16 %v407
        %v788 = vunpack.c.h.b16 %v407
        %v789 = vunpack.c.l.b16 %v408
        %v790 = vunpack.c.h.b16 %v408
        %v791 = vunpack.c.l.b16 %v409
        %v792 = vunpack.c.h.b16 %v409
        %v793 = vunpack.c.l.b16 %v410
        %v794 = vunpack.c.h.b16 %v410
        %v795 = vunpack.c.l.b16 %v411
        %v796 = vunpack.c.h.b16 %v411
        %v797 = vunpack.c.l.b16 %v412
        %v798 = vunpack.c.h.b16 %v412
        %v799 = vunpack.c.l.b16 %v413
        %v800 = vunpack.c.h.b16 %v413
        %v801 = vunpack.c.l.b16 %v414
        %v802 = vunpack.c.h.b16 %v414
        %v803 = vunpack.c.l.b16 %v415
        %v804 = vunpack.c.h.b16 %v415
        %v805 = vunpack.c.l.b16 %v416
        %v806 = vunpack.c.h.b16 %v416
        %v807 = vunpack.c.l.b16 %v417
        %v808 = vunpack.c.h.b16 %v417
        %v809 = vunpack.c.l.b16 %v418
        %v810 = vunpack.c.h.b16 %v418
        %v811 = vunpack.c.l.b16 %v419
        %v812 = vunpack.c.h.b16 %v419
        %v813 = vunpack.c.l.b16 %v420
        %v814 = vunpack.c.h.b16 %v420
        %v815 = vunpack.c.l.b16 %v421
        %v816 = vunpack.c.h.b16 %v421
        %v817 = vunpack.c.l.b16 %v422
        %v818 = vunpack.c.h.b16 %v422
        %v819 = vunpack.c.l.b16 %v423
        %v820 = vunpack.c.h.b16 %v423
        %v821 = vunpack.c.l.b16 %v424
        %v822 = vunpack.c.h.b16 %v424
        %v823 = vunpack.c.l.b16 %v425
        %v824 = vunpack.c.h.b16 %v425
        %v825 = vunpack.c.l.b16 %v426
        %v826 = vunpack.c.h.b16 %v426
        %v827 = vunpack.c.l.b16 %v427
        %v828 = vunpack.c.h.b16 %v427
        %v829 = vunpack.c.l.b16 %v428
        %v830 = vunpack.c.h.b16 %v428
        %v831 = vunpack.c.l.b16 %v429
        %v832 = vunpack.c.h.b16 %v429
        %v833 = vunpack.c.l.b16 %v430
        %v834 = vunpack.c.h.b16 %v430
        %v835 = vunpack.c.l.b16 %v431
        %v836 = vunpack.c.h.b16 %v431
        %v837 = vunpack.c.l.b16 %v432
        %v838 = vunpack.c.h.b16 %v432
        %v839 = vunpack.c.l.b16 %v433
        %v840 = vunpack.c.h.b16 %v433
        %v841 = vunpack.c.l.b16 %v434
        %v842 = vunpack.c.h.b16 %v434
        %v843 = vpack.c.b16 %v591, %v587
        %v844 = vpack.c.b16 %v592, %v588
        %v845 = vpack.c.b16 %v593, %v589
        %v846 = vpack.c.b16 %v594, %v590
        %v847 = vpack.c.b16 %v599, %v595
        %v848 = vpack.c.b16 %v600, %v596
        %v849 = vpack.c.b16 %v601, %v597
        %v850 = vpack.c.b16 %v602, %v598
        %v851 = vpack.c.b16 %v607, %v603
        %v852 = vpack.c.b16 %v608, %v604
        %v853 = vpack.c.b16 %v609, %v605
        %v854 = vpack.c.b16 %v610, %v606
        %v855 = vpack.c.b16 %v615, %v611
        %v856 = vpack.c.b16 %v616, %v612
        %v857 = vpack.c.b16 %v617, %v613
        %v858 = vpack.c.b16 %v618, %v614
        %v859 = vpack.c.b16 %v623, %v619
        %v860 = vpack.c.b16 %v624, %v620
        %v861 = vpack.c.b16 %v625, %v621
        %v862 = vpack.c.b16 %v626, %v622
        %v863 = vpack.c.b16 %v631, %v627
        %v864 = vpack.c.b16 %v632, %v628
        %v865 = vpack.c.b16 %v633, %v629
        %v866 = vpack.c.b16 %v634, %v630
        %v867 = vpack.c.b16 %v639, %v635
        %v868 = vpack.c.b16 %v640, %v636
        %v869 = vpack.c.b16 %v641, %v637
        %v870 = vpack.c.b16 %v642, %v638
        %v871 = vpack.c.b16 %v647, %v643
        %v872 = vpack.c.b16 %v648, %v644
        %v873 = vpack.c.b16 %v649, %v645
        %v874 = vpack.c.b16 %v650, %v646
        %v875 = vpack.c.b16 %v655, %v651
        %v876 = vpack.c.b16 %v656, %v652
        %v877 = vpack.c.b16 %v657, %v653
        %v878 = vpack.c.b16 %v658, %v654
        %v879 = vpack.c.b16 %v663, %v659
        %v880 = vpack.c.b16 %v664, %v660
        %v881 = vpack.c.b16 %v665, %v661
        %v882 = vpack.c.b16 %v666, %v662
        %v883 = vpack.c.b16 %v671, %v667
        %v884 = vpack.c.b16 %v672, %v668
        %v885 = vpack.c.b16 %v673, %v669
        %v886 = vpack.c.b16 %v674, %v670
        %v887 = vpack.c.b16 %v679, %v675
        %v888 = vpack.c.b16 %v680, %v676
        %v889 = vpack.c.b16 %v681, %v677
        %v890 = vpack.c.b16 %v682, %v678
        %v891 = vpack.c.b16 %v687, %v683
        %v892 = vpack.c.b16 %v688, %v684
        %v893 = vpack.c.b16 %v689, %v685
        %v894 = vpack.c.b16 %v690, %v686
        %v895 = vpack.c.b16 %v695, %v691
        %v896 = vpack.c.b16 %v696, %v692
        %v897 = vpack.c.b16 %v697, %v693
        %v898 = vpack.c.b16 %v698, %v694
        %v899 = vpack.c.b16 %v703, %v699
        %v900 = vpack.c.b16 %v704, %v700
        %v901 = vpack.c.b16 %v705, %v701
        %v902 = vpack.c.b16 %v706, %v702
        %v903 = vpack.c.b16 %v711, %v707
        %v904 = vpack.c.b16 %v712, %v708
        %v905 = vpack.c.b16 %v713, %v709
        %v906 = vpack.c.b16 %v714, %v710
        %v907 = vpack.c.b16 %v719, %v715
        %v908 = vpack.c.b16 %v720, %v716
        %v909 = vpack.c.b16 %v721, %v717
        %v910 = vpack.c.b16 %v722, %v718
        %v911 = vpack.c.b16 %v727, %v723
        %v912 = vpack.c.b16 %v728, %v724
        %v913 = vpack.c.b16 %v729, %v725
        %v914 = vpack.c.b16 %v730, %v726
        %v915 = vpack.c.b16 %v735, %v731
        %v916 = vpack.c.b16 %v736, %v732
        %v917 = vpack.c.b16 %v737, %v733
        %v918 = vpack.c.b16 %v738, %v734
        %v919 = vpack.c.b16 %v743, %v739
        %v920 = vpack.c.b16 %v744, %v740
        %v921 = vpack.c.b16 %v745, %v741
        %v922 = vpack.c.b16 %v746, %v742
        %v923 = vpack.c.b16 %v751, %v747
        %v924 = vpack.c.b16 %v752, %v748
        %v925 = vpack.c.b16 %v753, %v749
        %v926 = vpack.c.b16 %v754, %v750
        %v927 = vpack.c.b16 %v759, %v755
        %v928 = vpack.c.b16 %v760, %v756
        %v929 = vpack.c.b16 %v761, %v757
        %v930 = vpack.c.b16 %v762, %v758
        %v931 = vpack.c.b16 %v767, %v763
        %v932 = vpack.c.b16 %v768, %v764
        %v933 = vpack.c.b16 %v769, %v765
        %v934 = vpack.c.b16 %v770, %v766
        %v935 = vpack.c.b16 %v775, %v771
        %v936 = vpack.c.b16 %v776, %v772
        %v937 = vpack.c.b16 %v777, %v773
        %v938 = vpack.c.b16 %v778, %v774
        %v939 = vpack.c.b16 %v783, %v779
        %v940 = vpack.c.b16 %v784, %v780
        %v941 = vpack.c.b16 %v785, %v781
        %v942 = vpack.c.b16 %v786, %v782
        %v943 = vpack.c.b16 %v791, %v787
        %v944 = vpack.c.b16 %v792, %v788
        %v945 = vpack.c.b16 %v793, %v789
        %v946 = vpack.c.b16 %v794, %v790
        %v947 = vpack.c.b16 %v799, %v795
        %v948 = vpack.c.b16 %v800, %v796
        %v949 = vpack.c.b16 %v801, %v797
        %v950 = vpack.c.b16 %v802, %v798
        %v951 = vpack.c.b16 %v807, %v803
        %v952 = vpack.c.b16 %v808, %v804
        %v953 = vpack.c.b16 %v809, %v805
        %v954 = vpack.c.b16 %v810, %v806
        %v955 = vpack.c.b16 %v815, %v811
        %v956 = vpack.c.b16 %v816, %v812
        %v957 = vpack.c.b16 %v817, %v813
        %v958 = vpack.c.b16 %v818, %v814
        %v959 = vpack.c.b16 %v823, %v819
        %v960 = vpack.c.b16 %v824, %v820
        %v961 = vpack.c.b16 %v825, %v821
        %v962 = vpack.c.b16 %v826, %v822
        %v963 = vpack.c.b16 %v831, %v827
        %v964 = vpack.c.b16 %v832, %v828
        %v965 = vpack.c.b16 %v833, %v829
        %v966 = vpack.c.b16 %v834, %v830
        %v967 = vpack.c.b16 %v839, %v835
        %v968 = vpack.c.b16 %v840, %v836
        %v969 = vpack.c.b16 %v841, %v837
        %v970 = vpack.c.b16 %v842, %v838
        %1099 = vmatpush.bf16.msra.mxu0 %v871
        %1100 = vmatpush.bf16.msra.mxu0 %v867
        %1101 = vmatpush.bf16.msra.mxu0 %v863
        %1102 = vmatpush.bf16.msra.mxu0 %v859
        %1103 = vmatpush.bf16.msra.mxu0 %v855
        %1104 = vmatpush.bf16.msra.mxu0 %v851
        %1105 = vmatpush.bf16.msra.mxu0 %v847
        %1106 = vmatpush.bf16.msra.mxu0 %v843
        %1107 = vmatmul.bf16.gmra.mxu0 %v451
        %v1108 = vpop.f32.mrf.mxu0
        %v1109 = vadd.f32 %v437, %v1108
        %v1110 = vpop.f32.mrf.mxu0
        %1111 = vdwg.mxu0
        %1112 = vmatpush.bf16.msra.mxu0 %v903
        %1113 = vmatpush.bf16.msra.mxu0 %v899
        %1114 = vmatpush.bf16.msra.mxu0 %v895
        %1115 = vmatpush.bf16.msra.mxu0 %v891
        %1116 = vmatpush.bf16.msra.mxu0 %v887
        %1117 = vmatpush.bf16.msra.mxu0 %v883
        %1118 = vmatpush.bf16.msra.mxu0 %v879
        %1119 = vmatpush.bf16.msra.mxu0 %v875
        %1120 = vmatmul.bf16.gmra.mxu0 %v452
        %v1121 = vpop.f32.mrf.mxu0
        %v1122 = vadd.f32 %v1109, %v1121
        %v1123 = vpop.f32.mrf.mxu0
        %1124 = vdwg.mxu0
        %1125 = vmatpush.bf16.msra.mxu0 %v935
        %1126 = vmatpush.bf16.msra.mxu0 %v931
        %1127 = vmatpush.bf16.msra.mxu0 %v927
        %1128 = vmatpush.bf16.msra.mxu0 %v923
        %1129 = vmatpush.bf16.msra.mxu0 %v919
        %1130 = vmatpush.bf16.msra.mxu0 %v915
        %1131 = vmatpush.bf16.msra.mxu0 %v911
        %1132 = vmatpush.bf16.msra.mxu0 %v907
        %1133 = vmatmul.bf16.gmra.mxu0 %v453
        %v1134 = vpop.f32.mrf.mxu0
        %v1135 = vadd.f32 %v1122, %v1134
        %v1136 = vpop.f32.mrf.mxu0
        %1137 = vdwg.mxu0
        %1138 = vmatpush.bf16.msra.mxu0 %v967
        %1139 = vmatpush.bf16.msra.mxu0 %v963
        %1140 = vmatpush.bf16.msra.mxu0 %v959
        %1141 = vmatpush.bf16.msra.mxu0 %v955
        %1142 = vmatpush.bf16.msra.mxu0 %v951
        %1143 = vmatpush.bf16.msra.mxu0 %v947
        %1144 = vmatpush.bf16.msra.mxu0 %v943
        %1145 = vmatpush.bf16.msra.mxu0 %v939
        %1146 = vmatmul.bf16.gmra.mxu0 %v454
        %v1147 = vpop.f32.mrf.mxu0
        %v1148 = vadd.f32 %v1135, %v1147
        %v1149 = vpop.f32.mrf.mxu0
        %1150 = vdwg.mxu0
        %1151 = vmatpush.bf16.msra.mxu0 %v872
        %1152 = vmatpush.bf16.msra.mxu0 %v868
        %1153 = vmatpush.bf16.msra.mxu0 %v864
        %1154 = vmatpush.bf16.msra.mxu0 %v860
        %1155 = vmatpush.bf16.msra.mxu0 %v856
        %1156 = vmatpush.bf16.msra.mxu0 %v852
        %1157 = vmatpush.bf16.msra.mxu0 %v848
        %1158 = vmatpush.bf16.msra.mxu0 %v844
        %1159 = vmatmul.bf16.gmra.mxu0 %v451
        %v1160 = vpop.f32.mrf.mxu0
        %v1161 = vadd.f32 %v438, %v1160
        %v1162 = vpop.f32.mrf.mxu0
        %1163 = vdwg.mxu0
        %1164 = vmatpush.bf16.msra.mxu0 %v904
        %1165 = vmatpush.bf16.msra.mxu0 %v900
        %1166 = vmatpush.bf16.msra.mxu0 %v896
        %1167 = vmatpush.bf16.msra.mxu0 %v892
        %1168 = vmatpush.bf16.msra.mxu0 %v888
        %1169 = vmatpush.bf16.msra.mxu0 %v884
        %1170 = vmatpush.bf16.msra.mxu0 %v880
        %1171 = vmatpush.bf16.msra.mxu0 %v876
        %1172 = vmatmul.bf16.gmra.mxu0 %v452
        %v1173 = vpop.f32.mrf.mxu0
        %v1174 = vadd.f32 %v1161, %v1173
        %v1175 = vpop.f32.mrf.mxu0
        %1176 = vdwg.mxu0
        %1177 = vmatpush.bf16.msra.mxu0 %v936
        %1178 = vmatpush.bf16.msra.mxu0 %v932
        %1179 = vmatpush.bf16.msra.mxu0 %v928
        %1180 = vmatpush.bf16.msra.mxu0 %v924
        %1181 = vmatpush.bf16.msra.mxu0 %v920
        %1182 = vmatpush.bf16.msra.mxu0 %v916
        %1183 = vmatpush.bf16.msra.mxu0 %v912
        %1184 = vmatpush.bf16.msra.mxu0 %v908
        %1185 = vmatmul.bf16.gmra.mxu0 %v453
        %v1186 = vpop.f32.mrf.mxu0
        %v1187 = vadd.f32 %v1174, %v1186
        %v1188 = vpop.f32.mrf.mxu0
        %1189 = vdwg.mxu0
        %1190 = vmatpush.bf16.msra.mxu0 %v968
        %1191 = vmatpush.bf16.msra.mxu0 %v964
        %1192 = vmatpush.bf16.msra.mxu0 %v960
        %1193 = vmatpush.bf16.msra.mxu0 %v956
        %1194 = vmatpush.bf16.msra.mxu0 %v952
        %1195 = vmatpush.bf16.msra.mxu0 %v948
        %1196 = vmatpush.bf16.msra.mxu0 %v944
        %1197 = vmatpush.bf16.msra.mxu0 %v940
        %1198 = vmatmul.bf16.gmra.mxu0 %v454
        %v1199 = vpop.f32.mrf.mxu0
        %v1200 = vadd.f32 %v1187, %v1199
        %v1201 = vpop.f32.mrf.mxu0
        %1202 = vdwg.mxu0
        %1203 = vmatpush.bf16.msra.mxu0 %v873
        %1204 = vmatpush.bf16.msra.mxu0 %v869
        %1205 = vmatpush.bf16.msra.mxu0 %v865
        %1206 = vmatpush.bf16.msra.mxu0 %v861
        %1207 = vmatpush.bf16.msra.mxu0 %v857
        %1208 = vmatpush.bf16.msra.mxu0 %v853
        %1209 = vmatpush.bf16.msra.mxu0 %v849
        %1210 = vmatpush.bf16.msra.mxu0 %v845
        %1211 = vmatmul.bf16.gmra.mxu0 %v451
        %v1212 = vpop.f32.mrf.mxu0
        %v1213 = vadd.f32 %v439, %v1212
        %v1214 = vpop.f32.mrf.mxu0
        %1215 = vdwg.mxu0
        %1216 = vmatpush.bf16.msra.mxu0 %v905
        %1217 = vmatpush.bf16.msra.mxu0 %v901
        %1218 = vmatpush.bf16.msra.mxu0 %v897
        %1219 = vmatpush.bf16.msra.mxu0 %v893
        %1220 = vmatpush.bf16.msra.mxu0 %v889
        %1221 = vmatpush.bf16.msra.mxu0 %v885
        %1222 = vmatpush.bf16.msra.mxu0 %v881
        %1223 = vmatpush.bf16.msra.mxu0 %v877
        %1224 = vmatmul.bf16.gmra.mxu0 %v452
        %v1225 = vpop.f32.mrf.mxu0
        %v1226 = vadd.f32 %v1213, %v1225
        %v1227 = vpop.f32.mrf.mxu0
        %1228 = vdwg.mxu0
        %1229 = vmatpush.bf16.msra.mxu0 %v937
        %1230 = vmatpush.bf16.msra.mxu0 %v933
        %1231 = vmatpush.bf16.msra.mxu0 %v929
        %1232 = vmatpush.bf16.msra.mxu0 %v925
        %1233 = vmatpush.bf16.msra.mxu0 %v921
        %1234 = vmatpush.bf16.msra.mxu0 %v917
        %1235 = vmatpush.bf16.msra.mxu0 %v913
        %1236 = vmatpush.bf16.msra.mxu0 %v909
        %1237 = vmatmul.bf16.gmra.mxu0 %v453
        %v1238 = vpop.f32.mrf.mxu0
        %v1239 = vadd.f32 %v1226, %v1238
        %v1240 = vpop.f32.mrf.mxu0
        %1241 = vdwg.mxu0
        %1242 = vmatpush.bf16.msra.mxu0 %v969
        %1243 = vmatpush.bf16.msra.mxu0 %v965
        %1244 = vmatpush.bf16.msra.mxu0 %v961
        %1245 = vmatpush.bf16.msra.mxu0 %v957
        %1246 = vmatpush.bf16.msra.mxu0 %v953
        %1247 = vmatpush.bf16.msra.mxu0 %v949
        %1248 = vmatpush.bf16.msra.mxu0 %v945
        %1249 = vmatpush.bf16.msra.mxu0 %v941
        %1250 = vmatmul.bf16.gmra.mxu0 %v454
        %v1251 = vpop.f32.mrf.mxu0
        %v1252 = vadd.f32 %v1239, %v1251
        %v1253 = vpop.f32.mrf.mxu0
        %1254 = vdwg.mxu0
        %1255 = vmatpush.bf16.msra.mxu0 %v874
        %1256 = vmatpush.bf16.msra.mxu0 %v870
        %1257 = vmatpush.bf16.msra.mxu0 %v866
        %1258 = vmatpush.bf16.msra.mxu0 %v862
        %1259 = vmatpush.bf16.msra.mxu0 %v858
        %1260 = vmatpush.bf16.msra.mxu0 %v854
        %1261 = vmatpush.bf16.msra.mxu0 %v850
        %1262 = vmatpush.bf16.msra.mxu0 %v846
        %1263 = vmatmul.bf16.gmra.mxu0 %v451
        %v1264 = vpop.f32.mrf.mxu0
        %v1265 = vadd.f32 %v440, %v1264
        %v1266 = vpop.f32.mrf.mxu0
        %1267 = vdwg.mxu0
        %1268 = vmatpush.bf16.msra.mxu0 %v906
        %1269 = vmatpush.bf16.msra.mxu0 %v902
        %1270 = vmatpush.bf16.msra.mxu0 %v898
        %1271 = vmatpush.bf16.msra.mxu0 %v894
        %1272 = vmatpush.bf16.msra.mxu0 %v890
        %1273 = vmatpush.bf16.msra.mxu0 %v886
        %1274 = vmatpush.bf16.msra.mxu0 %v882
        %1275 = vmatpush.bf16.msra.mxu0 %v878
        %1276 = vmatmul.bf16.gmra.mxu0 %v452
        %v1277 = vpop.f32.mrf.mxu0
        %v1278 = vadd.f32 %v1265, %v1277
        %v1279 = vpop.f32.mrf.mxu0
        %1280 = vdwg.mxu0
        %1281 = vmatpush.bf16.msra.mxu0 %v938
        %1282 = vmatpush.bf16.msra.mxu0 %v934
        %1283 = vmatpush.bf16.msra.mxu0 %v930
        %1284 = vmatpush.bf16.msra.mxu0 %v926
        %1285 = vmatpush.bf16.msra.mxu0 %v922
        %1286 = vmatpush.bf16.msra.mxu0 %v918
        %1287 = vmatpush.bf16.msra.mxu0 %v914
        %1288 = vmatpush.bf16.msra.mxu0 %v910
        %1289 = vmatmul.bf16.gmra.mxu0 %v453
        %v1290 = vpop.f32.mrf.mxu0
        %v1291 = vadd.f32 %v1278, %v1290
        %v1292 = vpop.f32.mrf.mxu0
        %1293 = vdwg.mxu0
        %1294 = vmatpush.bf16.msra.mxu0 %v970
        %1295 = vmatpush.bf16.msra.mxu0 %v966
        %1296 = vmatpush.bf16.msra.mxu0 %v962
        %1297 = vmatpush.bf16.msra.mxu0 %v958
        %1298 = vmatpush.bf16.msra.mxu0 %v954
        %1299 = vmatpush.bf16.msra.mxu0 %v950
        %1300 = vmatpush.bf16.msra.mxu0 %v946
        %1301 = vmatpush.bf16.msra.mxu0 %v942
        %1302 = vmatmul.bf16.gmra.mxu0 %v454
        %v1303 = vpop.f32.mrf.mxu0
        %v1304 = vadd.f32 %v1291, %v1303
        %v1305 = vpop.f32.mrf.mxu0
        %1306 = vdwg.mxu0
        %v1307 = vmax.f32 %v1148, 0.0
        %v1308 = vmax.f32 %v1200, 0.0
        %v1309 = vmax.f32 %v1252, 0.0
        %v1310 = vmax.f32 %v1304, 0.0
        %v1311 = vpack.c.bf16 %v1307, %v1307
        %v1312 = vpack.c.bf16 %v1308, %v1308
        %v1313 = vpack.c.bf16 %v1309, %v1309
        %v1314 = vpack.c.bf16 %v1310, %v1310
        %v1315 = vld [vmem:[#allocation8] sm:$0xff]
        %v1316 = vld [vmem:[#allocation8 + $0x8] sm:$0xff]
        %v1317 = vld [vmem:[#allocation8 + $0x10] sm:$0xff]
        %v1318 = vld [vmem:[#allocation8 + $0x18] sm:$0xff]
        %v1319 = vld [vmem:[#allocation8 + $0x20] sm:$0xff]
        %v1320 = vld [vmem:[#allocation8 + $0x28] sm:$0xff]
        %v1321 = vld [vmem:[#allocation8 + $0x30] sm:$0xff]
        %v1322 = vld [vmem:[#allocation8 + $0x38] sm:$0xff]
        %v1323 = vld [vmem:[#allocation8 + $0x40] sm:$0xff]
        %v1324 = vld [vmem:[#allocation8 + $0x48] sm:$0xff]
        %v1325 = vld [vmem:[#allocation8 + $0x50] sm:$0xff]
        %v1326 = vld [vmem:[#allocation8 + $0x58] sm:$0xff]
        %v1327 = vld [vmem:[#allocation8 + $0x60] sm:$0xff]
        %v1328 = vld [vmem:[#allocation8 + $0x68] sm:$0xff]
        %v1329 = vld [vmem:[#allocation8 + $0x70] sm:$0xff]
        %v1330 = vld [vmem:[#allocation8 + $0x78] sm:$0xff]
        %v1331 = vld [vmem:[#allocation8 + $0x80] sm:$0xff]
        %v1332 = vld [vmem:[#allocation8 + $0x88] sm:$0xff]
        %v1333 = vld [vmem:[#allocation8 + $0x90] sm:$0xff]
        %v1334 = vld [vmem:[#allocation8 + $0x98] sm:$0xff]
        %v1335 = vld [vmem:[#allocation8 + $0xa0] sm:$0xff]
        %v1336 = vld [vmem:[#allocation8 + $0xa8] sm:$0xff]
        %v1337 = vld [vmem:[#allocation8 + $0xb0] sm:$0xff]
        %v1338 = vld [vmem:[#allocation8 + $0xb8] sm:$0xff]
        %v1339 = vld [vmem:[#allocation8 + $0xc0] sm:$0xff]
        %v1340 = vld [vmem:[#allocation8 + $0xc8] sm:$0xff]
        %v1341 = vld [vmem:[#allocation8 + $0xd0] sm:$0xff]
        %v1342 = vld [vmem:[#allocation8 + $0xd8] sm:$0xff]
        %v1343 = vld [vmem:[#allocation8 + $0xe0] sm:$0xff]
        %v1344 = vld [vmem:[#allocation8 + $0xe8] sm:$0xff]
        %v1345 = vld [vmem:[#allocation8 + $0xf0] sm:$0xff]
        %v1346 = vld [vmem:[#allocation8 + $0xf8] sm:$0xff]
        %v1347 = vld [vmem:[#allocation8 + $0x100] sm:$0xff]
        %v1348 = vld [vmem:[#allocation8 + $0x108] sm:$0xff]
        %v1349 = vld [vmem:[#allocation8 + $0x110] sm:$0xff]
        %v1350 = vld [vmem:[#allocation8 + $0x118] sm:$0xff]
        %v1351 = vld [vmem:[#allocation8 + $0x120] sm:$0xff]
        %v1352 = vld [vmem:[#allocation8 + $0x128] sm:$0xff]
        %v1353 = vld [vmem:[#allocation8 + $0x130] sm:$0xff]
        %v1354 = vld [vmem:[#allocation8 + $0x138] sm:$0xff]
        %v1355 = vld [vmem:[#allocation8 + $0x140] sm:$0xff]
        %v1356 = vld [vmem:[#allocation8 + $0x148] sm:$0xff]
        %v1357 = vld [vmem:[#allocation8 + $0x150] sm:$0xff]
        %v1358 = vld [vmem:[#allocation8 + $0x158] sm:$0xff]
        %v1359 = vld [vmem:[#allocation8 + $0x160] sm:$0xff]
        %v1360 = vld [vmem:[#allocation8 + $0x168] sm:$0xff]
        %v1361 = vld [vmem:[#allocation8 + $0x170] sm:$0xff]
        %v1362 = vld [vmem:[#allocation8 + $0x178] sm:$0xff]
        %v1363 = vld [vmem:[#allocation8 + $0x180] sm:$0xff]
        %v1364 = vld [vmem:[#allocation8 + $0x188] sm:$0xff]
        %v1365 = vld [vmem:[#allocation8 + $0x190] sm:$0xff]
        %v1366 = vld [vmem:[#allocation8 + $0x198] sm:$0xff]
        %v1367 = vld [vmem:[#allocation8 + $0x1a0] sm:$0xff]
        %v1368 = vld [vmem:[#allocation8 + $0x1a8] sm:$0xff]
        %v1369 = vld [vmem:[#allocation8 + $0x1b0] sm:$0xff]
        %v1370 = vld [vmem:[#allocation8 + $0x1b8] sm:$0xff]
        %v1371 = vld [vmem:[#allocation8 + $0x1c0] sm:$0xff]
        %v1372 = vld [vmem:[#allocation8 + $0x1c8] sm:$0xff]
        %v1373 = vld [vmem:[#allocation8 + $0x1d0] sm:$0xff]
        %v1374 = vld [vmem:[#allocation8 + $0x1d8] sm:$0xff]
        %v1375 = vld [vmem:[#allocation8 + $0x1e0] sm:$0xff]
        %v1376 = vld [vmem:[#allocation8 + $0x1e8] sm:$0xff]
        %v1377 = vld [vmem:[#allocation8 + $0x1f0] sm:$0xff]
        %v1378 = vld [vmem:[#allocation8 + $0x1f8] sm:$0xff]
        %v1379 = vld [vmem:[#allocation8 + $0x200] sm:$0xff]
        %v1380 = vld [vmem:[#allocation8 + $0x208] sm:$0xff]
        %v1381 = vld [vmem:[#allocation8 + $0x210] sm:$0xff]
        %v1382 = vld [vmem:[#allocation8 + $0x218] sm:$0xff]
        %v1383 = vld [vmem:[#allocation8 + $0x220] sm:$0xff]
        %v1384 = vld [vmem:[#allocation8 + $0x228] sm:$0xff]
        %v1385 = vld [vmem:[#allocation8 + $0x230] sm:$0xff]
        %v1386 = vld [vmem:[#allocation8 + $0x238] sm:$0xff]
        %v1387 = vld [vmem:[#allocation8 + $0x240] sm:$0xff]
        %v1388 = vld [vmem:[#allocation8 + $0x248] sm:$0xff]
        %v1389 = vld [vmem:[#allocation8 + $0x250] sm:$0xff]
        %v1390 = vld [vmem:[#allocation8 + $0x258] sm:$0xff]
        %v1391 = vld [vmem:[#allocation8 + $0x260] sm:$0xff]
        %v1392 = vld [vmem:[#allocation8 + $0x268] sm:$0xff]
        %v1393 = vld [vmem:[#allocation8 + $0x270] sm:$0xff]
        %v1394 = vld [vmem:[#allocation8 + $0x278] sm:$0xff]
        %v1395 = vld [vmem:[#allocation8 + $0x280] sm:$0xff]
        %v1396 = vld [vmem:[#allocation8 + $0x288] sm:$0xff]
        %v1397 = vld [vmem:[#allocation8 + $0x290] sm:$0xff]
        %v1398 = vld [vmem:[#allocation8 + $0x298] sm:$0xff]
        %v1399 = vld [vmem:[#allocation8 + $0x2a0] sm:$0xff]
        %v1400 = vld [vmem:[#allocation8 + $0x2a8] sm:$0xff]
        %v1401 = vld [vmem:[#allocation8 + $0x2b0] sm:$0xff]
        %v1402 = vld [vmem:[#allocation8 + $0x2b8] sm:$0xff]
        %v1403 = vld [vmem:[#allocation8 + $0x2c0] sm:$0xff]
        %v1404 = vld [vmem:[#allocation8 + $0x2c8] sm:$0xff]
        %v1405 = vld [vmem:[#allocation8 + $0x2d0] sm:$0xff]
        %v1406 = vld [vmem:[#allocation8 + $0x2d8] sm:$0xff]
        %v1407 = vld [vmem:[#allocation8 + $0x2e0] sm:$0xff]
        %v1408 = vld [vmem:[#allocation8 + $0x2e8] sm:$0xff]
        %v1409 = vld [vmem:[#allocation8 + $0x2f0] sm:$0xff]
        %v1410 = vld [vmem:[#allocation8 + $0x2f8] sm:$0xff]
        %v1411 = vld [vmem:[#allocation8 + $0x300] sm:$0xff]
        %v1412 = vld [vmem:[#allocation8 + $0x308] sm:$0xff]
        %v1413 = vld [vmem:[#allocation8 + $0x310] sm:$0xff]
        %v1414 = vld [vmem:[#allocation8 + $0x318] sm:$0xff]
        %v1415 = vld [vmem:[#allocation8 + $0x320] sm:$0xff]
        %v1416 = vld [vmem:[#allocation8 + $0x328] sm:$0xff]
        %v1417 = vld [vmem:[#allocation8 + $0x330] sm:$0xff]
        %v1418 = vld [vmem:[#allocation8 + $0x338] sm:$0xff]
        %v1419 = vld [vmem:[#allocation8 + $0x340] sm:$0xff]
        %v1420 = vld [vmem:[#allocation8 + $0x348] sm:$0xff]
        %v1421 = vld [vmem:[#allocation8 + $0x350] sm:$0xff]
        %v1422 = vld [vmem:[#allocation8 + $0x358] sm:$0xff]
        %v1423 = vld [vmem:[#allocation8 + $0x360] sm:$0xff]
        %v1424 = vld [vmem:[#allocation8 + $0x368] sm:$0xff]
        %v1425 = vld [vmem:[#allocation8 + $0x370] sm:$0xff]
        %v1426 = vld [vmem:[#allocation8 + $0x378] sm:$0xff]
        %v1427 = vld [vmem:[#allocation8 + $0x380] sm:$0xff]
        %v1428 = vld [vmem:[#allocation8 + $0x388] sm:$0xff]
        %v1429 = vld [vmem:[#allocation8 + $0x390] sm:$0xff]
        %v1430 = vld [vmem:[#allocation8 + $0x398] sm:$0xff]
        %v1431 = vld [vmem:[#allocation8 + $0x3a0] sm:$0xff]
        %v1432 = vld [vmem:[#allocation8 + $0x3a8] sm:$0xff]
        %v1433 = vld [vmem:[#allocation8 + $0x3b0] sm:$0xff]
        %v1434 = vld [vmem:[#allocation8 + $0x3b8] sm:$0xff]
        %v1435 = vld [vmem:[#allocation8 + $0x3c0] sm:$0xff]
        %v1436 = vld [vmem:[#allocation8 + $0x3c8] sm:$0xff]
        %v1437 = vld [vmem:[#allocation8 + $0x3d0] sm:$0xff]
        %v1438 = vld [vmem:[#allocation8 + $0x3d8] sm:$0xff]
        %v1439 = vld [vmem:[#allocation8 + $0x3e0] sm:$0xff]
        %v1440 = vld [vmem:[#allocation8 + $0x3e8] sm:$0xff]
        %v1441 = vld [vmem:[#allocation8 + $0x3f0] sm:$0xff]
        %v1442 = vld [vmem:[#allocation8 + $0x3f8] sm:$0xff]
        %v1443 = vld [vmem:[#allocation10] sm:$0xf]
        %v1445 = vperm.slane %v1443, 0
        %v1446 = vperm.slane %v1443, 1
        %v1447 = vperm.slane %v1443, 2
        %v1448 = vperm.slane %v1443, 3
        %v1581 = vunpack.c.l.b16 %v1315
        %v1582 = vunpack.c.h.b16 %v1315
        %v1583 = vunpack.c.l.b16 %v1316
        %v1584 = vunpack.c.h.b16 %v1316
        %v1585 = vunpack.c.l.b16 %v1317
        %v1586 = vunpack.c.h.b16 %v1317
        %v1587 = vunpack.c.l.b16 %v1318
        %v1588 = vunpack.c.h.b16 %v1318
        %v1589 = vunpack.c.l.b16 %v1319
        %v1590 = vunpack.c.h.b16 %v1319
        %v1591 = vunpack.c.l.b16 %v1320
        %v1592 = vunpack.c.h.b16 %v1320
        %v1593 = vunpack.c.l.b16 %v1321
        %v1594 = vunpack.c.h.b16 %v1321
        %v1595 = vunpack.c.l.b16 %v1322
        %v1596 = vunpack.c.h.b16 %v1322
        %v1597 = vunpack.c.l.b16 %v1323
        %v1598 = vunpack.c.h.b16 %v1323
        %v1599 = vunpack.c.l.b16 %v1324
        %v1600 = vunpack.c.h.b16 %v1324
        %v1601 = vunpack.c.l.b16 %v1325
        %v1602 = vunpack.c.h.b16 %v1325
        %v1603 = vunpack.c.l.b16 %v1326
        %v1604 = vunpack.c.h.b16 %v1326
        %v1605 = vunpack.c.l.b16 %v1327
        %v1606 = vunpack.c.h.b16 %v1327
        %v1607 = vunpack.c.l.b16 %v1328
        %v1608 = vunpack.c.h.b16 %v1328
        %v1609 = vunpack.c.l.b16 %v1329
        %v1610 = vunpack.c.h.b16 %v1329
        %v1611 = vunpack.c.l.b16 %v1330
        %v1612 = vunpack.c.h.b16 %v1330
        %v1613 = vunpack.c.l.b16 %v1331
        %v1614 = vunpack.c.h.b16 %v1331
        %v1615 = vunpack.c.l.b16 %v1332
        %v1616 = vunpack.c.h.b16 %v1332
        %v1617 = vunpack.c.l.b16 %v1333
        %v1618 = vunpack.c.h.b16 %v1333
        %v1619 = vunpack.c.l.b16 %v1334
        %v1620 = vunpack.c.h.b16 %v1334
        %v1621 = vunpack.c.l.b16 %v1335
        %v1622 = vunpack.c.h.b16 %v1335
        %v1623 = vunpack.c.l.b16 %v1336
        %v1624 = vunpack.c.h.b16 %v1336
        %v1625 = vunpack.c.l.b16 %v1337
        %v1626 = vunpack.c.h.b16 %v1337
        %v1627 = vunpack.c.l.b16 %v1338
        %v1628 = vunpack.c.h.b16 %v1338
        %v1629 = vunpack.c.l.b16 %v1339
        %v1630 = vunpack.c.h.b16 %v1339
        %v1631 = vunpack.c.l.b16 %v1340
        %v1632 = vunpack.c.h.b16 %v1340
        %v1633 = vunpack.c.l.b16 %v1341
        %v1634 = vunpack.c.h.b16 %v1341
        %v1635 = vunpack.c.l.b16 %v1342
        %v1636 = vunpack.c.h.b16 %v1342
        %v1637 = vunpack.c.l.b16 %v1343
        %v1638 = vunpack.c.h.b16 %v1343
        %v1639 = vunpack.c.l.b16 %v1344
        %v1640 = vunpack.c.h.b16 %v1344
        %v1641 = vunpack.c.l.b16 %v1345
        %v1642 = vunpack.c.h.b16 %v1345
        %v1643 = vunpack.c.l.b16 %v1346
        %v1644 = vunpack.c.h.b16 %v1346
        %v1645 = vunpack.c.l.b16 %v1347
        %v1646 = vunpack.c.h.b16 %v1347
        %v1647 = vunpack.c.l.b16 %v1348
        %v1648 = vunpack.c.h.b16 %v1348
        %v1649 = vunpack.c.l.b16 %v1349
        %v1650 = vunpack.c.h.b16 %v1349
        %v1651 = vunpack.c.l.b16 %v1350
        %v1652 = vunpack.c.h.b16 %v1350
        %v1653 = vunpack.c.l.b16 %v1351
        %v1654 = vunpack.c.h.b16 %v1351
        %v1655 = vunpack.c.l.b16 %v1352
        %v1656 = vunpack.c.h.b16 %v1352
        %v1657 = vunpack.c.l.b16 %v1353
        %v1658 = vunpack.c.h.b16 %v1353
        %v1659 = vunpack.c.l.b16 %v1354
        %v1660 = vunpack.c.h.b16 %v1354
        %v1661 = vunpack.c.l.b16 %v1355
        %v1662 = vunpack.c.h.b16 %v1355
        %v1663 = vunpack.c.l.b16 %v1356
        %v1664 = vunpack.c.h.b16 %v1356
        %v1665 = vunpack.c.l.b16 %v1357
        %v1666 = vunpack.c.h.b16 %v1357
        %v1667 = vunpack.c.l.b16 %v1358
        %v1668 = vunpack.c.h.b16 %v1358
        %v1669 = vunpack.c.l.b16 %v1359
        %v1670 = vunpack.c.h.b16 %v1359
        %v1671 = vunpack.c.l.b16 %v1360
        %v1672 = vunpack.c.h.b16 %v1360
        %v1673 = vunpack.c.l.b16 %v1361
        %v1674 = vunpack.c.h.b16 %v1361
        %v1675 = vunpack.c.l.b16 %v1362
        %v1676 = vunpack.c.h.b16 %v1362
        %v1677 = vunpack.c.l.b16 %v1363
        %v1678 = vunpack.c.h.b16 %v1363
        %v1679 = vunpack.c.l.b16 %v1364
        %v1680 = vunpack.c.h.b16 %v1364
        %v1681 = vunpack.c.l.b16 %v1365
        %v1682 = vunpack.c.h.b16 %v1365
        %v1683 = vunpack.c.l.b16 %v1366
        %v1684 = vunpack.c.h.b16 %v1366
        %v1685 = vunpack.c.l.b16 %v1367
        %v1686 = vunpack.c.h.b16 %v1367
        %v1687 = vunpack.c.l.b16 %v1368
        %v1688 = vunpack.c.h.b16 %v1368
        %v1689 = vunpack.c.l.b16 %v1369
        %v1690 = vunpack.c.h.b16 %v1369
        %v1691 = vunpack.c.l.b16 %v1370
        %v1692 = vunpack.c.h.b16 %v1370
        %v1693 = vunpack.c.l.b16 %v1371
        %v1694 = vunpack.c.h.b16 %v1371
        %v1695 = vunpack.c.l.b16 %v1372
        %v1696 = vunpack.c.h.b16 %v1372
        %v1697 = vunpack.c.l.b16 %v1373
        %v1698 = vunpack.c.h.b16 %v1373
        %v1699 = vunpack.c.l.b16 %v1374
        %v1700 = vunpack.c.h.b16 %v1374
        %v1701 = vunpack.c.l.b16 %v1375
        %v1702 = vunpack.c.h.b16 %v1375
        %v1703 = vunpack.c.l.b16 %v1376
        %v1704 = vunpack.c.h.b16 %v1376
        %v1705 = vunpack.c.l.b16 %v1377
        %v1706 = vunpack.c.h.b16 %v1377
        %v1707 = vunpack.c.l.b16 %v1378
        %v1708 = vunpack.c.h.b16 %v1378
        %v1709 = vunpack.c.l.b16 %v1379
        %v1710 = vunpack.c.h.b16 %v1379
        %v1711 = vunpack.c.l.b16 %v1380
        %v1712 = vunpack.c.h.b16 %v1380
        %v1713 = vunpack.c.l.b16 %v1381
        %v1714 = vunpack.c.h.b16 %v1381
        %v1715 = vunpack.c.l.b16 %v1382
        %v1716 = vunpack.c.h.b16 %v1382
        %v1717 = vunpack.c.l.b16 %v1383
        %v1718 = vunpack.c.h.b16 %v1383
        %v1719 = vunpack.c.l.b16 %v1384
        %v1720 = vunpack.c.h.b16 %v1384
        %v1721 = vunpack.c.l.b16 %v1385
        %v1722 = vunpack.c.h.b16 %v1385
        %v1723 = vunpack.c.l.b16 %v1386
        %v1724 = vunpack.c.h.b16 %v1386
        %v1725 = vunpack.c.l.b16 %v1387
        %v1726 = vunpack.c.h.b16 %v1387
        %v1727 = vunpack.c.l.b16 %v1388
        %v1728 = vunpack.c.h.b16 %v1388
        %v1729 = vunpack.c.l.b16 %v1389
        %v1730 = vunpack.c.h.b16 %v1389
        %v1731 = vunpack.c.l.b16 %v1390
        %v1732 = vunpack.c.h.b16 %v1390
        %v1733 = vunpack.c.l.b16 %v1391
        %v1734 = vunpack.c.h.b16 %v1391
        %v1735 = vunpack.c.l.b16 %v1392
        %v1736 = vunpack.c.h.b16 %v1392
        %v1737 = vunpack.c.l.b16 %v1393
        %v1738 = vunpack.c.h.b16 %v1393
        %v1739 = vunpack.c.l.b16 %v1394
        %v1740 = vunpack.c.h.b16 %v1394
        %v1741 = vunpack.c.l.b16 %v1395
        %v1742 = vunpack.c.h.b16 %v1395
        %v1743 = vunpack.c.l.b16 %v1396
        %v1744 = vunpack.c.h.b16 %v1396
        %v1745 = vunpack.c.l.b16 %v1397
        %v1746 = vunpack.c.h.b16 %v1397
        %v1747 = vunpack.c.l.b16 %v1398
        %v1748 = vunpack.c.h.b16 %v1398
        %v1749 = vunpack.c.l.b16 %v1399
        %v1750 = vunpack.c.h.b16 %v1399
        %v1751 = vunpack.c.l.b16 %v1400
        %v1752 = vunpack.c.h.b16 %v1400
        %v1753 = vunpack.c.l.b16 %v1401
        %v1754 = vunpack.c.h.b16 %v1401
        %v1755 = vunpack.c.l.b16 %v1402
        %v1756 = vunpack.c.h.b16 %v1402
        %v1757 = vunpack.c.l.b16 %v1403
        %v1758 = vunpack.c.h.b16 %v1403
        %v1759 = vunpack.c.l.b16 %v1404
        %v1760 = vunpack.c.h.b16 %v1404
        %v1761 = vunpack.c.l.b16 %v1405
        %v1762 = vunpack.c.h.b16 %v1405
        %v1763 = vunpack.c.l.b16 %v1406
        %v1764 = vunpack.c.h.b16 %v1406
        %v1765 = vunpack.c.l.b16 %v1407
        %v1766 = vunpack.c.h.b16 %v1407
        %v1767 = vunpack.c.l.b16 %v1408
        %v1768 = vunpack.c.h.b16 %v1408
        %v1769 = vunpack.c.l.b16 %v1409
        %v1770 = vunpack.c.h.b16 %v1409
        %v1771 = vunpack.c.l.b16 %v1410
        %v1772 = vunpack.c.h.b16 %v1410
        %v1773 = vunpack.c.l.b16 %v1411
        %v1774 = vunpack.c.h.b16 %v1411
        %v1775 = vunpack.c.l.b16 %v1412
        %v1776 = vunpack.c.h.b16 %v1412
        %v1777 = vunpack.c.l.b16 %v1413
        %v1778 = vunpack.c.h.b16 %v1413
        %v1779 = vunpack.c.l.b16 %v1414
        %v1780 = vunpack.c.h.b16 %v1414
        %v1781 = vunpack.c.l.b16 %v1415
        %v1782 = vunpack.c.h.b16 %v1415
        %v1783 = vunpack.c.l.b16 %v1416
        %v1784 = vunpack.c.h.b16 %v1416
        %v1785 = vunpack.c.l.b16 %v1417
        %v1786 = vunpack.c.h.b16 %v1417
        %v1787 = vunpack.c.l.b16 %v1418
        %v1788 = vunpack.c.h.b16 %v1418
        %v1789 = vunpack.c.l.b16 %v1419
        %v1790 = vunpack.c.h.b16 %v1419
        %v1791 = vunpack.c.l.b16 %v1420
        %v1792 = vunpack.c.h.b16 %v1420
        %v1793 = vunpack.c.l.b16 %v1421
        %v1794 = vunpack.c.h.b16 %v1421
        %v1795 = vunpack.c.l.b16 %v1422
        %v1796 = vunpack.c.h.b16 %v1422
        %v1797 = vunpack.c.l.b16 %v1423
        %v1798 = vunpack.c.h.b16 %v1423
        %v1799 = vunpack.c.l.b16 %v1424
        %v1800 = vunpack.c.h.b16 %v1424
        %v1801 = vunpack.c.l.b16 %v1425
        %v1802 = vunpack.c.h.b16 %v1425
        %v1803 = vunpack.c.l.b16 %v1426
        %v1804 = vunpack.c.h.b16 %v1426
        %v1805 = vunpack.c.l.b16 %v1427
        %v1806 = vunpack.c.h.b16 %v1427
        %v1807 = vunpack.c.l.b16 %v1428
        %v1808 = vunpack.c.h.b16 %v1428
        %v1809 = vunpack.c.l.b16 %v1429
        %v1810 = vunpack.c.h.b16 %v1429
        %v1811 = vunpack.c.l.b16 %v1430
        %v1812 = vunpack.c.h.b16 %v1430
        %v1813 = vunpack.c.l.b16 %v1431
        %v1814 = vunpack.c.h.b16 %v1431
        %v1815 = vunpack.c.l.b16 %v1432
        %v1816 = vunpack.c.h.b16 %v1432
        %v1817 = vunpack.c.l.b16 %v1433
        %v1818 = vunpack.c.h.b16 %v1433
        %v1819 = vunpack.c.l.b16 %v1434
        %v1820 = vunpack.c.h.b16 %v1434
        %v1821 = vunpack.c.l.b16 %v1435
        %v1822 = vunpack.c.h.b16 %v1435
        %v1823 = vunpack.c.l.b16 %v1436
        %v1824 = vunpack.c.h.b16 %v1436
        %v1825 = vunpack.c.l.b16 %v1437
        %v1826 = vunpack.c.h.b16 %v1437
        %v1827 = vunpack.c.l.b16 %v1438
        %v1828 = vunpack.c.h.b16 %v1438
        %v1829 = vunpack.c.l.b16 %v1439
        %v1830 = vunpack.c.h.b16 %v1439
        %v1831 = vunpack.c.l.b16 %v1440
        %v1832 = vunpack.c.h.b16 %v1440
        %v1833 = vunpack.c.l.b16 %v1441
        %v1834 = vunpack.c.h.b16 %v1441
        %v1835 = vunpack.c.l.b16 %v1442
        %v1836 = vunpack.c.h.b16 %v1442
        %v1837 = vpack.c.b16 %v1585, %v1581
        %v1838 = vpack.c.b16 %v1586, %v1582
        %v1839 = vpack.c.b16 %v1587, %v1583
        %v1840 = vpack.c.b16 %v1588, %v1584
        %v1841 = vpack.c.b16 %v1593, %v1589
        %v1842 = vpack.c.b16 %v1594, %v1590
        %v1843 = vpack.c.b16 %v1595, %v1591
        %v1844 = vpack.c.b16 %v1596, %v1592
        %v1845 = vpack.c.b16 %v1601, %v1597
        %v1846 = vpack.c.b16 %v1602, %v1598
        %v1847 = vpack.c.b16 %v1603, %v1599
        %v1848 = vpack.c.b16 %v1604, %v1600
        %v1849 = vpack.c.b16 %v1609, %v1605
        %v1850 = vpack.c.b16 %v1610, %v1606
        %v1851 = vpack.c.b16 %v1611, %v1607
        %v1852 = vpack.c.b16 %v1612, %v1608
        %v1853 = vpack.c.b16 %v1617, %v1613
        %v1854 = vpack.c.b16 %v1618, %v1614
        %v1855 = vpack.c.b16 %v1619, %v1615
        %v1856 = vpack.c.b16 %v1620, %v1616
        %v1857 = vpack.c.b16 %v1625, %v1621
        %v1858 = vpack.c.b16 %v1626, %v1622
        %v1859 = vpack.c.b16 %v1627, %v1623
        %v1860 = vpack.c.b16 %v1628, %v1624
        %v1861 = vpack.c.b16 %v1633, %v1629
        %v1862 = vpack.c.b16 %v1634, %v1630
        %v1863 = vpack.c.b16 %v1635, %v1631
        %v1864 = vpack.c.b16 %v1636, %v1632
        %v1865 = vpack.c.b16 %v1641, %v1637
        %v1866 = vpack.c.b16 %v1642, %v1638
        %v1867 = vpack.c.b16 %v1643, %v1639
        %v1868 = vpack.c.b16 %v1644, %v1640
        %v1869 = vpack.c.b16 %v1649, %v1645
        %v1870 = vpack.c.b16 %v1650, %v1646
        %v1871 = vpack.c.b16 %v1651, %v1647
        %v1872 = vpack.c.b16 %v1652, %v1648
        %v1873 = vpack.c.b16 %v1657, %v1653
        %v1874 = vpack.c.b16 %v1658, %v1654
        %v1875 = vpack.c.b16 %v1659, %v1655
        %v1876 = vpack.c.b16 %v1660, %v1656
        %v1877 = vpack.c.b16 %v1665, %v1661
        %v1878 = vpack.c.b16 %v1666, %v1662
        %v1879 = vpack.c.b16 %v1667, %v1663
        %v1880 = vpack.c.b16 %v1668, %v1664
        %v1881 = vpack.c.b16 %v1673, %v1669
        %v1882 = vpack.c.b16 %v1674, %v1670
        %v1883 = vpack.c.b16 %v1675, %v1671
        %v1884 = vpack.c.b16 %v1676, %v1672
        %v1885 = vpack.c.b16 %v1681, %v1677
        %v1886 = vpack.c.b16 %v1682, %v1678
        %v1887 = vpack.c.b16 %v1683, %v1679
        %v1888 = vpack.c.b16 %v1684, %v1680
        %v1889 = vpack.c.b16 %v1689, %v1685
        %v1890 = vpack.c.b16 %v1690, %v1686
        %v1891 = vpack.c.b16 %v1691, %v1687
        %v1892 = vpack.c.b16 %v1692, %v1688
        %v1893 = vpack.c.b16 %v1697, %v1693
        %v1894 = vpack.c.b16 %v1698, %v1694
        %v1895 = vpack.c.b16 %v1699, %v1695
        %v1896 = vpack.c.b16 %v1700, %v1696
        %v1897 = vpack.c.b16 %v1705, %v1701
        %v1898 = vpack.c.b16 %v1706, %v1702
        %v1899 = vpack.c.b16 %v1707, %v1703
        %v1900 = vpack.c.b16 %v1708, %v1704
        %v1901 = vpack.c.b16 %v1713, %v1709
        %v1902 = vpack.c.b16 %v1714, %v1710
        %v1903 = vpack.c.b16 %v1715, %v1711
        %v1904 = vpack.c.b16 %v1716, %v1712
        %v1905 = vpack.c.b16 %v1721, %v1717
        %v1906 = vpack.c.b16 %v1722, %v1718
        %v1907 = vpack.c.b16 %v1723, %v1719
        %v1908 = vpack.c.b16 %v1724, %v1720
        %v1909 = vpack.c.b16 %v1729, %v1725
        %v1910 = vpack.c.b16 %v1730, %v1726
        %v1911 = vpack.c.b16 %v1731, %v1727
        %v1912 = vpack.c.b16 %v1732, %v1728
        %v1913 = vpack.c.b16 %v1737, %v1733
        %v1914 = vpack.c.b16 %v1738, %v1734
        %v1915 = vpack.c.b16 %v1739, %v1735
        %v1916 = vpack.c.b16 %v1740, %v1736
        %v1917 = vpack.c.b16 %v1745, %v1741
        %v1918 = vpack.c.b16 %v1746, %v1742
        %v1919 = vpack.c.b16 %v1747, %v1743
        %v1920 = vpack.c.b16 %v1748, %v1744
        %v1921 = vpack.c.b16 %v1753, %v1749
        %v1922 = vpack.c.b16 %v1754, %v1750
        %v1923 = vpack.c.b16 %v1755, %v1751
        %v1924 = vpack.c.b16 %v1756, %v1752
        %v1925 = vpack.c.b16 %v1761, %v1757
        %v1926 = vpack.c.b16 %v1762, %v1758
        %v1927 = vpack.c.b16 %v1763, %v1759
        %v1928 = vpack.c.b16 %v1764, %v1760
        %v1929 = vpack.c.b16 %v1769, %v1765
        %v1930 = vpack.c.b16 %v1770, %v1766
        %v1931 = vpack.c.b16 %v1771, %v1767
        %v1932 = vpack.c.b16 %v1772, %v1768
        %v1933 = vpack.c.b16 %v1777, %v1773
        %v1934 = vpack.c.b16 %v1778, %v1774
        %v1935 = vpack.c.b16 %v1779, %v1775
        %v1936 = vpack.c.b16 %v1780, %v1776
        %v1937 = vpack.c.b16 %v1785, %v1781
        %v1938 = vpack.c.b16 %v1786, %v1782
        %v1939 = vpack.c.b16 %v1787, %v1783
        %v1940 = vpack.c.b16 %v1788, %v1784
        %v1941 = vpack.c.b16 %v1793, %v1789
        %v1942 = vpack.c.b16 %v1794, %v1790
        %v1943 = vpack.c.b16 %v1795, %v1791
        %v1944 = vpack.c.b16 %v1796, %v1792
        %v1945 = vpack.c.b16 %v1801, %v1797
        %v1946 = vpack.c.b16 %v1802, %v1798
        %v1947 = vpack.c.b16 %v1803, %v1799
        %v1948 = vpack.c.b16 %v1804, %v1800
        %v1949 = vpack.c.b16 %v1809, %v1805
        %v1950 = vpack.c.b16 %v1810, %v1806
        %v1951 = vpack.c.b16 %v1811, %v1807
        %v1952 = vpack.c.b16 %v1812, %v1808
        %v1953 = vpack.c.b16 %v1817, %v1813
        %v1954 = vpack.c.b16 %v1818, %v1814
        %v1955 = vpack.c.b16 %v1819, %v1815
        %v1956 = vpack.c.b16 %v1820, %v1816
        %v1957 = vpack.c.b16 %v1825, %v1821
        %v1958 = vpack.c.b16 %v1826, %v1822
        %v1959 = vpack.c.b16 %v1827, %v1823
        %v1960 = vpack.c.b16 %v1828, %v1824
        %v1961 = vpack.c.b16 %v1833, %v1829
        %v1962 = vpack.c.b16 %v1834, %v1830
        %v1963 = vpack.c.b16 %v1835, %v1831
        %v1964 = vpack.c.b16 %v1836, %v1832
        %2093 = vmatpush.bf16.msra.mxu0 %v1865
        %2094 = vmatpush.bf16.msra.mxu0 %v1861
        %2095 = vmatpush.bf16.msra.mxu0 %v1857
        %2096 = vmatpush.bf16.msra.mxu0 %v1853
        %2097 = vmatpush.bf16.msra.mxu0 %v1849
        %2098 = vmatpush.bf16.msra.mxu0 %v1845
        %2099 = vmatpush.bf16.msra.mxu0 %v1841
        %2100 = vmatpush.bf16.msra.mxu0 %v1837
        %2101 = vmatmul.bf16.gmra.mxu0 %v1311
        %v2102 = vpop.f32.mrf.mxu0
        %v2103 = vadd.f32 %v1445, %v2102
        %v2104 = vpop.f32.mrf.mxu0
        %2105 = vdwg.mxu0
        %2106 = vmatpush.bf16.msra.mxu0 %v1897
        %2107 = vmatpush.bf16.msra.mxu0 %v1893
        %2108 = vmatpush.bf16.msra.mxu0 %v1889
        %2109 = vmatpush.bf16.msra.mxu0 %v1885
        %2110 = vmatpush.bf16.msra.mxu0 %v1881
        %2111 = vmatpush.bf16.msra.mxu0 %v1877
        %2112 = vmatpush.bf16.msra.mxu0 %v1873
        %2113 = vmatpush.bf16.msra.mxu0 %v1869
        %2114 = vmatmul.bf16.gmra.mxu0 %v1312
        %v2115 = vpop.f32.mrf.mxu0
        %v2116 = vadd.f32 %v2103, %v2115
        %v2117 = vpop.f32.mrf.mxu0
        %2118 = vdwg.mxu0
        %2119 = vmatpush.bf16.msra.mxu0 %v1929
        %2120 = vmatpush.bf16.msra.mxu0 %v1925
        %2121 = vmatpush.bf16.msra.mxu0 %v1921
        %2122 = vmatpush.bf16.msra.mxu0 %v1917
        %2123 = vmatpush.bf16.msra.mxu0 %v1913
        %2124 = vmatpush.bf16.msra.mxu0 %v1909
        %2125 = vmatpush.bf16.msra.mxu0 %v1905
        %2126 = vmatpush.bf16.msra.mxu0 %v1901
        %2127 = vmatmul.bf16.gmra.mxu0 %v1313
        %v2128 = vpop.f32.mrf.mxu0
        %v2129 = vadd.f32 %v2116, %v2128
        %v2130 = vpop.f32.mrf.mxu0
        %2131 = vdwg.mxu0
        %2132 = vmatpush.bf16.msra.mxu0 %v1961
        %2133 = vmatpush.bf16.msra.mxu0 %v1957
        %2134 = vmatpush.bf16.msra.mxu0 %v1953
        %2135 = vmatpush.bf16.msra.mxu0 %v1949
        %2136 = vmatpush.bf16.msra.mxu0 %v1945
        %2137 = vmatpush.bf16.msra.mxu0 %v1941
        %2138 = vmatpush.bf16.msra.mxu0 %v1937
        %2139 = vmatpush.bf16.msra.mxu0 %v1933
        %2140 = vmatmul.bf16.gmra.mxu0 %v1314
        %v2141 = vpop.f32.mrf.mxu0
        %v2142 = vadd.f32 %v2129, %v2141
        %v2143 = vpop.f32.mrf.mxu0
        %2144 = vdwg.mxu0
        %2145 = vmatpush.bf16.msra.mxu0 %v1866
        %2146 = vmatpush.bf16.msra.mxu0 %v1862
        %2147 = vmatpush.bf16.msra.mxu0 %v1858
        %2148 = vmatpush.bf16.msra.mxu0 %v1854
        %2149 = vmatpush.bf16.msra.mxu0 %v1850
        %2150 = vmatpush.bf16.msra.mxu0 %v1846
        %2151 = vmatpush.bf16.msra.mxu0 %v1842
        %2152 = vmatpush.bf16.msra.mxu0 %v1838
        %2153 = vmatmul.bf16.gmra.mxu0 %v1311
        %v2154 = vpop.f32.mrf.mxu0
        %v2155 = vadd.f32 %v1446, %v2154
        %v2156 = vpop.f32.mrf.mxu0
        %2157 = vdwg.mxu0
        %2158 = vmatpush.bf16.msra.mxu0 %v1898
        %2159 = vmatpush.bf16.msra.mxu0 %v1894
        %2160 = vmatpush.bf16.msra.mxu0 %v1890
        %2161 = vmatpush.bf16.msra.mxu0 %v1886
        %2162 = vmatpush.bf16.msra.mxu0 %v1882
        %2163 = vmatpush.bf16.msra.mxu0 %v1878
        %2164 = vmatpush.bf16.msra.mxu0 %v1874
        %2165 = vmatpush.bf16.msra.mxu0 %v1870
        %2166 = vmatmul.bf16.gmra.mxu0 %v1312
        %v2167 = vpop.f32.mrf.mxu0
        %v2168 = vadd.f32 %v2155, %v2167
        %v2169 = vpop.f32.mrf.mxu0
        %2170 = vdwg.mxu0
        %2171 = vmatpush.bf16.msra.mxu0 %v1930
        %2172 = vmatpush.bf16.msra.mxu0 %v1926
        %2173 = vmatpush.bf16.msra.mxu0 %v1922
        %2174 = vmatpush.bf16.msra.mxu0 %v1918
        %2175 = vmatpush.bf16.msra.mxu0 %v1914
        %2176 = vmatpush.bf16.msra.mxu0 %v1910
        %2177 = vmatpush.bf16.msra.mxu0 %v1906
        %2178 = vmatpush.bf16.msra.mxu0 %v1902
        %2179 = vmatmul.bf16.gmra.mxu0 %v1313
        %v2180 = vpop.f32.mrf.mxu0
        %v2181 = vadd.f32 %v2168, %v2180
        %v2182 = vpop.f32.mrf.mxu0
        %2183 = vdwg.mxu0
        %2184 = vmatpush.bf16.msra.mxu0 %v1962
        %2185 = vmatpush.bf16.msra.mxu0 %v1958
        %2186 = vmatpush.bf16.msra.mxu0 %v1954
        %2187 = vmatpush.bf16.msra.mxu0 %v1950
        %2188 = vmatpush.bf16.msra.mxu0 %v1946
        %2189 = vmatpush.bf16.msra.mxu0 %v1942
        %2190 = vmatpush.bf16.msra.mxu0 %v1938
        %2191 = vmatpush.bf16.msra.mxu0 %v1934
        %2192 = vmatmul.bf16.gmra.mxu0 %v1314
        %v2193 = vpop.f32.mrf.mxu0
        %v2194 = vadd.f32 %v2181, %v2193
        %v2195 = vpop.f32.mrf.mxu0
        %2196 = vdwg.mxu0
        %2197 = vmatpush.bf16.msra.mxu0 %v1867
        %2198 = vmatpush.bf16.msra.mxu0 %v1863
        %2199 = vmatpush.bf16.msra.mxu0 %v1859
        %2200 = vmatpush.bf16.msra.mxu0 %v1855
        %2201 = vmatpush.bf16.msra.mxu0 %v1851
        %2202 = vmatpush.bf16.msra.mxu0 %v1847
        %2203 = vmatpush.bf16.msra.mxu0 %v1843
        %2204 = vmatpush.bf16.msra.mxu0 %v1839
        %2205 = vmatmul.bf16.gmra.mxu0 %v1311
        %v2206 = vpop.f32.mrf.mxu0
        %v2207 = vadd.f32 %v1447, %v2206
        %v2208 = vpop.f32.mrf.mxu0
        %2209 = vdwg.mxu0
        %2210 = vmatpush.bf16.msra.mxu0 %v1899
        %2211 = vmatpush.bf16.msra.mxu0 %v1895
        %2212 = vmatpush.bf16.msra.mxu0 %v1891
        %2213 = vmatpush.bf16.msra.mxu0 %v1887
        %2214 = vmatpush.bf16.msra.mxu0 %v1883
        %2215 = vmatpush.bf16.msra.mxu0 %v1879
        %2216 = vmatpush.bf16.msra.mxu0 %v1875
        %2217 = vmatpush.bf16.msra.mxu0 %v1871
        %2218 = vmatmul.bf16.gmra.mxu0 %v1312
        %v2219 = vpop.f32.mrf.mxu0
        %v2220 = vadd.f32 %v2207, %v2219
        %v2221 = vpop.f32.mrf.mxu0
        %2222 = vdwg.mxu0
        %2223 = vmatpush.bf16.msra.mxu0 %v1931
        %2224 = vmatpush.bf16.msra.mxu0 %v1927
        %2225 = vmatpush.bf16.msra.mxu0 %v1923
        %2226 = vmatpush.bf16.msra.mxu0 %v1919
        %2227 = vmatpush.bf16.msra.mxu0 %v1915
        %2228 = vmatpush.bf16.msra.mxu0 %v1911
        %2229 = vmatpush.bf16.msra.mxu0 %v1907
        %2230 = vmatpush.bf16.msra.mxu0 %v1903
        %2231 = vmatmul.bf16.gmra.mxu0 %v1313
        %v2232 = vpop.f32.mrf.mxu0
        %v2233 = vadd.f32 %v2220, %v2232
        %v2234 = vpop.f32.mrf.mxu0
        %2235 = vdwg.mxu0
        %2236 = vmatpush.bf16.msra.mxu0 %v1963
        %2237 = vmatpush.bf16.msra.mxu0 %v1959
        %2238 = vmatpush.bf16.msra.mxu0 %v1955
        %2239 = vmatpush.bf16.msra.mxu0 %v1951
        %2240 = vmatpush.bf16.msra.mxu0 %v1947
        %2241 = vmatpush.bf16.msra.mxu0 %v1943
        %2242 = vmatpush.bf16.msra.mxu0 %v1939
        %2243 = vmatpush.bf16.msra.mxu0 %v1935
        %2244 = vmatmul.bf16.gmra.mxu0 %v1314
        %v2245 = vpop.f32.mrf.mxu0
        %v2246 = vadd.f32 %v2233, %v2245
        %v2247 = vpop.f32.mrf.mxu0
        %2248 = vdwg.mxu0
        %2249 = vmatpush.bf16.msra.mxu0 %v1868
        %2250 = vmatpush.bf16.msra.mxu0 %v1864
        %2251 = vmatpush.bf16.msra.mxu0 %v1860
        %2252 = vmatpush.bf16.msra.mxu0 %v1856
        %2253 = vmatpush.bf16.msra.mxu0 %v1852
        %2254 = vmatpush.bf16.msra.mxu0 %v1848
        %2255 = vmatpush.bf16.msra.mxu0 %v1844
        %2256 = vmatpush.bf16.msra.mxu0 %v1840
        %2257 = vmatmul.bf16.gmra.mxu0 %v1311
        %v2258 = vpop.f32.mrf.mxu0
        %v2259 = vadd.f32 %v1448, %v2258
        %v2260 = vpop.f32.mrf.mxu0
        %2261 = vdwg.mxu0
        %2262 = vmatpush.bf16.msra.mxu0 %v1900
        %2263 = vmatpush.bf16.msra.mxu0 %v1896
        %2264 = vmatpush.bf16.msra.mxu0 %v1892
        %2265 = vmatpush.bf16.msra.mxu0 %v1888
        %2266 = vmatpush.bf16.msra.mxu0 %v1884
        %2267 = vmatpush.bf16.msra.mxu0 %v1880
        %2268 = vmatpush.bf16.msra.mxu0 %v1876
        %2269 = vmatpush.bf16.msra.mxu0 %v1872
        %2270 = vmatmul.bf16.gmra.mxu0 %v1312
        %v2271 = vpop.f32.mrf.mxu0
        %v2272 = vadd.f32 %v2259, %v2271
        %v2273 = vpop.f32.mrf.mxu0
        %2274 = vdwg.mxu0
        %2275 = vmatpush.bf16.msra.mxu0 %v1932
        %2276 = vmatpush.bf16.msra.mxu0 %v1928
        %2277 = vmatpush.bf16.msra.mxu0 %v1924
        %2278 = vmatpush.bf16.msra.mxu0 %v1920
        %2279 = vmatpush.bf16.msra.mxu0 %v1916
        %2280 = vmatpush.bf16.msra.mxu0 %v1912
        %2281 = vmatpush.bf16.msra.mxu0 %v1908
        %2282 = vmatpush.bf16.msra.mxu0 %v1904
        %2283 = vmatmul.bf16.gmra.mxu0 %v1313
        %v2284 = vpop.f32.mrf.mxu0
        %v2285 = vadd.f32 %v2272, %v2284
        %v2286 = vpop.f32.mrf.mxu0
        %2287 = vdwg.mxu0
        %2288 = vmatpush.bf16.msra.mxu0 %v1964
        %2289 = vmatpush.bf16.msra.mxu0 %v1960
        %2290 = vmatpush.bf16.msra.mxu0 %v1956
        %2291 = vmatpush.bf16.msra.mxu0 %v1952
        %2292 = vmatpush.bf16.msra.mxu0 %v1948
        %2293 = vmatpush.bf16.msra.mxu0 %v1944
        %2294 = vmatpush.bf16.msra.mxu0 %v1940
        %2295 = vmatpush.bf16.msra.mxu0 %v1936
        %2296 = vmatmul.bf16.gmra.mxu0 %v1314
        %v2297 = vpop.f32.mrf.mxu0
        %v2298 = vadd.f32 %v2285, %v2297
        %v2299 = vpop.f32.mrf.mxu0
        %2300 = vdwg.mxu0
        %2301 = vst [vmem:[%s304] sm:$0xff] %v2142
        %2302 = vst [vmem:[%s304 + $0x8] sm:$0xff] %v2194
        %2303 = vst [vmem:[%s304 + $0x10] sm:$0xff] %v2246
        %2304 = vst [vmem:[%s304 + $0x18] sm:$0xff] %v2298
        %s2305 = sand.u32 %s142, 1
        %s2306 = scalar_lea.sflag [#allocation4], %s2305
        %s2307 = sand.u32 %s142, 1
        %s2308 = smul.addr %s2307, 32
        %s2309 = scalar_lea.vmem [#allocation11], %s2308
        // Predicated region
        $region61: #{tpu_custom_call.1} parent=39 // pred_check
          %p2310 = pneg %p152
        $region62: #{tpu_custom_call.1} parent=39 // pred_check_branch
          %2312 = sbr.rel (%p2310) target = $region64
        $region63: #{tpu_custom_call.1} parent=39 // pred_region
          %2314 = vsyncadd %s2306, 0
          %s2315 = smul.addr %s24, 4
          %s2316 = smul.addr %s2315, 8
          %s2317 = scalar_lea.hbm %s5, %s2316
          %s2319 = sshll.u32 %s2309, 4
          %s2320 = int_to_ptr.vmem [resolvable:$true] %s2319
          %s2321 = sshll.u32 %s2317, 4
          %s2322 = int_to_ptr.hbm [resolvable:$true] %s2321
          %2324 = dma.vmem_to_hbm [thread:$0]  %s2320, 512, %s2322, %s2306
        $region64: #{tpu_custom_call.1} parent=39 // pred_fallthru
          _
      $region40: #{tpu_custom_call.1} parent=5 // pred_fallthru
        _
      %p2325 = scmp.le.s32.totalorder 2, %s19
      // Predicated region
      $region65: #{tpu_custom_call.1} parent=5 // pred_check
        %p2326 = pneg %p2325
      $region66: #{tpu_custom_call.1} parent=5 // pred_check_branch
        %2328 = sbr.rel (%p2326) target = $region68
      $region67: #{tpu_custom_call.1} parent=5 // pred_region
        %s2329 = ssub.s32 %s19, 2
        // Predicated region
        $region69: #{tpu_custom_call.1} parent=67 // pred_check
          %p2330 = pneg %p158
        $region70: #{tpu_custom_call.1} parent=67 // pred_check_branch
          %2332 = sbr.rel (%p2330) target = $region72
        $region71: #{tpu_custom_call.1} parent=67 // pred_region
          %s2333 = sand.u32 %s143, 1
          %s2334 = scalar_lea.sflag [#allocation4], %s2333
          %s2335 = sand.u32 %s143, 1
          %s2336 = smul.addr %s2335, 32
          %s2337 = scalar_lea.vmem [#allocation11], %s2336
          %2339 = dma.done %s2334, 512
        $region72: #{tpu_custom_call.1} parent=67 // pred_fallthru
          _
      $region68: #{tpu_custom_call.1} parent=5 // pred_fallthru
        _
    $region6: #{tpu_custom_call.1} parent=1 // loop_footer
      %s23 = sadd.s32 1, %s19
    $region7: #{tpu_custom_call.1} parent=1 // loop_footer_branch
      %18 = sbr.rel target = $region3
    $region8: #{tpu_custom_call.1} parent=1 // loop_exit
      _
    %2340 = vsyncpa [#allocation3], 1
    %s2341 = scalar_lea.sflag [#allocation3], 1
    %2342 = vsyncpa %s2341, 1
    %2343 = vsyncpa [#allocation6], 1
    %2344 = vsyncpa [#allocation9], 1
    %2345 = vsyncpa [#allocation4], 1
    %s2346 = scalar_lea.sflag [#allocation4], 1
    %2347 = vsyncpa %s2346, 1

// kernel: tpu_custom_call.1
$region0: #{tpu_custom_call.1}
  #allocation0 [shape = 'u32[]', space=smem, size = 0x4, offset = 0x4, fixed_abs, tag = 'smem constant byte address 0x4 - core index']
  #allocation1 [shape = 'u32[72,128]{1,0:T(1,128)}', space=vmem, size = 0x9000, scoped, tag = 'internal scratch']
  %s0 = inlined_call_operand.hbm [shape: bf16[16,512], index: 0, kind: input, shape index: {}]
  %s1 = inlined_call_operand.hbm [shape: bf16[512,512], index: 1, kind: input, shape index: {}]
  %s2 = inlined_call_operand.hbm [shape: f32[1,512], index: 2, kind: input, shape index: {}]
  %s3 = inlined_call_operand.hbm [shape: bf16[512,512], index: 3, kind: input, shape index: {}]
  %s4 = inlined_call_operand.hbm [shape: f32[1,512], index: 4, kind: input, shape index: {}]
  %s5 = inlined_call_operand.hbm [shape: f32[16,512], index: 5, kind: output, shape index: {}]
  %s6 = sld [smem:[#allocation0]]
  $region73: #{tpu_custom_call.1} parent=0
    _
  %s8 = ssub.s32 1, %s6
  %s9 = scalar_select 0, %s8, %s6
  $region1: #{tpu_custom_call.1} parent=0
    #allocation2 [shape = 'u8[16384]{0}', space=vmem, size = 0x4000, scoped, tag = 'input window, operand 0']
    #allocation3 [shape = 's32[2]{0}', space=sflag, size = 0x8, scoped, tag = 'scoped memory for tpu_custom_call.1']
    #allocation4 [shape = 's32[2]{0}', space=sflag, size = 0x8, scoped, tag = 'scoped memory for tpu_custom_call.1']
    #allocation5 [shape = 'u8[524288]{0}', space=vmem, size = 0x80000, scoped, tag = 'input window, operand 1, single buffered']
    #allocation6 [shape = 's32[1]{0}', space=sflag, size = 0x4, scoped, tag = 'scoped memory for tpu_custom_call.1']
    #allocation7 [shape = 'u8[2048]{0}', space=vmem, size = 0x800, scoped, tag = 'input window, operand 2, single buffered']
    #allocation8 [shape = 'u8[524288]{0}', space=vmem, size = 0x80000, scoped, tag = 'input window, operand 3, single buffered']
    #allocation9 [shape = 's32[1]{0}', space=sflag, size = 0x4, scoped, tag = 'scoped memory for tpu_custom_call.1']
    #allocation10 [shape = 'u8[2048]{0}', space=vmem, size = 0x800, scoped, tag = 'input window, operand 4, single buffered']
    #allocation11 [shape = 'u8[32768]{0}', space=vmem, size = 0x8000, scoped, tag = 'output window, operand 0']
    %10 = vsyncpa [#allocation3], 0
    %s11 = scalar_lea.sflag [#allocation3], 1
    %12 = vsyncpa %s11, 0
    %13 = vsyncpa [#allocation6], 0
    %14 = vsyncpa [#allocation9], 0
    %15 = vsyncpa [#allocation4], 0
    %s16 = scalar_lea.sflag [#allocation4], 1
    %17 = vsyncpa %s16, 0
    loop: start=0, step=1, limit=4
    $region2: #{tpu_custom_call.1} parent=1 // loop_pre_header
      _
    $region3: #{tpu_custom_call.1} parent=1 // loop_header
      %s19 = sphi 0, %s23
      %p20 = scmp.ge.s32.totalorder %s19, 4
      %s29 = sphi 0, %s31
      %s32 = sphi 0, %s29
      %s33 = sphi 0, %s32
      %s49 = sphi 0, %s33
      %s53 = sphi 0, %s53
      %s55 = sphi 0, %s53
      %s56 = sphi 0, %s55
      %s70 = sphi 0, %s56
      %s74 = sphi 0, %s74
      %s76 = sphi 0, %s74
      %s77 = sphi 0, %s76
      %s91 = sphi 0, %s77
      %s95 = sphi 0, %s95
      %s97 = sphi 0, %s95
      %s98 = sphi 0, %s97
      %s112 = sphi 0, %s98
      %s116 = sphi 0, %s116
      %s118 = sphi 0, %s116
      %s119 = sphi 0, %s118
      %s133 = sphi 0, %s119
      %s139 = sphi 0, %s141
      %s142 = sphi 0, %s139
      %s143 = sphi 0, %s142
      %s159 = sphi 0, %s143
    $region4: #{tpu_custom_call.1} parent=1 // loop_header_branch
      %22 = sbr.rel (%p20) target = $region8
    $region5: #{tpu_custom_call.1} parent=1 // loop_body
      %s24 = ssub.s32 %s19, 1
      %s25 = ssub.s32 %s19, 2
      %s26 = sadd.s32 %s19, 1
      %s27 = ssub.s32 %s19, %s26
      %p28 = scmp.eq.s32.totalorder %s27, 0
      %s30 = sadd.s32 %s29, 1
      %s31 = scalar_select %p28, %s29, %s30
      %p34 = pneg %p28
      %p35 = scmp.eq.s32.totalorder %s19, 1
      %p36 = por %p34, %p35
      %p37 = scmp.ne.s32.totalorder %s29, %s32
      %p38 = scmp.eq.s32.totalorder %s19, 0
      %p39 = por %p37, %p38
      %p40 = scmp.ne.s32.totalorder %s29, %s32
      %p41 = scmp.eq.s32.totalorder %s24, 1
      %p42 = por %p40, %p41
      %p43 = scmp.ne.s32.totalorder %s32, %s33
      %p44 = scmp.eq.s32.totalorder %s24, 0
      %p45 = por %p43, %p44
      %p46 = scmp.ne.s32.totalorder %s32, %s33
      %p47 = scmp.eq.s32.totalorder %s25, 1
      %p48 = por %p46, %p47
      %p50 = scmp.ne.s32.totalorder %s33, %s49
      %p51 = scmp.eq.s32.totalorder %s25, 0
      %p52 = por %p50, %p51
      %s54 = sadd.s32 %s53, 1
      %p57 = scmp.eq.s32.totalorder %s19, 1
      %p58 = scmp.ne.s32.totalorder %s53, %s55
      %p59 = scmp.eq.s32.totalorder %s19, 0
      %p60 = por %p58, %p59
      %p61 = scmp.ne.s32.totalorder %s53, %s55
      %p62 = scmp.eq.s32.totalorder %s24, 1
      %p63 = por %p61, %p62
      %p64 = scmp.ne.s32.totalorder %s55, %s56
      %p65 = scmp.eq.s32.totalorder %s24, 0
      %p66 = por %p64, %p65
      %p67 = scmp.ne.s32.totalorder %s55, %s56
      %p68 = scmp.eq.s32.totalorder %s25, 1
      %p69 = por %p67, %p68
      %p71 = scmp.ne.s32.totalorder %s56, %s70
      %p72 = scmp.eq.s32.totalorder %s25, 0
      %p73 = por %p71, %p72
      %s75 = sadd.s32 %s74, 1
      %p78 = scmp.eq.s32.totalorder %s19, 1
      %p79 = scmp.ne.s32.totalorder %s74, %s76
      %p80 = scmp.eq.s32.totalorder %s19, 0
      %p81 = por %p79, %p80
      %p82 = scmp.ne.s32.totalorder %s74, %s76
      %p83 = scmp.eq.s32.totalorder %s24, 1
      %p84 = por %p82, %p83
      %p85 = scmp.ne.s32.totalorder %s76, %s77
      %p86 = scmp.eq.s32.totalorder %s24, 0
      %p87 = por %p85, %p86
      %p88 = scmp.ne.s32.totalorder %s76, %s77
      %p89 = scmp.eq.s32.totalorder %s25, 1
      %p90 = por %p88, %p89
      %p92 = scmp.ne.s32.totalorder %s77, %s91
      %p93 = scmp.eq.s32.totalorder %s25, 0
      %p94 = por %p92, %p93
      %s96 = sadd.s32 %s95, 1
      %p99 = scmp.eq.s32.totalorder %s19, 1
      %p100 = scmp.ne.s32.totalorder %s95, %s97
      %p101 = scmp.eq.s32.totalorder %s19, 0
      %p102 = por %p100, %p101
      %p103 = scmp.ne.s32.totalorder %s95, %s97
      %p104 = scmp.eq.s32.totalorder %s24, 1
      %p105 = por %p103, %p104
      %p106 = scmp.ne.s32.totalorder %s97, %s98
      %p107 = scmp.eq.s32.totalorder %s24, 0
      %p108 = por %p106, %p107
      %p109 = scmp.ne.s32.totalorder %s97, %s98
      %p110 = scmp.eq.s32.totalorder %s25, 1
      %p111 = por %p109, %p110
      %p113 = scmp.ne.s32.totalorder %s98, %s112
      %p114 = scmp.eq.s32.totalorder %s25, 0
      %p115 = por %p113, %p114
      %s117 = sadd.s32 %s116, 1
      %p120 = scmp.eq.s32.totalorder %s19, 1
      %p121 = scmp.ne.s32.totalorder %s116, %s118
      %p122 = scmp.eq.s32.totalorder %s19, 0
      %p123 = por %p121, %p122
      %p124 = scmp.ne.s32.totalorder %s116, %s118
      %p125 = scmp.eq.s32.totalorder %s24, 1
      %p126 = por %p124, %p125
      %p127 = scmp.ne.s32.totalorder %s118, %s119
      %p128 = scmp.eq.s32.totalorder %s24, 0
      %p129 = por %p127, %p128
      %p130 = scmp.ne.s32.totalorder %s118, %s119
      %p131 = scmp.eq.s32.totalorder %s25, 1
      %p132 = por %p130, %p131
      %p134 = scmp.ne.s32.totalorder %s119, %s133
      %p135 = scmp.eq.s32.totalorder %s25, 0
      %p136 = por %p134, %p135
      %s137 = ssub.s32 %s19, %s26
      %p138 = scmp.eq.s32.totalorder %s137, 0
      %s140 = sadd.s32 %s139, 1
      %s141 = scalar_select %p138, %s139, %s140
      %p144 = pneg %p138
      %p145 = scmp.eq.s32.totalorder %s19, 1
      %p146 = por %p144, %p145
      %p147 = scmp.ne.s32.totalorder %s139, %s142
      %p148 = scmp.eq.s32.totalorder %s19, 0
      %p149 = por %p147, %p148
      %p150 = scmp.ne.s32.totalorder %s139, %s142
      %p151 = scmp.eq.s32.totalorder %s24, 1
      %p152 = por %p150, %p151
      %p153 = scmp.ne.s32.totalorder %s142, %s143
      %p154 = scmp.eq.s32.totalorder %s24, 0
      %p155 = por %p153, %p154
      %p156 = scmp.ne.s32.totalorder %s142, %s143
      %p157 = scmp.eq.s32.totalorder %s25, 1
      %p158 = por %p156, %p157
      %p160 = scmp.ne.s32.totalorder %s143, %s159
      %p161 = scmp.eq.s32.totalorder %s25, 0
      %p162 = por %p160, %p161
      %p163 = scmp.le.s32.totalorder 1, %s19
      %p164 = scmp.lt.s32.totalorder %s19, 3
      %p165 = pnand %p163, %p164
      %p166 = pneg %p165
      // Predicated region
      $region9: #{tpu_custom_call.1} parent=5 // pred_check
        _
      $region10: #{tpu_custom_call.1} parent=5 // pred_check_branch
        %168 = sbr.rel (%p165) target = $region12
      $region11: #{tpu_custom_call.1} parent=5 // pred_region
        %s169 = ssub.s32 %s19, 1
        // Predicated region
        $region13: #{tpu_custom_call.1} parent=11 // pred_check
          %p170 = pneg %p66
        $region14: #{tpu_custom_call.1} parent=11 // pred_check_branch
          %172 = sbr.rel (%p170) target = $region16
        $region15: #{tpu_custom_call.1} parent=11 // pred_region
          %174 = vsyncadd [#allocation6], 0
          %s175 = sshll.u32 %s1, 4
          %s176 = int_to_ptr.hbm [resolvable:$true] %s175
          %s177 = sshll.u32 [#allocation5], 4
          %s178 = int_to_ptr.vmem [resolvable:$true] %s177
          %183 = dma.hbm_to_vmem [thread:$0]  %s176, 16384, %s178, [#allocation6], 256, 256, 16
        $region16: #{tpu_custom_call.1} parent=11 // pred_fallthru
          _
        // Predicated region
        $region17: #{tpu_custom_call.1} parent=11 // pred_check
          %p184 = pneg %p87
        $region18: #{tpu_custom_call.1} parent=11 // pred_check_branch
          %186 = sbr.rel (%p184) target = $region20
        $region19: #{tpu_custom_call.1} parent=11 // pred_region
          %188 = vsyncadd [#allocation6], 0
          %s190 = sshll.u32 %s2, 4
          %s191 = int_to_ptr.hbm [resolvable:$true] %s190
          %s192 = sshll.u32 [#allocation7], 4
          %s193 = int_to_ptr.vmem [resolvable:$true] %s192
          %195 = dma.hbm_to_vmem [thread:$0]  %s191, 64, %s193, [#allocation6]
        $region20: #{tpu_custom_call.1} parent=11 // pred_fallthru
          _
        // Predicated region
        $region21: #{tpu_custom_call.1} parent=11 // pred_check
          %p196 = pneg %p108
        $region22: #{tpu_custom_call.1} parent=11 // pred_check_branch
          %198 = sbr.rel (%p196) target = $region24
        $region23: #{tpu_custom_call.1} parent=11 // pred_region
          %200 = vsyncadd [#allocation9], 0
          %s201 = sshll.u32 %s3, 4
          %s202 = int_to_ptr.hbm [resolvable:$true] %s201
          %s203 = sshll.u32 [#allocation8], 4
          %s204 = int_to_ptr.vmem [resolvable:$true] %s203
          %209 = dma.hbm_to_vmem [thread:$0]  %s202, 16384, %s204, [#allocation9], 256, 256, 16
        $region24: #{tpu_custom_call.1} parent=11 // pred_fallthru
          _
        // Predicated region
        $region25: #{tpu_custom_call.1} parent=11 // pred_check
          %p210 = pneg %p129
        $region26: #{tpu_custom_call.1} parent=11 // pred_check_branch
          %212 = sbr.rel (%p210) target = $region28
        $region27: #{tpu_custom_call.1} parent=11 // pred_region
          %214 = vsyncadd [#allocation9], 0
          %s216 = sshll.u32 %s4, 4
          %s217 = int_to_ptr.hbm [resolvable:$true] %s216
          %s218 = sshll.u32 [#allocation10], 4
          %s219 = int_to_ptr.vmem [resolvable:$true] %s218
          %221 = dma.hbm_to_vmem [thread:$0]  %s217, 64, %s219, [#allocation9]
        $region28: #{tpu_custom_call.1} parent=11 // pred_fallthru
          _
      $region12: #{tpu_custom_call.1} parent=5 // pred_fallthru
        _
      %p222 = scmp.lt.s32.totalorder %s19, 2
      // Predicated region
      $region29: #{tpu_custom_call.1} parent=5 // pred_check
        %p223 = pneg %p222
      $region30: #{tpu_custom_call.1} parent=5 // pred_check_branch
        %225 = sbr.rel (%p223) target = $region32
      $region31: #{tpu_custom_call.1} parent=5 // pred_region
        // Predicated region
        $region33: #{tpu_custom_call.1} parent=31 // pred_check
          %p226 = pneg %p39
        $region34: #{tpu_custom_call.1} parent=31 // pred_check_branch
          %228 = sbr.rel (%p226) target = $region36
        $region35: #{tpu_custom_call.1} parent=31 // pred_region
          %s229 = sand.u32 %s29, 1
          %s230 = scalar_lea.sflag [#allocation3], %s229
          %s231 = sand.u32 %s29, 1
          %s232 = smul.addr %s231, 16
          %s233 = scalar_lea.vmem [#allocation2], %s232
          %235 = vsyncadd %s230, 0
          %s236 = smul.addr %s19, 4
          %s237 = smul.addr %s236, 4
          %s238 = scalar_lea.hbm %s0, %s237
          %s240 = sshll.u32 %s238, 4
          %s241 = int_to_ptr.hbm [resolvable:$true] %s240
          %s242 = sshll.u32 %s233, 4
          %s243 = int_to_ptr.vmem [resolvable:$true] %s242
          %245 = dma.hbm_to_vmem [thread:$0]  %s241, 256, %s243, %s230
        $region36: #{tpu_custom_call.1} parent=31 // pred_fallthru
          _
      $region32: #{tpu_custom_call.1} parent=5 // pred_fallthru
        _
      %p246 = scmp.le.s32.totalorder 1, %s19
      %p247 = scmp.lt.s32.totalorder %s19, 3
      %p248 = pnand %p246, %p247
      %p249 = pneg %p248
      // Predicated region
      $region37: #{tpu_custom_call.1} parent=5 // pred_check
        _
      $region38: #{tpu_custom_call.1} parent=5 // pred_check_branch
        %251 = sbr.rel (%p248) target = $region40
      $region39: #{tpu_custom_call.1} parent=5 // pred_region
        %s252 = ssub.s32 %s19, 1
        %s253 = sand.u32 %s32, 1
        %s254 = scalar_lea.sflag [#allocation3], %s253
        %s255 = sand.u32 %s32, 1
        %s256 = smul.addr %s255, 16
        %s257 = scalar_lea.vmem [#allocation2], %s256
        // Predicated region
        $region41: #{tpu_custom_call.1} parent=39 // pred_check
          %p258 = pneg %p45
        $region42: #{tpu_custom_call.1} parent=39 // pred_check_branch
          %260 = sbr.rel (%p258) target = $region44
        $region43: #{tpu_custom_call.1} parent=39 // pred_region
          %262 = dma.done %s254, 256
        $region44: #{tpu_custom_call.1} parent=39 // pred_fallthru
          _
        // Predicated region
        $region45: #{tpu_custom_call.1} parent=39 // pred_check
          %p263 = pneg %p66
        $region46: #{tpu_custom_call.1} parent=39 // pred_check_branch
          %265 = sbr.rel (%p263) target = $region48
        $region47: #{tpu_custom_call.1} parent=39 // pred_region
          %267 = dma.done [#allocation6], 16384
        $region48: #{tpu_custom_call.1} parent=39 // pred_fallthru
          _
        // Predicated region
        $region49: #{tpu_custom_call.1} parent=39 // pred_check
          %p268 = pneg %p87
        $region50: #{tpu_custom_call.1} parent=39 // pred_check_branch
          %270 = sbr.rel (%p268) target = $region52
        $region51: #{tpu_custom_call.1} parent=39 // pred_region
          %272 = dma.done [#allocation6], 64
        $region52: #{tpu_custom_call.1} parent=39 // pred_fallthru
          _
        // Predicated region
        $region53: #{tpu_custom_call.1} parent=39 // pred_check
          %p273 = pneg %p108
        $region54: #{tpu_custom_call.1} parent=39 // pred_check_branch
          %275 = sbr.rel (%p273) target = $region56
        $region55: #{tpu_custom_call.1} parent=39 // pred_region
          %277 = dma.done [#allocation9], 16384
        $region56: #{tpu_custom_call.1} parent=39 // pred_fallthru
          _
        // Predicated region
        $region57: #{tpu_custom_call.1} parent=39 // pred_check
          %p278 = pneg %p129
        $region58: #{tpu_custom_call.1} parent=39 // pred_check_branch
          %280 = sbr.rel (%p278) target = $region60
        $region59: #{tpu_custom_call.1} parent=39 // pred_region
          %282 = dma.done [#allocation9], 64
        $region60: #{tpu_custom_call.1} parent=39 // pred_fallthru
          _
        %s283 = sand.u32 %s32, 1
        %s284 = scalar_lea.sflag [#allocation3], %s283
        %s285 = sand.u32 %s32, 1
        %s286 = smul.addr %s285, 16
        %s287 = scalar_lea.vmem [#allocation2], %s286
        %p288 = pneg %p45
        %p289 = pneg %p42
        %p290 = pneg %p66
        %p291 = pneg %p63
        %p292 = pneg %p87
        %p293 = pneg %p84
        %p294 = pneg %p108
        %p295 = pneg %p105
        %p296 = pneg %p129
        %p297 = pneg %p126
        %p298 = pneg %p155
        %p299 = pneg %p152
        %s300 = sand.u32 %s142, 1
        %s301 = scalar_lea.sflag [#allocation4], %s300
        %s302 = sand.u32 %s142, 1
        %s303 = smul.addr %s302, 32
        %s304 = scalar_lea.vmem [#allocation11], %s303
        %v305 = vld [vmem:[%s257] sm:$0xff]
        %v306 = vld [vmem:[%s257 + $0x8] sm:$0xff]
        %v307 = vld [vmem:[#allocation5] sm:$0xff]
        %v308 = vld [vmem:[#allocation5 + $0x8] sm:$0xff]
        %v309 = vld [vmem:[#allocation5 + $0x10] sm:$0xff]
        %v310 = vld [vmem:[#allocation5 + $0x18] sm:$0xff]
        %v311 = vld [vmem:[#allocation5 + $0x20] sm:$0xff]
        %v312 = vld [vmem:[#allocation5 + $0x28] sm:$0xff]
        %v313 = vld [vmem:[#allocation5 + $0x30] sm:$0xff]
        %v314 = vld [vmem:[#allocation5 + $0x38] sm:$0xff]
        %v315 = vld [vmem:[#allocation5 + $0x40] sm:$0xff]
        %v316 = vld [vmem:[#allocation5 + $0x48] sm:$0xff]
        %v317 = vld [vmem:[#allocation5 + $0x50] sm:$0xff]
        %v318 = vld [vmem:[#allocation5 + $0x58] sm:$0xff]
        %v319 = vld [vmem:[#allocation5 + $0x60] sm:$0xff]
        %v320 = vld [vmem:[#allocation5 + $0x68] sm:$0xff]
        %v321 = vld [vmem:[#allocation5 + $0x70] sm:$0xff]
        %v322 = vld [vmem:[#allocation5 + $0x78] sm:$0xff]
        %v323 = vld [vmem:[#allocation5 + $0x80] sm:$0xff]
        %v324 = vld [vmem:[#allocation5 + $0x88] sm:$0xff]
        %v325 = vld [vmem:[#allocation5 + $0x90] sm:$0xff]
        %v326 = vld [vmem:[#allocation5 + $0x98] sm:$0xff]
        %v327 = vld [vmem:[#allocation5 + $0xa0] sm:$0xff]
        %v328 = vld [vmem:[#allocation5 + $0xa8] sm:$0xff]
        %v329 = vld [vmem:[#allocation5 + $0xb0] sm:$0xff]
        %v330 = vld [vmem:[#allocation5 + $0xb8] sm:$0xff]
        %v331 = vld [vmem:[#allocation5 + $0xc0] sm:$0xff]
        %v332 = vld [vmem:[#allocation5 + $0xc8] sm:$0xff]
        %v333 = vld [vmem:[#allocation5 + $0xd0] sm:$0xff]
        %v334 = vld [vmem:[#allocation5 + $0xd8] sm:$0xff]
        %v335 = vld [vmem:[#allocation5 + $0xe0] sm:$0xff]
        %v336 = vld [vmem:[#allocation5 + $0xe8] sm:$0xff]
        %v337 = vld [vmem:[#allocation5 + $0xf0] sm:$0xff]
        %v338 = vld [vmem:[#allocation5 + $0xf8] sm:$0xff]
        %v339 = vld [vmem:[#allocation5 + $0x100] sm:$0xff]
        %v340 = vld [vmem:[#allocation5 + $0x108] sm:$0xff]
        %v341 = vld [vmem:[#allocation5 + $0x110] sm:$0xff]
        %v342 = vld [vmem:[#allocation5 + $0x118] sm:$0xff]
        %v343 = vld [vmem:[#allocation5 + $0x120] sm:$0xff]
        %v344 = vld [vmem:[#allocation5 + $0x128] sm:$0xff]
        %v345 = vld [vmem:[#allocation5 + $0x130] sm:$0xff]
        %v346 = vld [vmem:[#allocation5 + $0x138] sm:$0xff]
        %v347 = vld [vmem:[#allocation5 + $0x140] sm:$0xff]
        %v348 = vld [vmem:[#allocation5 + $0x148] sm:$0xff]
        %v349 = vld [vmem:[#allocation5 + $0x150] sm:$0xff]
        %v350 = vld [vmem:[#allocation5 + $0x158] sm:$0xff]
        %v351 = vld [vmem:[#allocation5 + $0x160] sm:$0xff]
        %v352 = vld [vmem:[#allocation5 + $0x168] sm:$0xff]
        %v353 = vld [vmem:[#allocation5 + $0x170] sm:$0xff]
        %v354 = vld [vmem:[#allocation5 + $0x178] sm:$0xff]
        %v355 = vld [vmem:[#allocation5 + $0x180] sm:$0xff]
        %v356 = vld [vmem:[#allocation5 + $0x188] sm:$0xff]
        %v357 = vld [vmem:[#allocation5 + $0x190] sm:$0xff]
        %v358 = vld [vmem:[#allocation5 + $0x198] sm:$0xff]
        %v359 = vld [vmem:[#allocation5 + $0x1a0] sm:$0xff]
        %v360 = vld [vmem:[#allocation5 + $0x1a8] sm:$0xff]
        %v361 = vld [vmem:[#allocation5 + $0x1b0] sm:$0xff]
        %v362 = vld [vmem:[#allocation5 + $0x1b8] sm:$0xff]
        %v363 = vld [vmem:[#allocation5 + $0x1c0] sm:$0xff]
        %v364 = vld [vmem:[#allocation5 + $0x1c8] sm:$0xff]
        %v365 = vld [vmem:[#allocation5 + $0x1d0] sm:$0xff]
        %v366 = vld [vmem:[#allocation5 + $0x1d8] sm:$0xff]
        %v367 = vld [vmem:[#allocation5 + $0x1e0] sm:$0xff]
        %v368 = vld [vmem:[#allocation5 + $0x1e8] sm:$0xff]
        %v369 = vld [vmem:[#allocation5 + $0x1f0] sm:$0xff]
        %v370 = vld [vmem:[#allocation5 + $0x1f8] sm:$0xff]
        %v371 = vld [vmem:[#allocation5 + $0x200] sm:$0xff]
        %v372 = vld [vmem:[#allocation5 + $0x208] sm:$0xff]
        %v373 = vld [vmem:[#allocation5 + $0x210] sm:$0xff]
        %v374 = vld [vmem:[#allocation5 + $0x218] sm:$0xff]
        %v375 = vld [vmem:[#allocation5 + $0x220] sm:$0xff]
        %v376 = vld [vmem:[#allocation5 + $0x228] sm:$0xff]
        %v377 = vld [vmem:[#allocation5 + $0x230] sm:$0xff]
        %v378 = vld [vmem:[#allocation5 + $0x238] sm:$0xff]
        %v379 = vld [vmem:[#allocation5 + $0x240] sm:$0xff]
        %v380 = vld [vmem:[#allocation5 + $0x248] sm:$0xff]
        %v381 = vld [vmem:[#allocation5 + $0x250] sm:$0xff]
        %v382 = vld [vmem:[#allocation5 + $0x258] sm:$0xff]
        %v383 = vld [vmem:[#allocation5 + $0x260] sm:$0xff]
        %v384 = vld [vmem:[#allocation5 + $0x268] sm:$0xff]
        %v385 = vld [vmem:[#allocation5 + $0x270] sm:$0xff]
        %v386 = vld [vmem:[#allocation5 + $0x278] sm:$0xff]
        %v387 = vld [vmem:[#allocation5 + $0x280] sm:$0xff]
        %v388 = vld [vmem:[#allocation5 + $0x288] sm:$0xff]
        %v389 = vld [vmem:[#allocation5 + $0x290] sm:$0xff]
        %v390 = vld [vmem:[#allocation5 + $0x298] sm:$0xff]
        %v391 = vld [vmem:[#allocation5 + $0x2a0] sm:$0xff]
        %v392 = vld [vmem:[#allocation5 + $0x2a8] sm:$0xff]
        %v393 = vld [vmem:[#allocation5 + $0x2b0] sm:$0xff]
        %v394 = vld [vmem:[#allocation5 + $0x2b8] sm:$0xff]
        %v395 = vld [vmem:[#allocation5 + $0x2c0] sm:$0xff]
        %v396 = vld [vmem:[#allocation5 + $0x2c8] sm:$0xff]
        %v397 = vld [vmem:[#allocation5 + $0x2d0] sm:$0xff]
        %v398 = vld [vmem:[#allocation5 + $0x2d8] sm:$0xff]
        %v399 = vld [vmem:[#allocation5 + $0x2e0] sm:$0xff]
        %v400 = vld [vmem:[#allocation5 + $0x2e8] sm:$0xff]
        %v401 = vld [vmem:[#allocation5 + $0x2f0] sm:$0xff]
        %v402 = vld [vmem:[#allocation5 + $0x2f8] sm:$0xff]
        %v403 = vld [vmem:[#allocation5 + $0x300] sm:$0xff]
        %v404 = vld [vmem:[#allocation5 + $0x308] sm:$0xff]
        %v405 = vld [vmem:[#allocation5 + $0x310] sm:$0xff]
        %v406 = vld [vmem:[#allocation5 + $0x318] sm:$0xff]
        %v407 = vld [vmem:[#allocation5 + $0x320] sm:$0xff]
        %v408 = vld [vmem:[#allocation5 + $0x328] sm:$0xff]
        %v409 = vld [vmem:[#allocation5 + $0x330] sm:$0xff]
        %v410 = vld [vmem:[#allocation5 + $0x338] sm:$0xff]
        %v411 = vld [vmem:[#allocation5 + $0x340] sm:$0xff]
        %v412 = vld [vmem:[#allocation5 + $0x348] sm:$0xff]
        %v413 = vld [vmem:[#allocation5 + $0x350] sm:$0xff]
        %v414 = vld [vmem:[#allocation5 + $0x358] sm:$0xff]
        %v415 = vld [vmem:[#allocation5 + $0x360] sm:$0xff]
        %v416 = vld [vmem:[#allocation5 + $0x368] sm:$0xff]
        %v417 = vld [vmem:[#allocation5 + $0x370] sm:$0xff]
        %v418 = vld [vmem:[#allocation5 + $0x378] sm:$0xff]
        %v419 = vld [vmem:[#allocation5 + $0x380] sm:$0xff]
        %v420 = vld [vmem:[#allocation5 + $0x388] sm:$0xff]
        %v421 = vld [vmem:[#allocation5 + $0x390] sm:$0xff]
        %v422 = vld [vmem:[#allocation5 + $0x398] sm:$0xff]
        %v423 = vld [vmem:[#allocation5 + $0x3a0] sm:$0xff]
        %v424 = vld [vmem:[#allocation5 + $0x3a8] sm:$0xff]
        %v425 = vld [vmem:[#allocation5 + $0x3b0] sm:$0xff]
        %v426 = vld [vmem:[#allocation5 + $0x3b8] sm:$0xff]
        %v427 = vld [vmem:[#allocation5 + $0x3c0] sm:$0xff]
        %v428 = vld [vmem:[#allocation5 + $0x3c8] sm:$0xff]
        %v429 = vld [vmem:[#allocation5 + $0x3d0] sm:$0xff]
        %v430 = vld [vmem:[#allocation5 + $0x3d8] sm:$0xff]
        %v431 = vld [vmem:[#allocation5 + $0x3e0] sm:$0xff]
        %v432 = vld [vmem:[#allocation5 + $0x3e8] sm:$0xff]
        %v433 = vld [vmem:[#allocation5 + $0x3f0] sm:$0xff]
        %v434 = vld [vmem:[#allocation5 + $0x3f8] sm:$0xff]
        %v435 = vld [vmem:[#allocation7] sm:$0xf]
        %v437 = vperm.slane %v435, 0
        %v438 = vperm.slane %v435, 1
        %v439 = vperm.slane %v435, 2
        %v440 = vperm.slane %v435, 3
        %v447 = vunpack.c.l.b16 %v305
        %v448 = vunpack.c.h.b16 %v305
        %v449 = vunpack.c.l.b16 %v306
        %v450 = vunpack.c.h.b16 %v306
        %v451 = vpack.c.b16 %v447, %v447
        %v452 = vpack.c.b16 %v448, %v448
        %v453 = vpack.c.b16 %v449, %v449
        %v454 = vpack.c.b16 %v450, %v450
        %v587 = vunpack.c.l.b16 %v307
        %v588 = vunpack.c.h.b16 %v307
        %v589 = vunpack.c.l.b16 %v308
        %v590 = vunpack.c.h.b16 %v308
        %v591 = vunpack.c.l.b16 %v309
        %v592 = vunpack.c.h.b16 %v309
        %v593 = vunpack.c.l.b16 %v310
        %v594 = vunpack.c.h.b16 %v310
        %v595 = vunpack.c.l.b16 %v311
        %v596 = vunpack.c.h.b16 %v311
        %v597 = vunpack.c.l.b16 %v312
        %v598 = vunpack.c.h.b16 %v312
        %v599 = vunpack.c.l.b16 %v313
        %v600 = vunpack.c.h.b16 %v313
        %v601 = vunpack.c.l.b16 %v314
        %v602 = vunpack.c.h.b16 %v314
        %v603 = vunpack.c.l.b16 %v315
        %v604 = vunpack.c.h.b16 %v315
        %v605 = vunpack.c.l.b16 %v316
        %v606 = vunpack.c.h.b16 %v316
        %v607 = vunpack.c.l.b16 %v317
        %v608 = vunpack.c.h.b16 %v317
        %v609 = vunpack.c.l.b16 %v318
        %v610 = vunpack.c.h.b16 %v318
        %v611 = vunpack.c.l.b16 %v319
        %v612 = vunpack.c.h.b16 %v319
        %v613 = vunpack.c.l.b16 %v320
        %v614 = vunpack.c.h.b16 %v320
        %v615 = vunpack.c.l.b16 %v321
        %v616 = vunpack.c.h.b16 %v321
        %v617 = vunpack.c.l.b16 %v322
        %v618 = vunpack.c.h.b16 %v322
        %v619 = vunpack.c.l.b16 %v323
        %v620 = vunpack.c.h.b16 %v323
        %v621 = vunpack.c.l.b16 %v324
        %v622 = vunpack.c.h.b16 %v324
        %v623 = vunpack.c.l.b16 %v325
        %v624 = vunpack.c.h.b16 %v325
        %v625 = vunpack.c.l.b16 %v326
        %v626 = vunpack.c.h.b16 %v326
        %v627 = vunpack.c.l.b16 %v327
        %v628 = vunpack.c.h.b16 %v327
        %v629 = vunpack.c.l.b16 %v328
        %v630 = vunpack.c.h.b16 %v328
        %v631 = vunpack.c.l.b16 %v329
        %v632 = vunpack.c.h.b16 %v329
        %v633 = vunpack.c.l.b16 %v330
        %v634 = vunpack.c.h.b16 %v330
        %v635 = vunpack.c.l.b16 %v331
        %v636 = vunpack.c.h.b16 %v331
        %v637 = vunpack.c.l.b16 %v332
        %v638 = vunpack.c.h.b16 %v332
        %v639 = vunpack.c.l.b16 %v333
        %v640 = vunpack.c.h.b16 %v333
        %v641 = vunpack.c.l.b16 %v334
        %v642 = vunpack.c.h.b16 %v334
        %v643 = vunpack.c.l.b16 %v335
        %v644 = vunpack.c.h.b16 %v335
        %v645 = vunpack.c.l.b16 %v336
        %v646 = vunpack.c.h.b16 %v336
        %v647 = vunpack.c.l.b16 %v337
        %v648 = vunpack.c.h.b16 %v337
        %v649 = vunpack.c.l.b16 %v338
        %v650 = vunpack.c.h.b16 %v338
        %v651 = vunpack.c.l.b16 %v339
        %v652 = vunpack.c.h.b16 %v339
        %v653 = vunpack.c.l.b16 %v340
        %v654 = vunpack.c.h.b16 %v340
        %v655 = vunpack.c.l.b16 %v341
        %v656 = vunpack.c.h.b16 %v341
        %v657 = vunpack.c.l.b16 %v342
        %v658 = vunpack.c.h.b16 %v342
        %v659 = vunpack.c.l.b16 %v343
        %v660 = vunpack.c.h.b16 %v343
        %v661 = vunpack.c.l.b16 %v344
        %v662 = vunpack.c.h.b16 %v344
        %v663 = vunpack.c.l.b16 %v345
        %v664 = vunpack.c.h.b16 %v345
        %v665 = vunpack.c.l.b16 %v346
        %v666 = vunpack.c.h.b16 %v346
        %v667 = vunpack.c.l.b16 %v347
        %v668 = vunpack.c.h.b16 %v347
        %v669 = vunpack.c.l.b16 %v348
        %v670 = vunpack.c.h.b16 %v348
        %v671 = vunpack.c.l.b16 %v349
        %v672 = vunpack.c.h.b16 %v349
        %v673 = vunpack.c.l.b16 %v350
        %v674 = vunpack.c.h.b16 %v350
        %v675 = vunpack.c.l.b16 %v351
        %v676 = vunpack.c.h.b16 %v351
        %v677 = vunpack.c.l.b16 %v352
        %v678 = vunpack.c.h.b16 %v352
        %v679 = vunpack.c.l.b16 %v353
        %v680 = vunpack.c.h.b16 %v353
        %v681 = vunpack.c.l.b16 %v354
        %v682 = vunpack.c.h.b16 %v354
        %v683 = vunpack.c.l.b16 %v355
        %v684 = vunpack.c.h.b16 %v355
        %v685 = vunpack.c.l.b16 %v356
        %v686 = vunpack.c.h.b16 %v356
        %v687 = vunpack.c.l.b16 %v357
        %v688 = vunpack.c.h.b16 %v357
        %v689 = vunpack.c.l.b16 %v358
        %v690 = vunpack.c.h.b16 %v358
        %v691 = vunpack.c.l.b16 %v359
        %v692 = vunpack.c.h.b16 %v359
        %v693 = vunpack.c.l.b16 %v360
        %v694 = vunpack.c.h.b16 %v360
        %v695 = vunpack.c.l.b16 %v361
        %v696 = vunpack.c.h.b16 %v361
        %v697 = vunpack.c.l.b16 %v362
        %v698 = vunpack.c.h.b16 %v362
        %v699 = vunpack.c.l.b16 %v363
        %v700 = vunpack.c.h.b16 %v363
        %v701 = vunpack.c.l.b16 %v364
        %v702 = vunpack.c.h.b16 %v364
        %v703 = vunpack.c.l.b16 %v365
        %v704 = vunpack.c.h.b16 %v365
        %v705 = vunpack.c.l.b16 %v366
        %v706 = vunpack.c.h.b16 %v366
        %v707 = vunpack.c.l.b16 %v367
        %v708 = vunpack.c.h.b16 %v367
        %v709 = vunpack.c.l.b16 %v368
        %v710 = vunpack.c.h.b16 %v368
        %v711 = vunpack.c.l.b16 %v369
        %v712 = vunpack.c.h.b16 %v369
        %v713 = vunpack.c.l.b16 %v370
        %v714 = vunpack.c.h.b16 %v370
        %v715 = vunpack.c.l.b16 %v371
        %v716 = vunpack.c.h.b16 %v371
        %v717 = vunpack.c.l.b16 %v372
        %v718 = vunpack.c.h.b16 %v372
        %v719 = vunpack.c.l.b16 %v373
        %v720 = vunpack.c.h.b16 %v373
        %v721 = vunpack.c.l.b16 %v374
        %v722 = vunpack.c.h.b16 %v374
        %v723 = vunpack.c.l.b16 %v375
        %v724 = vunpack.c.h.b16 %v375
        %v725 = vunpack.c.l.b16 %v376
        %v726 = vunpack.c.h.b16 %v376
        %v727 = vunpack.c.l.b16 %v377
        %v728 = vunpack.c.h.b16 %v377
        %v729 = vunpack.c.l.b16 %v378
        %v730 = vunpack.c.h.b16 %v378
        %v731 = vunpack.c.l.b16 %v379
        %v732 = vunpack.c.h.b16 %v379
        %v733 = vunpack.c.l.b16 %v380
        %v734 = vunpack.c.h.b16 %v380
        %v735 = vunpack.c.l.b16 %v381
        %v736 = vunpack.c.h.b16 %v381
        %v737 = vunpack.c.l.b16 %v382
        %v738 = vunpack.c.h.b16 %v382
        %v739 = vunpack.c.l.b16 %v383
        %v740 = vunpack.c.h.b16 %v383
        %v741 = vunpack.c.l.b16 %v384
        %v742 = vunpack.c.h.b16 %v384
        %v743 = vunpack.c.l.b16 %v385
        %v744 = vunpack.c.h.b16 %v385
        %v745 = vunpack.c.l.b16 %v386
        %v746 = vunpack.c.h.b16 %v386
        %v747 = vunpack.c.l.b16 %v387
        %v748 = vunpack.c.h.b16 %v387
        %v749 = vunpack.c.l.b16 %v388
        %v750 = vunpack.c.h.b16 %v388
        %v751 = vunpack.c.l.b16 %v389
        %v752 = vunpack.c.h.b16 %v389
        %v753 = vunpack.c.l.b16 %v390
        %v754 = vunpack.c.h.b16 %v390
        %v755 = vunpack.c.l.b16 %v391
        %v756 = vunpack.c.h.b16 %v391
        %v757 = vunpack.c.l.b16 %v392
        %v758 = vunpack.c.h.b16 %v392
        %v759 = vunpack.c.l.b16 %v393
        %v760 = vunpack.c.h.b16 %v393
        %v761 = vunpack.c.l.b16 %v394
        %v762 = vunpack.c.h.b16 %v394
        %v763 = vunpack.c.l.b16 %v395
        %v764 = vunpack.c.h.b16 %v395
        %v765 = vunpack.c.l.b16 %v396
        %v766 = vunpack.c.h.b16 %v396
        %v767 = vunpack.c.l.b16 %v397
        %v768 = vunpack.c.h.b16 %v397
        %v769 = vunpack.c.l.b16 %v398
        %v770 = vunpack.c.h.b16 %v398
        %v771 = vunpack.c.l.b16 %v399
        %v772 = vunpack.c.h.b16 %v399
        %v773 = vunpack.c.l.b16 %v400
        %v774 = vunpack.c.h.b16 %v400
        %v775 = vunpack.c.l.b16 %v401
        %v776 = vunpack.c.h.b16 %v401
        %v777 = vunpack.c.l.b16 %v402
        %v778 = vunpack.c.h.b16 %v402
        %v779 = vunpack.c.l.b16 %v403
        %v780 = vunpack.c.h.b16 %v403
        %v781 = vunpack.c.l.b16 %v404
        %v782 = vunpack.c.h.b16 %v404
        %v783 = vunpack.c.l.b16 %v405
        %v784 = vunpack.c.h.b16 %v405
        %v785 = vunpack.c.l.b16 %v406
        %v786 = vunpack.c.h.b16 %v406
        %v787 = vunpack.c.l.b16 %v407
        %v788 = vunpack.c.h.b16 %v407
        %v789 = vunpack.c.l.b16 %v408
        %v790 = vunpack.c.h.b16 %v408
        %v791 = vunpack.c.l.b16 %v409
        %v792 = vunpack.c.h.b16 %v409
        %v793 = vunpack.c.l.b16 %v410
        %v794 = vunpack.c.h.b16 %v410
        %v795 = vunpack.c.l.b16 %v411
        %v796 = vunpack.c.h.b16 %v411
        %v797 = vunpack.c.l.b16 %v412
        %v798 = vunpack.c.h.b16 %v412
        %v799 = vunpack.c.l.b16 %v413
        %v800 = vunpack.c.h.b16 %v413
        %v801 = vunpack.c.l.b16 %v414
        %v802 = vunpack.c.h.b16 %v414
        %v803 = vunpack.c.l.b16 %v415
        %v804 = vunpack.c.h.b16 %v415
        %v805 = vunpack.c.l.b16 %v416
        %v806 = vunpack.c.h.b16 %v416
        %v807 = vunpack.c.l.b16 %v417
        %v808 = vunpack.c.h.b16 %v417
        %v809 = vunpack.c.l.b16 %v418
        %v810 = vunpack.c.h.b16 %v418
        %v811 = vunpack.c.l.b16 %v419
        %v812 = vunpack.c.h.b16 %v419
        %v813 = vunpack.c.l.b16 %v420
        %v814 = vunpack.c.h.b16 %v420
        %v815 = vunpack.c.l.b16 %v421
        %v816 = vunpack.c.h.b16 %v421
        %v817 = vunpack.c.l.b16 %v422
        %v818 = vunpack.c.h.b16 %v422
        %v819 = vunpack.c.l.b16 %v423
        %v820 = vunpack.c.h.b16 %v423
        %v821 = vunpack.c.l.b16 %v424
        %v822 = vunpack.c.h.b16 %v424
        %v823 = vunpack.c.l.b16 %v425
        %v824 = vunpack.c.h.b16 %v425
        %v825 = vunpack.c.l.b16 %v426
        %v826 = vunpack.c.h.b16 %v426
        %v827 = vunpack.c.l.b16 %v427
        %v828 = vunpack.c.h.b16 %v427
        %v829 = vunpack.c.l.b16 %v428
        %v830 = vunpack.c.h.b16 %v428
        %v831 = vunpack.c.l.b16 %v429
        %v832 = vunpack.c.h.b16 %v429
        %v833 = vunpack.c.l.b16 %v430
        %v834 = vunpack.c.h.b16 %v430
        %v835 = vunpack.c.l.b16 %v431
        %v836 = vunpack.c.h.b16 %v431
        %v837 = vunpack.c.l.b16 %v432
        %v838 = vunpack.c.h.b16 %v432
        %v839 = vunpack.c.l.b16 %v433
        %v840 = vunpack.c.h.b16 %v433
        %v841 = vunpack.c.l.b16 %v434
        %v842 = vunpack.c.h.b16 %v434
        %v843 = vpack.c.b16 %v591, %v587
        %v844 = vpack.c.b16 %v592, %v588
        %v845 = vpack.c.b16 %v593, %v589
        %v846 = vpack.c.b16 %v594, %v590
        %v847 = vpack.c.b16 %v599, %v595
        %v848 = vpack.c.b16 %v600, %v596
        %v849 = vpack.c.b16 %v601, %v597
        %v850 = vpack.c.b16 %v602, %v598
        %v851 = vpack.c.b16 %v607, %v603
        %v852 = vpack.c.b16 %v608, %v604
        %v853 = vpack.c.b16 %v609, %v605
        %v854 = vpack.c.b16 %v610, %v606
        %v855 = vpack.c.b16 %v615, %v611
        %v856 = vpack.c.b16 %v616, %v612
        %v857 = vpack.c.b16 %v617, %v613
        %v858 = vpack.c.b16 %v618, %v614
        %v859 = vpack.c.b16 %v623, %v619
        %v860 = vpack.c.b16 %v624, %v620
        %v861 = vpack.c.b16 %v625, %v621
        %v862 = vpack.c.b16 %v626, %v622
        %v863 = vpack.c.b16 %v631, %v627
        %v864 = vpack.c.b16 %v632, %v628
        %v865 = vpack.c.b16 %v633, %v629
        %v866 = vpack.c.b16 %v634, %v630
        %v867 = vpack.c.b16 %v639, %v635
        %v868 = vpack.c.b16 %v640, %v636
        %v869 = vpack.c.b16 %v641, %v637
        %v870 = vpack.c.b16 %v642, %v638
        %v871 = vpack.c.b16 %v647, %v643
        %v872 = vpack.c.b16 %v648, %v644
        %v873 = vpack.c.b16 %v649, %v645
        %v874 = vpack.c.b16 %v650, %v646
        %v875 = vpack.c.b16 %v655, %v651
        %v876 = vpack.c.b16 %v656, %v652
        %v877 = vpack.c.b16 %v657, %v653
        %v878 = vpack.c.b16 %v658, %v654
        %v879 = vpack.c.b16 %v663, %v659
        %v880 = vpack.c.b16 %v664, %v660
        %v881 = vpack.c.b16 %v665, %v661
        %v882 = vpack.c.b16 %v666, %v662
        %v883 = vpack.c.b16 %v671, %v667
        %v884 = vpack.c.b16 %v672, %v668
        %v885 = vpack.c.b16 %v673, %v669
        %v886 = vpack.c.b16 %v674, %v670
        %v887 = vpack.c.b16 %v679, %v675
        %v888 = vpack.c.b16 %v680, %v676
        %v889 = vpack.c.b16 %v681, %v677
        %v890 = vpack.c.b16 %v682, %v678
        %v891 = vpack.c.b16 %v687, %v683
        %v892 = vpack.c.b16 %v688, %v684
        %v893 = vpack.c.b16 %v689, %v685
        %v894 = vpack.c.b16 %v690, %v686
        %v895 = vpack.c.b16 %v695, %v691
        %v896 = vpack.c.b16 %v696, %v692
        %v897 = vpack.c.b16 %v697, %v693
        %v898 = vpack.c.b16 %v698, %v694
        %v899 = vpack.c.b16 %v703, %v699
        %v900 = vpack.c.b16 %v704, %v700
        %v901 = vpack.c.b16 %v705, %v701
        %v902 = vpack.c.b16 %v706, %v702
        %v903 = vpack.c.b16 %v711, %v707
        %v904 = vpack.c.b16 %v712, %v708
        %v905 = vpack.c.b16 %v713, %v709
        %v906 = vpack.c.b16 %v714, %v710
        %v907 = vpack.c.b16 %v719, %v715
        %v908 = vpack.c.b16 %v720, %v716
        %v909 = vpack.c.b16 %v721, %v717
        %v910 = vpack.c.b16 %v722, %v718
        %v911 = vpack.c.b16 %v727, %v723
        %v912 = vpack.c.b16 %v728, %v724
        %v913 = vpack.c.b16 %v729, %v725
        %v914 = vpack.c.b16 %v730, %v726
        %v915 = vpack.c.b16 %v735, %v731
        %v916 = vpack.c.b16 %v736, %v732
        %v917 = vpack.c.b16 %v737, %v733
        %v918 = vpack.c.b16 %v738, %v734
        %v919 = vpack.c.b16 %v743, %v739
        %v920 = vpack.c.b16 %v744, %v740
        %v921 = vpack.c.b16 %v745, %v741
        %v922 = vpack.c.b16 %v746, %v742
        %v923 = vpack.c.b16 %v751, %v747
        %v924 = vpack.c.b16 %v752, %v748
        %v925 = vpack.c.b16 %v753, %v749
        %v926 = vpack.c.b16 %v754, %v750
        %v927 = vpack.c.b16 %v759, %v755
        %v928 = vpack.c.b16 %v760, %v756
        %v929 = vpack.c.b16 %v761, %v757
        %v930 = vpack.c.b16 %v762, %v758
        %v931 = vpack.c.b16 %v767, %v763
        %v932 = vpack.c.b16 %v768, %v764
        %v933 = vpack.c.b16 %v769, %v765
        %v934 = vpack.c.b16 %v770, %v766
        %v935 = vpack.c.b16 %v775, %v771
        %v936 = vpack.c.b16 %v776, %v772
        %v937 = vpack.c.b16 %v777, %v773
        %v938 = vpack.c.b16 %v778, %v774
        %v939 = vpack.c.b16 %v783, %v779
        %v940 = vpack.c.b16 %v784, %v780
        %v941 = vpack.c.b16 %v785, %v781
        %v942 = vpack.c.b16 %v786, %v782
        %v943 = vpack.c.b16 %v791, %v787
        %v944 = vpack.c.b16 %v792, %v788
        %v945 = vpack.c.b16 %v793, %v789
        %v946 = vpack.c.b16 %v794, %v790
        %v947 = vpack.c.b16 %v799, %v795
        %v948 = vpack.c.b16 %v800, %v796
        %v949 = vpack.c.b16 %v801, %v797
        %v950 = vpack.c.b16 %v802, %v798
        %v951 = vpack.c.b16 %v807, %v803
        %v952 = vpack.c.b16 %v808, %v804
        %v953 = vpack.c.b16 %v809, %v805
        %v954 = vpack.c.b16 %v810, %v806
        %v955 = vpack.c.b16 %v815, %v811
        %v956 = vpack.c.b16 %v816, %v812
        %v957 = vpack.c.b16 %v817, %v813
        %v958 = vpack.c.b16 %v818, %v814
        %v959 = vpack.c.b16 %v823, %v819
        %v960 = vpack.c.b16 %v824, %v820
        %v961 = vpack.c.b16 %v825, %v821
        %v962 = vpack.c.b16 %v826, %v822
        %v963 = vpack.c.b16 %v831, %v827
        %v964 = vpack.c.b16 %v832, %v828
        %v965 = vpack.c.b16 %v833, %v829
        %v966 = vpack.c.b16 %v834, %v830
        %v967 = vpack.c.b16 %v839, %v835
        %v968 = vpack.c.b16 %v840, %v836
        %v969 = vpack.c.b16 %v841, %v837
        %v970 = vpack.c.b16 %v842, %v838
        %1099 = vmatpush.bf16.msra.mxu0 %v871
        %1100 = vmatpush.bf16.msra.mxu0 %v867
        %1101 = vmatpush.bf16.msra.mxu0 %v863
        %1102 = vmatpush.bf16.msra.mxu0 %v859
        %1103 = vmatpush.bf16.msra.mxu0 %v855
        %1104 = vmatpush.bf16.msra.mxu0 %v851
        %1105 = vmatpush.bf16.msra.mxu0 %v847
        %1106 = vmatpush.bf16.msra.mxu0 %v843
        %1107 = vmatmul.bf16.gmra.mxu0 %v451
        %v1108 = vpop.f32.mrf.mxu0
        %v1109 = vadd.f32 %v437, %v1108
        %v1110 = vpop.f32.mrf.mxu0
        %1111 = vdwg.mxu0
        %1112 = vmatpush.bf16.msra.mxu0 %v903
        %1113 = vmatpush.bf16.msra.mxu0 %v899
        %1114 = vmatpush.bf16.msra.mxu0 %v895
        %1115 = vmatpush.bf16.msra.mxu0 %v891
        %1116 = vmatpush.bf16.msra.mxu0 %v887
        %1117 = vmatpush.bf16.msra.mxu0 %v883
        %1118 = vmatpush.bf16.msra.mxu0 %v879
        %1119 = vmatpush.bf16.msra.mxu0 %v875
        %1120 = vmatmul.bf16.gmra.mxu0 %v452
        %v1121 = vpop.f32.mrf.mxu0
        %v1122 = vadd.f32 %v1109, %v1121
        %v1123 = vpop.f32.mrf.mxu0
        %1124 = vdwg.mxu0
        %1125 = vmatpush.bf16.msra.mxu0 %v935
        %1126 = vmatpush.bf16.msra.mxu0 %v931
        %1127 = vmatpush.bf16.msra.mxu0 %v927
        %1128 = vmatpush.bf16.msra.mxu0 %v923
        %1129 = vmatpush.bf16.msra.mxu0 %v919
        %1130 = vmatpush.bf16.msra.mxu0 %v915
        %1131 = vmatpush.bf16.msra.mxu0 %v911
        %1132 = vmatpush.bf16.msra.mxu0 %v907
        %1133 = vmatmul.bf16.gmra.mxu0 %v453
        %v1134 = vpop.f32.mrf.mxu0
        %v1135 = vadd.f32 %v1122, %v1134
        %v1136 = vpop.f32.mrf.mxu0
        %1137 = vdwg.mxu0
        %1138 = vmatpush.bf16.msra.mxu0 %v967
        %1139 = vmatpush.bf16.msra.mxu0 %v963
        %1140 = vmatpush.bf16.msra.mxu0 %v959
        %1141 = vmatpush.bf16.msra.mxu0 %v955
        %1142 = vmatpush.bf16.msra.mxu0 %v951
        %1143 = vmatpush.bf16.msra.mxu0 %v947
        %1144 = vmatpush.bf16.msra.mxu0 %v943
        %1145 = vmatpush.bf16.msra.mxu0 %v939
        %1146 = vmatmul.bf16.gmra.mxu0 %v454
        %v1147 = vpop.f32.mrf.mxu0
        %v1148 = vadd.f32 %v1135, %v1147
        %v1149 = vpop.f32.mrf.mxu0
        %1150 = vdwg.mxu0
        %1151 = vmatpush.bf16.msra.mxu0 %v872
        %1152 = vmatpush.bf16.msra.mxu0 %v868
        %1153 = vmatpush.bf16.msra.mxu0 %v864
        %1154 = vmatpush.bf16.msra.mxu0 %v860
        %1155 = vmatpush.bf16.msra.mxu0 %v856
        %1156 = vmatpush.bf16.msra.mxu0 %v852
        %1157 = vmatpush.bf16.msra.mxu0 %v848
        %1158 = vmatpush.bf16.msra.mxu0 %v844
        %1159 = vmatmul.bf16.gmra.mxu0 %v451
        %v1160 = vpop.f32.mrf.mxu0
        %v1161 = vadd.f32 %v438, %v1160
        %v1162 = vpop.f32.mrf.mxu0
        %1163 = vdwg.mxu0
        %1164 = vmatpush.bf16.msra.mxu0 %v904
        %1165 = vmatpush.bf16.msra.mxu0 %v900
        %1166 = vmatpush.bf16.msra.mxu0 %v896
        %1167 = vmatpush.bf16.msra.mxu0 %v892
        %1168 = vmatpush.bf16.msra.mxu0 %v888
        %1169 = vmatpush.bf16.msra.mxu0 %v884
        %1170 = vmatpush.bf16.msra.mxu0 %v880
        %1171 = vmatpush.bf16.msra.mxu0 %v876
        %1172 = vmatmul.bf16.gmra.mxu0 %v452
        %v1173 = vpop.f32.mrf.mxu0
        %v1174 = vadd.f32 %v1161, %v1173
        %v1175 = vpop.f32.mrf.mxu0
        %1176 = vdwg.mxu0
        %1177 = vmatpush.bf16.msra.mxu0 %v936
        %1178 = vmatpush.bf16.msra.mxu0 %v932
        %1179 = vmatpush.bf16.msra.mxu0 %v928
        %1180 = vmatpush.bf16.msra.mxu0 %v924
        %1181 = vmatpush.bf16.msra.mxu0 %v920
        %1182 = vmatpush.bf16.msra.mxu0 %v916
        %1183 = vmatpush.bf16.msra.mxu0 %v912
        %1184 = vmatpush.bf16.msra.mxu0 %v908
        %1185 = vmatmul.bf16.gmra.mxu0 %v453
        %v1186 = vpop.f32.mrf.mxu0
        %v1187 = vadd.f32 %v1174, %v1186
        %v1188 = vpop.f32.mrf.mxu0
        %1189 = vdwg.mxu0
        %1190 = vmatpush.bf16.msra.mxu0 %v968
        %1191 = vmatpush.bf16.msra.mxu0 %v964
        %1192 = vmatpush.bf16.msra.mxu0 %v960
        %1193 = vmatpush.bf16.msra.mxu0 %v956
        %1194 = vmatpush.bf16.msra.mxu0 %v952
        %1195 = vmatpush.bf16.msra.mxu0 %v948
        %1196 = vmatpush.bf16.msra.mxu0 %v944
        %1197 = vmatpush.bf16.msra.mxu0 %v940
        %1198 = vmatmul.bf16.gmra.mxu0 %v454
        %v1199 = vpop.f32.mrf.mxu0
        %v1200 = vadd.f32 %v1187, %v1199
        %v1201 = vpop.f32.mrf.mxu0
        %1202 = vdwg.mxu0
        %1203 = vmatpush.bf16.msra.mxu0 %v873
        %1204 = vmatpush.bf16.msra.mxu0 %v869
        %1205 = vmatpush.bf16.msra.mxu0 %v865
        %1206 = vmatpush.bf16.msra.mxu0 %v861
        %1207 = vmatpush.bf16.msra.mxu0 %v857
        %1208 = vmatpush.bf16.msra.mxu0 %v853
        %1209 = vmatpush.bf16.msra.mxu0 %v849
        %1210 = vmatpush.bf16.msra.mxu0 %v845
        %1211 = vmatmul.bf16.gmra.mxu0 %v451
        %v1212 = vpop.f32.mrf.mxu0
        %v1213 = vadd.f32 %v439, %v1212
        %v1214 = vpop.f32.mrf.mxu0
        %1215 = vdwg.mxu0
        %1216 = vmatpush.bf16.msra.mxu0 %v905
        %1217 = vmatpush.bf16.msra.mxu0 %v901
        %1218 = vmatpush.bf16.msra.mxu0 %v897
        %1219 = vmatpush.bf16.msra.mxu0 %v893
        %1220 = vmatpush.bf16.msra.mxu0 %v889
        %1221 = vmatpush.bf16.msra.mxu0 %v885
        %1222 = vmatpush.bf16.msra.mxu0 %v881
        %1223 = vmatpush.bf16.msra.mxu0 %v877
        %1224 = vmatmul.bf16.gmra.mxu0 %v452
        %v1225 = vpop.f32.mrf.mxu0
        %v1226 = vadd.f32 %v1213, %v1225
        %v1227 = vpop.f32.mrf.mxu0
        %1228 = vdwg.mxu0
        %1229 = vmatpush.bf16.msra.mxu0 %v937
        %1230 = vmatpush.bf16.msra.mxu0 %v933
        %1231 = vmatpush.bf16.msra.mxu0 %v929
        %1232 = vmatpush.bf16.msra.mxu0 %v925
        %1233 = vmatpush.bf16.msra.mxu0 %v921
        %1234 = vmatpush.bf16.msra.mxu0 %v917
        %1235 = vmatpush.bf16.msra.mxu0 %v913
        %1236 = vmatpush.bf16.msra.mxu0 %v909
        %1237 = vmatmul.bf16.gmra.mxu0 %v453
        %v1238 = vpop.f32.mrf.mxu0
        %v1239 = vadd.f32 %v1226, %v1238
        %v1240 = vpop.f32.mrf.mxu0
        %1241 = vdwg.mxu0
        %1242 = vmatpush.bf16.msra.mxu0 %v969
        %1243 = vmatpush.bf16.msra.mxu0 %v965
        %1244 = vmatpush.bf16.msra.mxu0 %v961
        %1245 = vmatpush.bf16.msra.mxu0 %v957
        %1246 = vmatpush.bf16.msra.mxu0 %v953
        %1247 = vmatpush.bf16.msra.mxu0 %v949
        %1248 = vmatpush.bf16.msra.mxu0 %v945
        %1249 = vmatpush.bf16.msra.mxu0 %v941
        %1250 = vmatmul.bf16.gmra.mxu0 %v454
        %v1251 = vpop.f32.mrf.mxu0
        %v1252 = vadd.f32 %v1239, %v1251
        %v1253 = vpop.f32.mrf.mxu0
        %1254 = vdwg.mxu0
        %1255 = vmatpush.bf16.msra.mxu0 %v874
        %1256 = vmatpush.bf16.msra.mxu0 %v870
        %1257 = vmatpush.bf16.msra.mxu0 %v866
        %1258 = vmatpush.bf16.msra.mxu0 %v862
        %1259 = vmatpush.bf16.msra.mxu0 %v858
        %1260 = vmatpush.bf16.msra.mxu0 %v854
        %1261 = vmatpush.bf16.msra.mxu0 %v850
        %1262 = vmatpush.bf16.msra.mxu0 %v846
        %1263 = vmatmul.bf16.gmra.mxu0 %v451
        %v1264 = vpop.f32.mrf.mxu0
        %v1265 = vadd.f32 %v440, %v1264
        %v1266 = vpop.f32.mrf.mxu0
        %1267 = vdwg.mxu0
        %1268 = vmatpush.bf16.msra.mxu0 %v906
        %1269 = vmatpush.bf16.msra.mxu0 %v902
        %1270 = vmatpush.bf16.msra.mxu0 %v898
        %1271 = vmatpush.bf16.msra.mxu0 %v894
        %1272 = vmatpush.bf16.msra.mxu0 %v890
        %1273 = vmatpush.bf16.msra.mxu0 %v886
        %1274 = vmatpush.bf16.msra.mxu0 %v882
        %1275 = vmatpush.bf16.msra.mxu0 %v878
        %1276 = vmatmul.bf16.gmra.mxu0 %v452
        %v1277 = vpop.f32.mrf.mxu0
        %v1278 = vadd.f32 %v1265, %v1277
        %v1279 = vpop.f32.mrf.mxu0
        %1280 = vdwg.mxu0
        %1281 = vmatpush.bf16.msra.mxu0 %v938
        %1282 = vmatpush.bf16.msra.mxu0 %v934
        %1283 = vmatpush.bf16.msra.mxu0 %v930
        %1284 = vmatpush.bf16.msra.mxu0 %v926
        %1285 = vmatpush.bf16.msra.mxu0 %v922
        %1286 = vmatpush.bf16.msra.mxu0 %v918
        %1287 = vmatpush.bf16.msra.mxu0 %v914
        %1288 = vmatpush.bf16.msra.mxu0 %v910
        %1289 = vmatmul.bf16.gmra.mxu0 %v453
        %v1290 = vpop.f32.mrf.mxu0
        %v1291 = vadd.f32 %v1278, %v1290
        %v1292 = vpop.f32.mrf.mxu0
        %1293 = vdwg.mxu0
        %1294 = vmatpush.bf16.msra.mxu0 %v970
        %1295 = vmatpush.bf16.msra.mxu0 %v966
        %1296 = vmatpush.bf16.msra.mxu0 %v962
        %1297 = vmatpush.bf16.msra.mxu0 %v958
        %1298 = vmatpush.bf16.msra.mxu0 %v954
        %1299 = vmatpush.bf16.msra.mxu0 %v950
        %1300 = vmatpush.bf16.msra.mxu0 %v946
        %1301 = vmatpush.bf16.msra.mxu0 %v942
        %1302 = vmatmul.bf16.gmra.mxu0 %v454
        %v1303 = vpop.f32.mrf.mxu0
        %v1304 = vadd.f32 %v1291, %v1303
        %v1305 = vpop.f32.mrf.mxu0
        %1306 = vdwg.mxu0
        %v1307 = vmax.f32 %v1148, 0.0
        %v1308 = vmax.f32 %v1200, 0.0
        %v1309 = vmax.f32 %v1252, 0.0
        %v1310 = vmax.f32 %v1304, 0.0
        %v1311 = vpack.c.bf16 %v1307, %v1307
        %v1312 = vpack.c.bf16 %v1308, %v1308
        %v1313 = vpack.c.bf16 %v1309, %v1309
        %v1314 = vpack.c.bf16 %v1310, %v1310
        %v1315 = vld [vmem:[#allocation8] sm:$0xff]
        %v1316 = vld [vmem:[#allocation8 + $0x8] sm:$0xff]
        %v1317 = vld [vmem:[#allocation8 + $0x10] sm:$0xff]
        %v1318 = vld [vmem:[#allocation8 + $0x18] sm:$0xff]
        %v1319 = vld [vmem:[#allocation8 + $0x20] sm:$0xff]
        %v1320 = vld [vmem:[#allocation8 + $0x28] sm:$0xff]
        %v1321 = vld [vmem:[#allocation8 + $0x30] sm:$0xff]
        %v1322 = vld [vmem:[#allocation8 + $0x38] sm:$0xff]
        %v1323 = vld [vmem:[#allocation8 + $0x40] sm:$0xff]
        %v1324 = vld [vmem:[#allocation8 + $0x48] sm:$0xff]
        %v1325 = vld [vmem:[#allocation8 + $0x50] sm:$0xff]
        %v1326 = vld [vmem:[#allocation8 + $0x58] sm:$0xff]
        %v1327 = vld [vmem:[#allocation8 + $0x60] sm:$0xff]
        %v1328 = vld [vmem:[#allocation8 + $0x68] sm:$0xff]
        %v1329 = vld [vmem:[#allocation8 + $0x70] sm:$0xff]
        %v1330 = vld [vmem:[#allocation8 + $0x78] sm:$0xff]
        %v1331 = vld [vmem:[#allocation8 + $0x80] sm:$0xff]
        %v1332 = vld [vmem:[#allocation8 + $0x88] sm:$0xff]
        %v1333 = vld [vmem:[#allocation8 + $0x90] sm:$0xff]
        %v1334 = vld [vmem:[#allocation8 + $0x98] sm:$0xff]
        %v1335 = vld [vmem:[#allocation8 + $0xa0] sm:$0xff]
        %v1336 = vld [vmem:[#allocation8 + $0xa8] sm:$0xff]
        %v1337 = vld [vmem:[#allocation8 + $0xb0] sm:$0xff]
        %v1338 = vld [vmem:[#allocation8 + $0xb8] sm:$0xff]
        %v1339 = vld [vmem:[#allocation8 + $0xc0] sm:$0xff]
        %v1340 = vld [vmem:[#allocation8 + $0xc8] sm:$0xff]
        %v1341 = vld [vmem:[#allocation8 + $0xd0] sm:$0xff]
        %v1342 = vld [vmem:[#allocation8 + $0xd8] sm:$0xff]
        %v1343 = vld [vmem:[#allocation8 + $0xe0] sm:$0xff]
        %v1344 = vld [vmem:[#allocation8 + $0xe8] sm:$0xff]
        %v1345 = vld [vmem:[#allocation8 + $0xf0] sm:$0xff]
        %v1346 = vld [vmem:[#allocation8 + $0xf8] sm:$0xff]
        %v1347 = vld [vmem:[#allocation8 + $0x100] sm:$0xff]
        %v1348 = vld [vmem:[#allocation8 + $0x108] sm:$0xff]
        %v1349 = vld [vmem:[#allocation8 + $0x110] sm:$0xff]
        %v1350 = vld [vmem:[#allocation8 + $0x118] sm:$0xff]
        %v1351 = vld [vmem:[#allocation8 + $0x120] sm:$0xff]
        %v1352 = vld [vmem:[#allocation8 + $0x128] sm:$0xff]
        %v1353 = vld [vmem:[#allocation8 + $0x130] sm:$0xff]
        %v1354 = vld [vmem:[#allocation8 + $0x138] sm:$0xff]
        %v1355 = vld [vmem:[#allocation8 + $0x140] sm:$0xff]
        %v1356 = vld [vmem:[#allocation8 + $0x148] sm:$0xff]
        %v1357 = vld [vmem:[#allocation8 + $0x150] sm:$0xff]
        %v1358 = vld [vmem:[#allocation8 + $0x158] sm:$0xff]
        %v1359 = vld [vmem:[#allocation8 + $0x160] sm:$0xff]
        %v1360 = vld [vmem:[#allocation8 + $0x168] sm:$0xff]
        %v1361 = vld [vmem:[#allocation8 + $0x170] sm:$0xff]
        %v1362 = vld [vmem:[#allocation8 + $0x178] sm:$0xff]
        %v1363 = vld [vmem:[#allocation8 + $0x180] sm:$0xff]
        %v1364 = vld [vmem:[#allocation8 + $0x188] sm:$0xff]
        %v1365 = vld [vmem:[#allocation8 + $0x190] sm:$0xff]
        %v1366 = vld [vmem:[#allocation8 + $0x198] sm:$0xff]
        %v1367 = vld [vmem:[#allocation8 + $0x1a0] sm:$0xff]
        %v1368 = vld [vmem:[#allocation8 + $0x1a8] sm:$0xff]
        %v1369 = vld [vmem:[#allocation8 + $0x1b0] sm:$0xff]
        %v1370 = vld [vmem:[#allocation8 + $0x1b8] sm:$0xff]
        %v1371 = vld [vmem:[#allocation8 + $0x1c0] sm:$0xff]
        %v1372 = vld [vmem:[#allocation8 + $0x1c8] sm:$0xff]
        %v1373 = vld [vmem:[#allocation8 + $0x1d0] sm:$0xff]
        %v1374 = vld [vmem:[#allocation8 + $0x1d8] sm:$0xff]
        %v1375 = vld [vmem:[#allocation8 + $0x1e0] sm:$0xff]
        %v1376 = vld [vmem:[#allocation8 + $0x1e8] sm:$0xff]
        %v1377 = vld [vmem:[#allocation8 + $0x1f0] sm:$0xff]
        %v1378 = vld [vmem:[#allocation8 + $0x1f8] sm:$0xff]
        %v1379 = vld [vmem:[#allocation8 + $0x200] sm:$0xff]
        %v1380 = vld [vmem:[#allocation8 + $0x208] sm:$0xff]
        %v1381 = vld [vmem:[#allocation8 + $0x210] sm:$0xff]
        %v1382 = vld [vmem:[#allocation8 + $0x218] sm:$0xff]
        %v1383 = vld [vmem:[#allocation8 + $0x220] sm:$0xff]
        %v1384 = vld [vmem:[#allocation8 + $0x228] sm:$0xff]
        %v1385 = vld [vmem:[#allocation8 + $0x230] sm:$0xff]
        %v1386 = vld [vmem:[#allocation8 + $0x238] sm:$0xff]
        %v1387 = vld [vmem:[#allocation8 + $0x240] sm:$0xff]
        %v1388 = vld [vmem:[#allocation8 + $0x248] sm:$0xff]
        %v1389 = vld [vmem:[#allocation8 + $0x250] sm:$0xff]
        %v1390 = vld [vmem:[#allocation8 + $0x258] sm:$0xff]
        %v1391 = vld [vmem:[#allocation8 + $0x260] sm:$0xff]
        %v1392 = vld [vmem:[#allocation8 + $0x268] sm:$0xff]
        %v1393 = vld [vmem:[#allocation8 + $0x270] sm:$0xff]
        %v1394 = vld [vmem:[#allocation8 + $0x278] sm:$0xff]
        %v1395 = vld [vmem:[#allocation8 + $0x280] sm:$0xff]
        %v1396 = vld [vmem:[#allocation8 + $0x288] sm:$0xff]
        %v1397 = vld [vmem:[#allocation8 + $0x290] sm:$0xff]
        %v1398 = vld [vmem:[#allocation8 + $0x298] sm:$0xff]
        %v1399 = vld [vmem:[#allocation8 + $0x2a0] sm:$0xff]
        %v1400 = vld [vmem:[#allocation8 + $0x2a8] sm:$0xff]
        %v1401 = vld [vmem:[#allocation8 + $0x2b0] sm:$0xff]
        %v1402 = vld [vmem:[#allocation8 + $0x2b8] sm:$0xff]
        %v1403 = vld [vmem:[#allocation8 + $0x2c0] sm:$0xff]
        %v1404 = vld [vmem:[#allocation8 + $0x2c8] sm:$0xff]
        %v1405 = vld [vmem:[#allocation8 + $0x2d0] sm:$0xff]
        %v1406 = vld [vmem:[#allocation8 + $0x2d8] sm:$0xff]
        %v1407 = vld [vmem:[#allocation8 + $0x2e0] sm:$0xff]
        %v1408 = vld [vmem:[#allocation8 + $0x2e8] sm:$0xff]
        %v1409 = vld [vmem:[#allocation8 + $0x2f0] sm:$0xff]
        %v1410 = vld [vmem:[#allocation8 + $0x2f8] sm:$0xff]
        %v1411 = vld [vmem:[#allocation8 + $0x300] sm:$0xff]
        %v1412 = vld [vmem:[#allocation8 + $0x308] sm:$0xff]
        %v1413 = vld [vmem:[#allocation8 + $0x310] sm:$0xff]
        %v1414 = vld [vmem:[#allocation8 + $0x318] sm:$0xff]
        %v1415 = vld [vmem:[#allocation8 + $0x320] sm:$0xff]
        %v1416 = vld [vmem:[#allocation8 + $0x328] sm:$0xff]
        %v1417 = vld [vmem:[#allocation8 + $0x330] sm:$0xff]
        %v1418 = vld [vmem:[#allocation8 + $0x338] sm:$0xff]
        %v1419 = vld [vmem:[#allocation8 + $0x340] sm:$0xff]
        %v1420 = vld [vmem:[#allocation8 + $0x348] sm:$0xff]
        %v1421 = vld [vmem:[#allocation8 + $0x350] sm:$0xff]
        %v1422 = vld [vmem:[#allocation8 + $0x358] sm:$0xff]
        %v1423 = vld [vmem:[#allocation8 + $0x360] sm:$0xff]
        %v1424 = vld [vmem:[#allocation8 + $0x368] sm:$0xff]
        %v1425 = vld [vmem:[#allocation8 + $0x370] sm:$0xff]
        %v1426 = vld [vmem:[#allocation8 + $0x378] sm:$0xff]
        %v1427 = vld [vmem:[#allocation8 + $0x380] sm:$0xff]
        %v1428 = vld [vmem:[#allocation8 + $0x388] sm:$0xff]
        %v1429 = vld [vmem:[#allocation8 + $0x390] sm:$0xff]
        %v1430 = vld [vmem:[#allocation8 + $0x398] sm:$0xff]
        %v1431 = vld [vmem:[#allocation8 + $0x3a0] sm:$0xff]
        %v1432 = vld [vmem:[#allocation8 + $0x3a8] sm:$0xff]
        %v1433 = vld [vmem:[#allocation8 + $0x3b0] sm:$0xff]
        %v1434 = vld [vmem:[#allocation8 + $0x3b8] sm:$0xff]
        %v1435 = vld [vmem:[#allocation8 + $0x3c0] sm:$0xff]
        %v1436 = vld [vmem:[#allocation8 + $0x3c8] sm:$0xff]
        %v1437 = vld [vmem:[#allocation8 + $0x3d0] sm:$0xff]
        %v1438 = vld [vmem:[#allocation8 + $0x3d8] sm:$0xff]
        %v1439 = vld [vmem:[#allocation8 + $0x3e0] sm:$0xff]
        %v1440 = vld [vmem:[#allocation8 + $0x3e8] sm:$0xff]
        %v1441 = vld [vmem:[#allocation8 + $0x3f0] sm:$0xff]
        %v1442 = vld [vmem:[#allocation8 + $0x3f8] sm:$0xff]
        %v1443 = vld [vmem:[#allocation10] sm:$0xf]
        %v1445 = vperm.slane %v1443, 0
        %v1446 = vperm.slane %v1443, 1
        %v1447 = vperm.slane %v1443, 2
        %v1448 = vperm.slane %v1443, 3
        %v1581 = vunpack.c.l.b16 %v1315
        %v1582 = vunpack.c.h.b16 %v1315
        %v1583 = vunpack.c.l.b16 %v1316
        %v1584 = vunpack.c.h.b16 %v1316
        %v1585 = vunpack.c.l.b16 %v1317
        %v1586 = vunpack.c.h.b16 %v1317
        %v1587 = vunpack.c.l.b16 %v1318
        %v1588 = vunpack.c.h.b16 %v1318
        %v1589 = vunpack.c.l.b16 %v1319
        %v1590 = vunpack.c.h.b16 %v1319
        %v1591 = vunpack.c.l.b16 %v1320
        %v1592 = vunpack.c.h.b16 %v1320
        %v1593 = vunpack.c.l.b16 %v1321
        %v1594 = vunpack.c.h.b16 %v1321
        %v1595 = vunpack.c.l.b16 %v1322
        %v1596 = vunpack.c.h.b16 %v1322
        %v1597 = vunpack.c.l.b16 %v1323
        %v1598 = vunpack.c.h.b16 %v1323
        %v1599 = vunpack.c.l.b16 %v1324
        %v1600 = vunpack.c.h.b16 %v1324
        %v1601 = vunpack.c.l.b16 %v1325
        %v1602 = vunpack.c.h.b16 %v1325
        %v1603 = vunpack.c.l.b16 %v1326
        %v1604 = vunpack.c.h.b16 %v1326
        %v1605 = vunpack.c.l.b16 %v1327
        %v1606 = vunpack.c.h.b16 %v1327
        %v1607 = vunpack.c.l.b16 %v1328
        %v1608 = vunpack.c.h.b16 %v1328
        %v1609 = vunpack.c.l.b16 %v1329
        %v1610 = vunpack.c.h.b16 %v1329
        %v1611 = vunpack.c.l.b16 %v1330
        %v1612 = vunpack.c.h.b16 %v1330
        %v1613 = vunpack.c.l.b16 %v1331
        %v1614 = vunpack.c.h.b16 %v1331
        %v1615 = vunpack.c.l.b16 %v1332
        %v1616 = vunpack.c.h.b16 %v1332
        %v1617 = vunpack.c.l.b16 %v1333
        %v1618 = vunpack.c.h.b16 %v1333
        %v1619 = vunpack.c.l.b16 %v1334
        %v1620 = vunpack.c.h.b16 %v1334
        %v1621 = vunpack.c.l.b16 %v1335
        %v1622 = vunpack.c.h.b16 %v1335
        %v1623 = vunpack.c.l.b16 %v1336
        %v1624 = vunpack.c.h.b16 %v1336
        %v1625 = vunpack.c.l.b16 %v1337
        %v1626 = vunpack.c.h.b16 %v1337
        %v1627 = vunpack.c.l.b16 %v1338
        %v1628 = vunpack.c.h.b16 %v1338
        %v1629 = vunpack.c.l.b16 %v1339
        %v1630 = vunpack.c.h.b16 %v1339
        %v1631 = vunpack.c.l.b16 %v1340
        %v1632 = vunpack.c.h.b16 %v1340
        %v1633 = vunpack.c.l.b16 %v1341
        %v1634 = vunpack.c.h.b16 %v1341
        %v1635 = vunpack.c.l.b16 %v1342
        %v1636 = vunpack.c.h.b16 %v1342
        %v1637 = vunpack.c.l.b16 %v1343
        %v1638 = vunpack.c.h.b16 %v1343
        %v1639 = vunpack.c.l.b16 %v1344
        %v1640 = vunpack.c.h.b16 %v1344
        %v1641 = vunpack.c.l.b16 %v1345
        %v1642 = vunpack.c.h.b16 %v1345
        %v1643 = vunpack.c.l.b16 %v1346
        %v1644 = vunpack.c.h.b16 %v1346
        %v1645 = vunpack.c.l.b16 %v1347
        %v1646 = vunpack.c.h.b16 %v1347
        %v1647 = vunpack.c.l.b16 %v1348
        %v1648 = vunpack.c.h.b16 %v1348
        %v1649 = vunpack.c.l.b16 %v1349
        %v1650 = vunpack.c.h.b16 %v1349
        %v1651 = vunpack.c.l.b16 %v1350
        %v1652 = vunpack.c.h.b16 %v1350
        %v1653 = vunpack.c.l.b16 %v1351
        %v1654 = vunpack.c.h.b16 %v1351
        %v1655 = vunpack.c.l.b16 %v1352
        %v1656 = vunpack.c.h.b16 %v1352
        %v1657 = vunpack.c.l.b16 %v1353
        %v1658 = vunpack.c.h.b16 %v1353
        %v1659 = vunpack.c.l.b16 %v1354
        %v1660 = vunpack.c.h.b16 %v1354
        %v1661 = vunpack.c.l.b16 %v1355
        %v1662 = vunpack.c.h.b16 %v1355
        %v1663 = vunpack.c.l.b16 %v1356
        %v1664 = vunpack.c.h.b16 %v1356
        %v1665 = vunpack.c.l.b16 %v1357
        %v1666 = vunpack.c.h.b16 %v1357
        %v1667 = vunpack.c.l.b16 %v1358
        %v1668 = vunpack.c.h.b16 %v1358
        %v1669 = vunpack.c.l.b16 %v1359
        %v1670 = vunpack.c.h.b16 %v1359
        %v1671 = vunpack.c.l.b16 %v1360
        %v1672 = vunpack.c.h.b16 %v1360
        %v1673 = vunpack.c.l.b16 %v1361
        %v1674 = vunpack.c.h.b16 %v1361
        %v1675 = vunpack.c.l.b16 %v1362
        %v1676 = vunpack.c.h.b16 %v1362
        %v1677 = vunpack.c.l.b16 %v1363
        %v1678 = vunpack.c.h.b16 %v1363
        %v1679 = vunpack.c.l.b16 %v1364
        %v1680 = vunpack.c.h.b16 %v1364
        %v1681 = vunpack.c.l.b16 %v1365
        %v1682 = vunpack.c.h.b16 %v1365
        %v1683 = vunpack.c.l.b16 %v1366
        %v1684 = vunpack.c.h.b16 %v1366
        %v1685 = vunpack.c.l.b16 %v1367
        %v1686 = vunpack.c.h.b16 %v1367
        %v1687 = vunpack.c.l.b16 %v1368
        %v1688 = vunpack.c.h.b16 %v1368
        %v1689 = vunpack.c.l.b16 %v1369
        %v1690 = vunpack.c.h.b16 %v1369
        %v1691 = vunpack.c.l.b16 %v1370
        %v1692 = vunpack.c.h.b16 %v1370
        %v1693 = vunpack.c.l.b16 %v1371
        %v1694 = vunpack.c.h.b16 %v1371
        %v1695 = vunpack.c.l.b16 %v1372
        %v1696 = vunpack.c.h.b16 %v1372
        %v1697 = vunpack.c.l.b16 %v1373
        %v1698 = vunpack.c.h.b16 %v1373
        %v1699 = vunpack.c.l.b16 %v1374
        %v1700 = vunpack.c.h.b16 %v1374
        %v1701 = vunpack.c.l.b16 %v1375
        %v1702 = vunpack.c.h.b16 %v1375
        %v1703 = vunpack.c.l.b16 %v1376
        %v1704 = vunpack.c.h.b16 %v1376
        %v1705 = vunpack.c.l.b16 %v1377
        %v1706 = vunpack.c.h.b16 %v1377
        %v1707 = vunpack.c.l.b16 %v1378
        %v1708 = vunpack.c.h.b16 %v1378
        %v1709 = vunpack.c.l.b16 %v1379
        %v1710 = vunpack.c.h.b16 %v1379
        %v1711 = vunpack.c.l.b16 %v1380
        %v1712 = vunpack.c.h.b16 %v1380
        %v1713 = vunpack.c.l.b16 %v1381
        %v1714 = vunpack.c.h.b16 %v1381
        %v1715 = vunpack.c.l.b16 %v1382
        %v1716 = vunpack.c.h.b16 %v1382
        %v1717 = vunpack.c.l.b16 %v1383
        %v1718 = vunpack.c.h.b16 %v1383
        %v1719 = vunpack.c.l.b16 %v1384
        %v1720 = vunpack.c.h.b16 %v1384
        %v1721 = vunpack.c.l.b16 %v1385
        %v1722 = vunpack.c.h.b16 %v1385
        %v1723 = vunpack.c.l.b16 %v1386
        %v1724 = vunpack.c.h.b16 %v1386
        %v1725 = vunpack.c.l.b16 %v1387
        %v1726 = vunpack.c.h.b16 %v1387
        %v1727 = vunpack.c.l.b16 %v1388
        %v1728 = vunpack.c.h.b16 %v1388
        %v1729 = vunpack.c.l.b16 %v1389
        %v1730 = vunpack.c.h.b16 %v1389
        %v1731 = vunpack.c.l.b16 %v1390
        %v1732 = vunpack.c.h.b16 %v1390
        %v1733 = vunpack.c.l.b16 %v1391
        %v1734 = vunpack.c.h.b16 %v1391
        %v1735 = vunpack.c.l.b16 %v1392
        %v1736 = vunpack.c.h.b16 %v1392
        %v1737 = vunpack.c.l.b16 %v1393
        %v1738 = vunpack.c.h.b16 %v1393
        %v1739 = vunpack.c.l.b16 %v1394
        %v1740 = vunpack.c.h.b16 %v1394
        %v1741 = vunpack.c.l.b16 %v1395
        %v1742 = vunpack.c.h.b16 %v1395
        %v1743 = vunpack.c.l.b16 %v1396
        %v1744 = vunpack.c.h.b16 %v1396
        %v1745 = vunpack.c.l.b16 %v1397
        %v1746 = vunpack.c.h.b16 %v1397
        %v1747 = vunpack.c.l.b16 %v1398
        %v1748 = vunpack.c.h.b16 %v1398
        %v1749 = vunpack.c.l.b16 %v1399
        %v1750 = vunpack.c.h.b16 %v1399
        %v1751 = vunpack.c.l.b16 %v1400
        %v1752 = vunpack.c.h.b16 %v1400
        %v1753 = vunpack.c.l.b16 %v1401
        %v1754 = vunpack.c.h.b16 %v1401
        %v1755 = vunpack.c.l.b16 %v1402
        %v1756 = vunpack.c.h.b16 %v1402
        %v1757 = vunpack.c.l.b16 %v1403
        %v1758 = vunpack.c.h.b16 %v1403
        %v1759 = vunpack.c.l.b16 %v1404
        %v1760 = vunpack.c.h.b16 %v1404
        %v1761 = vunpack.c.l.b16 %v1405
        %v1762 = vunpack.c.h.b16 %v1405
        %v1763 = vunpack.c.l.b16 %v1406
        %v1764 = vunpack.c.h.b16 %v1406
        %v1765 = vunpack.c.l.b16 %v1407
        %v1766 = vunpack.c.h.b16 %v1407
        %v1767 = vunpack.c.l.b16 %v1408
        %v1768 = vunpack.c.h.b16 %v1408
        %v1769 = vunpack.c.l.b16 %v1409
        %v1770 = vunpack.c.h.b16 %v1409
        %v1771 = vunpack.c.l.b16 %v1410
        %v1772 = vunpack.c.h.b16 %v1410
        %v1773 = vunpack.c.l.b16 %v1411
        %v1774 = vunpack.c.h.b16 %v1411
        %v1775 = vunpack.c.l.b16 %v1412
        %v1776 = vunpack.c.h.b16 %v1412
        %v1777 = vunpack.c.l.b16 %v1413
        %v1778 = vunpack.c.h.b16 %v1413
        %v1779 = vunpack.c.l.b16 %v1414
        %v1780 = vunpack.c.h.b16 %v1414
        %v1781 = vunpack.c.l.b16 %v1415
        %v1782 = vunpack.c.h.b16 %v1415
        %v1783 = vunpack.c.l.b16 %v1416
        %v1784 = vunpack.c.h.b16 %v1416
        %v1785 = vunpack.c.l.b16 %v1417
        %v1786 = vunpack.c.h.b16 %v1417
        %v1787 = vunpack.c.l.b16 %v1418
        %v1788 = vunpack.c.h.b16 %v1418
        %v1789 = vunpack.c.l.b16 %v1419
        %v1790 = vunpack.c.h.b16 %v1419
        %v1791 = vunpack.c.l.b16 %v1420
        %v1792 = vunpack.c.h.b16 %v1420
        %v1793 = vunpack.c.l.b16 %v1421
        %v1794 = vunpack.c.h.b16 %v1421
        %v1795 = vunpack.c.l.b16 %v1422
        %v1796 = vunpack.c.h.b16 %v1422
        %v1797 = vunpack.c.l.b16 %v1423
        %v1798 = vunpack.c.h.b16 %v1423
        %v1799 = vunpack.c.l.b16 %v1424
        %v1800 = vunpack.c.h.b16 %v1424
        %v1801 = vunpack.c.l.b16 %v1425
        %v1802 = vunpack.c.h.b16 %v1425
        %v1803 = vunpack.c.l.b16 %v1426
        %v1804 = vunpack.c.h.b16 %v1426
        %v1805 = vunpack.c.l.b16 %v1427
        %v1806 = vunpack.c.h.b16 %v1427
        %v1807 = vunpack.c.l.b16 %v1428
        %v1808 = vunpack.c.h.b16 %v1428
        %v1809 = vunpack.c.l.b16 %v1429
        %v1810 = vunpack.c.h.b16 %v1429
        %v1811 = vunpack.c.l.b16 %v1430
        %v1812 = vunpack.c.h.b16 %v1430
        %v1813 = vunpack.c.l.b16 %v1431
        %v1814 = vunpack.c.h.b16 %v1431
        %v1815 = vunpack.c.l.b16 %v1432
        %v1816 = vunpack.c.h.b16 %v1432
        %v1817 = vunpack.c.l.b16 %v1433
        %v1818 = vunpack.c.h.b16 %v1433
        %v1819 = vunpack.c.l.b16 %v1434
        %v1820 = vunpack.c.h.b16 %v1434
        %v1821 = vunpack.c.l.b16 %v1435
        %v1822 = vunpack.c.h.b16 %v1435
        %v1823 = vunpack.c.l.b16 %v1436
        %v1824 = vunpack.c.h.b16 %v1436
        %v1825 = vunpack.c.l.b16 %v1437
        %v1826 = vunpack.c.h.b16 %v1437
        %v1827 = vunpack.c.l.b16 %v1438
        %v1828 = vunpack.c.h.b16 %v1438
        %v1829 = vunpack.c.l.b16 %v1439
        %v1830 = vunpack.c.h.b16 %v1439
        %v1831 = vunpack.c.l.b16 %v1440
        %v1832 = vunpack.c.h.b16 %v1440
        %v1833 = vunpack.c.l.b16 %v1441
        %v1834 = vunpack.c.h.b16 %v1441
        %v1835 = vunpack.c.l.b16 %v1442
        %v1836 = vunpack.c.h.b16 %v1442
        %v1837 = vpack.c.b16 %v1585, %v1581
        %v1838 = vpack.c.b16 %v1586, %v1582
        %v1839 = vpack.c.b16 %v1587, %v1583
        %v1840 = vpack.c.b16 %v1588, %v1584
        %v1841 = vpack.c.b16 %v1593, %v1589
        %v1842 = vpack.c.b16 %v1594, %v1590
        %v1843 = vpack.c.b16 %v1595, %v1591
        %v1844 = vpack.c.b16 %v1596, %v1592
        %v1845 = vpack.c.b16 %v1601, %v1597
        %v1846 = vpack.c.b16 %v1602, %v1598
        %v1847 = vpack.c.b16 %v1603, %v1599
        %v1848 = vpack.c.b16 %v1604, %v1600
        %v1849 = vpack.c.b16 %v1609, %v1605
        %v1850 = vpack.c.b16 %v1610, %v1606
        %v1851 = vpack.c.b16 %v1611, %v1607
        %v1852 = vpack.c.b16 %v1612, %v1608
        %v1853 = vpack.c.b16 %v1617, %v1613
        %v1854 = vpack.c.b16 %v1618, %v1614
        %v1855 = vpack.c.b16 %v1619, %v1615
        %v1856 = vpack.c.b16 %v1620, %v1616
        %v1857 = vpack.c.b16 %v1625, %v1621
        %v1858 = vpack.c.b16 %v1626, %v1622
        %v1859 = vpack.c.b16 %v1627, %v1623
        %v1860 = vpack.c.b16 %v1628, %v1624
        %v1861 = vpack.c.b16 %v1633, %v1629
        %v1862 = vpack.c.b16 %v1634, %v1630
        %v1863 = vpack.c.b16 %v1635, %v1631
        %v1864 = vpack.c.b16 %v1636, %v1632
        %v1865 = vpack.c.b16 %v1641, %v1637
        %v1866 = vpack.c.b16 %v1642, %v1638
        %v1867 = vpack.c.b16 %v1643, %v1639
        %v1868 = vpack.c.b16 %v1644, %v1640
        %v1869 = vpack.c.b16 %v1649, %v1645
        %v1870 = vpack.c.b16 %v1650, %v1646
        %v1871 = vpack.c.b16 %v1651, %v1647
        %v1872 = vpack.c.b16 %v1652, %v1648
        %v1873 = vpack.c.b16 %v1657, %v1653
        %v1874 = vpack.c.b16 %v1658, %v1654
        %v1875 = vpack.c.b16 %v1659, %v1655
        %v1876 = vpack.c.b16 %v1660, %v1656
        %v1877 = vpack.c.b16 %v1665, %v1661
        %v1878 = vpack.c.b16 %v1666, %v1662
        %v1879 = vpack.c.b16 %v1667, %v1663
        %v1880 = vpack.c.b16 %v1668, %v1664
        %v1881 = vpack.c.b16 %v1673, %v1669
        %v1882 = vpack.c.b16 %v1674, %v1670
        %v1883 = vpack.c.b16 %v1675, %v1671
        %v1884 = vpack.c.b16 %v1676, %v1672
        %v1885 = vpack.c.b16 %v1681, %v1677
        %v1886 = vpack.c.b16 %v1682, %v1678
        %v1887 = vpack.c.b16 %v1683, %v1679
        %v1888 = vpack.c.b16 %v1684, %v1680
        %v1889 = vpack.c.b16 %v1689, %v1685
        %v1890 = vpack.c.b16 %v1690, %v1686
        %v1891 = vpack.c.b16 %v1691, %v1687
        %v1892 = vpack.c.b16 %v1692, %v1688
        %v1893 = vpack.c.b16 %v1697, %v1693
        %v1894 = vpack.c.b16 %v1698, %v1694
        %v1895 = vpack.c.b16 %v1699, %v1695
        %v1896 = vpack.c.b16 %v1700, %v1696
        %v1897 = vpack.c.b16 %v1705, %v1701
        %v1898 = vpack.c.b16 %v1706, %v1702
        %v1899 = vpack.c.b16 %v1707, %v1703
        %v1900 = vpack.c.b16 %v1708, %v1704
        %v1901 = vpack.c.b16 %v1713, %v1709
        %v1902 = vpack.c.b16 %v1714, %v1710
        %v1903 = vpack.c.b16 %v1715, %v1711
        %v1904 = vpack.c.b16 %v1716, %v1712
        %v1905 = vpack.c.b16 %v1721, %v1717
        %v1906 = vpack.c.b16 %v1722, %v1718
        %v1907 = vpack.c.b16 %v1723, %v1719
        %v1908 = vpack.c.b16 %v1724, %v1720
        %v1909 = vpack.c.b16 %v1729, %v1725
        %v1910 = vpack.c.b16 %v1730, %v1726
        %v1911 = vpack.c.b16 %v1731, %v1727
        %v1912 = vpack.c.b16 %v1732, %v1728
        %v1913 = vpack.c.b16 %v1737, %v1733
        %v1914 = vpack.c.b16 %v1738, %v1734
        %v1915 = vpack.c.b16 %v1739, %v1735
        %v1916 = vpack.c.b16 %v1740, %v1736
        %v1917 = vpack.c.b16 %v1745, %v1741
        %v1918 = vpack.c.b16 %v1746, %v1742
        %v1919 = vpack.c.b16 %v1747, %v1743
        %v1920 = vpack.c.b16 %v1748, %v1744
        %v1921 = vpack.c.b16 %v1753, %v1749
        %v1922 = vpack.c.b16 %v1754, %v1750
        %v1923 = vpack.c.b16 %v1755, %v1751
        %v1924 = vpack.c.b16 %v1756, %v1752
        %v1925 = vpack.c.b16 %v1761, %v1757
        %v1926 = vpack.c.b16 %v1762, %v1758
        %v1927 = vpack.c.b16 %v1763, %v1759
        %v1928 = vpack.c.b16 %v1764, %v1760
        %v1929 = vpack.c.b16 %v1769, %v1765
        %v1930 = vpack.c.b16 %v1770, %v1766
        %v1931 = vpack.c.b16 %v1771, %v1767
        %v1932 = vpack.c.b16 %v1772, %v1768
        %v1933 = vpack.c.b16 %v1777, %v1773
        %v1934 = vpack.c.b16 %v1778, %v1774
        %v1935 = vpack.c.b16 %v1779, %v1775
        %v1936 = vpack.c.b16 %v1780, %v1776
        %v1937 = vpack.c.b16 %v1785, %v1781
        %v1938 = vpack.c.b16 %v1786, %v1782
        %v1939 = vpack.c.b16 %v1787, %v1783
        %v1940 = vpack.c.b16 %v1788, %v1784
        %v1941 = vpack.c.b16 %v1793, %v1789
        %v1942 = vpack.c.b16 %v1794, %v1790
        %v1943 = vpack.c.b16 %v1795, %v1791
        %v1944 = vpack.c.b16 %v1796, %v1792
        %v1945 = vpack.c.b16 %v1801, %v1797
        %v1946 = vpack.c.b16 %v1802, %v1798
        %v1947 = vpack.c.b16 %v1803, %v1799
        %v1948 = vpack.c.b16 %v1804, %v1800
        %v1949 = vpack.c.b16 %v1809, %v1805
        %v1950 = vpack.c.b16 %v1810, %v1806
        %v1951 = vpack.c.b16 %v1811, %v1807
        %v1952 = vpack.c.b16 %v1812, %v1808
        %v1953 = vpack.c.b16 %v1817, %v1813
        %v1954 = vpack.c.b16 %v1818, %v1814
        %v1955 = vpack.c.b16 %v1819, %v1815
        %v1956 = vpack.c.b16 %v1820, %v1816
        %v1957 = vpack.c.b16 %v1825, %v1821
        %v1958 = vpack.c.b16 %v1826, %v1822
        %v1959 = vpack.c.b16 %v1827, %v1823
        %v1960 = vpack.c.b16 %v1828, %v1824
        %v1961 = vpack.c.b16 %v1833, %v1829
        %v1962 = vpack.c.b16 %v1834, %v1830
        %v1963 = vpack.c.b16 %v1835, %v1831
        %v1964 = vpack.c.b16 %v1836, %v1832
        %2093 = vmatpush.bf16.msra.mxu0 %v1865
        %2094 = vmatpush.bf16.msra.mxu0 %v1861
        %2095 = vmatpush.bf16.msra.mxu0 %v1857
        %2096 = vmatpush.bf16.msra.mxu0 %v1853
        %2097 = vmatpush.bf16.msra.mxu0 %v1849
        %2098 = vmatpush.bf16.msra.mxu0 %v1845
        %2099 = vmatpush.bf16.msra.mxu0 %v1841
        %2100 = vmatpush.bf16.msra.mxu0 %v1837
        %2101 = vmatmul.bf16.gmra.mxu0 %v1311
        %v2102 = vpop.f32.mrf.mxu0
        %v2103 = vadd.f32 %v1445, %v2102
        %v2104 = vpop.f32.mrf.mxu0
        %2105 = vdwg.mxu0
        %2106 = vmatpush.bf16.msra.mxu0 %v1897
        %2107 = vmatpush.bf16.msra.mxu0 %v1893
        %2108 = vmatpush.bf16.msra.mxu0 %v1889
        %2109 = vmatpush.bf16.msra.mxu0 %v1885
        %2110 = vmatpush.bf16.msra.mxu0 %v1881
        %2111 = vmatpush.bf16.msra.mxu0 %v1877
        %2112 = vmatpush.bf16.msra.mxu0 %v1873
        %2113 = vmatpush.bf16.msra.mxu0 %v1869
        %2114 = vmatmul.bf16.gmra.mxu0 %v1312
        %v2115 = vpop.f32.mrf.mxu0
        %v2116 = vadd.f32 %v2103, %v2115
        %v2117 = vpop.f32.mrf.mxu0
        %2118 = vdwg.mxu0
        %2119 = vmatpush.bf16.msra.mxu0 %v1929
        %2120 = vmatpush.bf16.msra.mxu0 %v1925
        %2121 = vmatpush.bf16.msra.mxu0 %v1921
        %2122 = vmatpush.bf16.msra.mxu0 %v1917
        %2123 = vmatpush.bf16.msra.mxu0 %v1913
        %2124 = vmatpush.bf16.msra.mxu0 %v1909
        %2125 = vmatpush.bf16.msra.mxu0 %v1905
        %2126 = vmatpush.bf16.msra.mxu0 %v1901
        %2127 = vmatmul.bf16.gmra.mxu0 %v1313
        %v2128 = vpop.f32.mrf.mxu0
        %v2129 = vadd.f32 %v2116, %v2128
        %v2130 = vpop.f32.mrf.mxu0
        %2131 = vdwg.mxu0
        %2132 = vmatpush.bf16.msra.mxu0 %v1961
        %2133 = vmatpush.bf16.msra.mxu0 %v1957
        %2134 = vmatpush.bf16.msra.mxu0 %v1953
        %2135 = vmatpush.bf16.msra.mxu0 %v1949
        %2136 = vmatpush.bf16.msra.mxu0 %v1945
        %2137 = vmatpush.bf16.msra.mxu0 %v1941
        %2138 = vmatpush.bf16.msra.mxu0 %v1937
        %2139 = vmatpush.bf16.msra.mxu0 %v1933
        %2140 = vmatmul.bf16.gmra.mxu0 %v1314
        %v2141 = vpop.f32.mrf.mxu0
        %v2142 = vadd.f32 %v2129, %v2141
        %v2143 = vpop.f32.mrf.mxu0
        %2144 = vdwg.mxu0
        %2145 = vmatpush.bf16.msra.mxu0 %v1866
        %2146 = vmatpush.bf16.msra.mxu0 %v1862
        %2147 = vmatpush.bf16.msra.mxu0 %v1858
        %2148 = vmatpush.bf16.msra.mxu0 %v1854
        %2149 = vmatpush.bf16.msra.mxu0 %v1850
        %2150 = vmatpush.bf16.msra.mxu0 %v1846
        %2151 = vmatpush.bf16.msra.mxu0 %v1842
        %2152 = vmatpush.bf16.msra.mxu0 %v1838
        %2153 = vmatmul.bf16.gmra.mxu0 %v1311
        %v2154 = vpop.f32.mrf.mxu0
        %v2155 = vadd.f32 %v1446, %v2154
        %v2156 = vpop.f32.mrf.mxu0
        %2157 = vdwg.mxu0
        %2158 = vmatpush.bf16.msra.mxu0 %v1898
        %2159 = vmatpush.bf16.msra.mxu0 %v1894
        %2160 = vmatpush.bf16.msra.mxu0 %v1890
        %2161 = vmatpush.bf16.msra.mxu0 %v1886
        %2162 = vmatpush.bf16.msra.mxu0 %v1882
        %2163 = vmatpush.bf16.msra.mxu0 %v1878
        %2164 = vmatpush.bf16.msra.mxu0 %v1874
        %2165 = vmatpush.bf16.msra.mxu0 %v1870
        %2166 = vmatmul.bf16.gmra.mxu0 %v1312
        %v2167 = vpop.f32.mrf.mxu0
        %v2168 = vadd.f32 %v2155, %v2167
        %v2169 = vpop.f32.mrf.mxu0
        %2170 = vdwg.mxu0
        %2171 = vmatpush.bf16.msra.mxu0 %v1930
        %2172 = vmatpush.bf16.msra.mxu0 %v1926
        %2173 = vmatpush.bf16.msra.mxu0 %v1922
        %2174 = vmatpush.bf16.msra.mxu0 %v1918
        %2175 = vmatpush.bf16.msra.mxu0 %v1914
        %2176 = vmatpush.bf16.msra.mxu0 %v1910
        %2177 = vmatpush.bf16.msra.mxu0 %v1906
        %2178 = vmatpush.bf16.msra.mxu0 %v1902
        %2179 = vmatmul.bf16.gmra.mxu0 %v1313
        %v2180 = vpop.f32.mrf.mxu0
        %v2181 = vadd.f32 %v2168, %v2180
        %v2182 = vpop.f32.mrf.mxu0
        %2183 = vdwg.mxu0
        %2184 = vmatpush.bf16.msra.mxu0 %v1962
        %2185 = vmatpush.bf16.msra.mxu0 %v1958
        %2186 = vmatpush.bf16.msra.mxu0 %v1954
        %2187 = vmatpush.bf16.msra.mxu0 %v1950
        %2188 = vmatpush.bf16.msra.mxu0 %v1946
        %2189 = vmatpush.bf16.msra.mxu0 %v1942
        %2190 = vmatpush.bf16.msra.mxu0 %v1938
        %2191 = vmatpush.bf16.msra.mxu0 %v1934
        %2192 = vmatmul.bf16.gmra.mxu0 %v1314
        %v2193 = vpop.f32.mrf.mxu0
        %v2194 = vadd.f32 %v2181, %v2193
        %v2195 = vpop.f32.mrf.mxu0
        %2196 = vdwg.mxu0
        %2197 = vmatpush.bf16.msra.mxu0 %v1867
        %2198 = vmatpush.bf16.msra.mxu0 %v1863
        %2199 = vmatpush.bf16.msra.mxu0 %v1859
        %2200 = vmatpush.bf16.msra.mxu0 %v1855
        %2201 = vmatpush.bf16.msra.mxu0 %v1851
        %2202 = vmatpush.bf16.msra.mxu0 %v1847
        %2203 = vmatpush.bf16.msra.mxu0 %v1843
        %2204 = vmatpush.bf16.msra.mxu0 %v1839
        %2205 = vmatmul.bf16.gmra.mxu0 %v1311
        %v2206 = vpop.f32.mrf.mxu0
        %v2207 = vadd.f32 %v1447, %v2206
        %v2208 = vpop.f32.mrf.mxu0
        %2209 = vdwg.mxu0
        %2210 = vmatpush.bf16.msra.mxu0 %v1899
        %2211 = vmatpush.bf16.msra.mxu0 %v1895
        %2212 = vmatpush.bf16.msra.mxu0 %v1891
        %2213 = vmatpush.bf16.msra.mxu0 %v1887
        %2214 = vmatpush.bf16.msra.mxu0 %v1883
        %2215 = vmatpush.bf16.msra.mxu0 %v1879
        %2216 = vmatpush.bf16.msra.mxu0 %v1875
        %2217 = vmatpush.bf16.msra.mxu0 %v1871
        %2218 = vmatmul.bf16.gmra.mxu0 %v1312
        %v2219 = vpop.f32.mrf.mxu0
        %v2220 = vadd.f32 %v2207, %v2219
        %v2221 = vpop.f32.mrf.mxu0
        %2222 = vdwg.mxu0
        %2223 = vmatpush.bf16.msra.mxu0 %v1931
        %2224 = vmatpush.bf16.msra.mxu0 %v1927
        %2225 = vmatpush.bf16.msra.mxu0 %v1923
        %2226 = vmatpush.bf16.msra.mxu0 %v1919
        %2227 = vmatpush.bf16.msra.mxu0 %v1915
        %2228 = vmatpush.bf16.msra.mxu0 %v1911
        %2229 = vmatpush.bf16.msra.mxu0 %v1907
        %2230 = vmatpush.bf16.msra.mxu0 %v1903
        %2231 = vmatmul.bf16.gmra.mxu0 %v1313
        %v2232 = vpop.f32.mrf.mxu0
        %v2233 = vadd.f32 %v2220, %v2232
        %v2234 = vpop.f32.mrf.mxu0
        %2235 = vdwg.mxu0
        %2236 = vmatpush.bf16.msra.mxu0 %v1963
        %2237 = vmatpush.bf16.msra.mxu0 %v1959
        %2238 = vmatpush.bf16.msra.mxu0 %v1955
        %2239 = vmatpush.bf16.msra.mxu0 %v1951
        %2240 = vmatpush.bf16.msra.mxu0 %v1947
        %2241 = vmatpush.bf16.msra.mxu0 %v1943
        %2242 = vmatpush.bf16.msra.mxu0 %v1939
        %2243 = vmatpush.bf16.msra.mxu0 %v1935
        %2244 = vmatmul.bf16.gmra.mxu0 %v1314
        %v2245 = vpop.f32.mrf.mxu0
        %v2246 = vadd.f32 %v2233, %v2245
        %v2247 = vpop.f32.mrf.mxu0
        %2248 = vdwg.mxu0
        %2249 = vmatpush.bf16.msra.mxu0 %v1868
        %2250 = vmatpush.bf16.msra.mxu0 %v1864
        %2251 = vmatpush.bf16.msra.mxu0 %v1860
        %2252 = vmatpush.bf16.msra.mxu0 %v1856
        %2253 = vmatpush.bf16.msra.mxu0 %v1852
        %2254 = vmatpush.bf16.msra.mxu0 %v1848
        %2255 = vmatpush.bf16.msra.mxu0 %v1844
        %2256 = vmatpush.bf16.msra.mxu0 %v1840
        %2257 = vmatmul.bf16.gmra.mxu0 %v1311
        %v2258 = vpop.f32.mrf.mxu0
        %v2259 = vadd.f32 %v1448, %v2258
        %v2260 = vpop.f32.mrf.mxu0
        %2261 = vdwg.mxu0
        %2262 = vmatpush.bf16.msra.mxu0 %v1900
        %2263 = vmatpush.bf16.msra.mxu0 %v1896
        %2264 = vmatpush.bf16.msra.mxu0 %v1892
        %2265 = vmatpush.bf16.msra.mxu0 %v1888
        %2266 = vmatpush.bf16.msra.mxu0 %v1884
        %2267 = vmatpush.bf16.msra.mxu0 %v1880
        %2268 = vmatpush.bf16.msra.mxu0 %v1876
        %2269 = vmatpush.bf16.msra.mxu0 %v1872
        %2270 = vmatmul.bf16.gmra.mxu0 %v1312
        %v2271 = vpop.f32.mrf.mxu0
        %v2272 = vadd.f32 %v2259, %v2271
        %v2273 = vpop.f32.mrf.mxu0
        %2274 = vdwg.mxu0
        %2275 = vmatpush.bf16.msra.mxu0 %v1932
        %2276 = vmatpush.bf16.msra.mxu0 %v1928
        %2277 = vmatpush.bf16.msra.mxu0 %v1924
        %2278 = vmatpush.bf16.msra.mxu0 %v1920
        %2279 = vmatpush.bf16.msra.mxu0 %v1916
        %2280 = vmatpush.bf16.msra.mxu0 %v1912
        %2281 = vmatpush.bf16.msra.mxu0 %v1908
        %2282 = vmatpush.bf16.msra.mxu0 %v1904
        %2283 = vmatmul.bf16.gmra.mxu0 %v1313
        %v2284 = vpop.f32.mrf.mxu0
        %v2285 = vadd.f32 %v2272, %v2284
        %v2286 = vpop.f32.mrf.mxu0
        %2287 = vdwg.mxu0
        %2288 = vmatpush.bf16.msra.mxu0 %v1964
        %2289 = vmatpush.bf16.msra.mxu0 %v1960
        %2290 = vmatpush.bf16.msra.mxu0 %v1956
        %2291 = vmatpush.bf16.msra.mxu0 %v1952
        %2292 = vmatpush.bf16.msra.mxu0 %v1948
        %2293 = vmatpush.bf16.msra.mxu0 %v1944
        %2294 = vmatpush.bf16.msra.mxu0 %v1940
        %2295 = vmatpush.bf16.msra.mxu0 %v1936
        %2296 = vmatmul.bf16.gmra.mxu0 %v1314
        %v2297 = vpop.f32.mrf.mxu0
        %v2298 = vadd.f32 %v2285, %v2297
        %v2299 = vpop.f32.mrf.mxu0
        %2300 = vdwg.mxu0
        %2301 = vst [vmem:[%s304] sm:$0xff] %v2142
        %2302 = vst [vmem:[%s304 + $0x8] sm:$0xff] %v2194
        %2303 = vst [vmem:[%s304 + $0x10] sm:$0xff] %v2246
        %2304 = vst [vmem:[%s304 + $0x18] sm:$0xff] %v2298
        %s2305 = sand.u32 %s142, 1
        %s2306 = scalar_lea.sflag [#allocation4], %s2305
        %s2307 = sand.u32 %s142, 1
        %s2308 = smul.addr %s2307, 32
        %s2309 = scalar_lea.vmem [#allocation11], %s2308
        // Predicated region
        $region61: #{tpu_custom_call.1} parent=39 // pred_check
          %p2310 = pneg %p152
        $region62: #{tpu_custom_call.1} parent=39 // pred_check_branch
          %2312 = sbr.rel (%p2310) target = $region64
        $region63: #{tpu_custom_call.1} parent=39 // pred_region
          %2314 = vsyncadd %s2306, 0
          %s2315 = smul.addr %s24, 4
          %s2316 = smul.addr %s2315, 8
          %s2317 = scalar_lea.hbm %s5, %s2316
          %s2319 = sshll.u32 %s2309, 4
          %s2320 = int_to_ptr.vmem [resolvable:$true] %s2319
          %s2321 = sshll.u32 %s2317, 4
          %s2322 = int_to_ptr.hbm [resolvable:$true] %s2321
          %2324 = dma.vmem_to_hbm [thread:$0]  %s2320, 512, %s2322, %s2306
        $region64: #{tpu_custom_call.1} parent=39 // pred_fallthru
          _
      $region40: #{tpu_custom_call.1} parent=5 // pred_fallthru
        _
      %p2325 = scmp.le.s32.totalorder 2, %s19
      // Predicated region
      $region65: #{tpu_custom_call.1} parent=5 // pred_check
        %p2326 = pneg %p2325
      $region66: #{tpu_custom_call.1} parent=5 // pred_check_branch
        %2328 = sbr.rel (%p2326) target = $region68
      $region67: #{tpu_custom_call.1} parent=5 // pred_region
        %s2329 = ssub.s32 %s19, 2
        // Predicated region
        $region69: #{tpu_custom_call.1} parent=67 // pred_check
          %p2330 = pneg %p158
        $region70: #{tpu_custom_call.1} parent=67 // pred_check_branch
          %2332 = sbr.rel (%p2330) target = $region72
        $region71: #{tpu_custom_call.1} parent=67 // pred_region
          %s2333 = sand.u32 %s143, 1
          %s2334 = scalar_lea.sflag [#allocation4], %s2333
          %s2335 = sand.u32 %s143, 1
          %s2336 = smul.addr %s2335, 32
          %s2337 = scalar_lea.vmem [#allocation11], %s2336
          %2339 = dma.done %s2334, 512
        $region72: #{tpu_custom_call.1} parent=67 // pred_fallthru
          _
      $region68: #{tpu_custom_call.1} parent=5 // pred_fallthru
        _
    $region6: #{tpu_custom_call.1} parent=1 // loop_footer
      %s23 = sadd.s32 1, %s19
    $region7: #{tpu_custom_call.1} parent=1 // loop_footer_branch
      %18 = sbr.rel target = $region3
    $region8: #{tpu_custom_call.1} parent=1 // loop_exit
      _
    %2340 = vsyncpa [#allocation3], 1
    %s2341 = scalar_lea.sflag [#allocation3], 1
    %2342 = vsyncpa %s2341, 1
    %2343 = vsyncpa [#allocation6], 1
    %2344 = vsyncpa [#allocation9], 1
    %2345 = vsyncpa [#allocation4], 1
    %s2346 = scalar_lea.sflag [#allocation4], 1
    %2347 = vsyncpa %s2346, 1

</llo_original>
